<compile_context>
chip_gen: v7x
topology: tpu7x:2x2x1
jax: 0.10.0
libtpu: 0.0.40
codegen_flags: <defaults>
</compile_context>

<pallas_src>
import jax
import jax.numpy as jnp
from jax import lax
from jax.experimental import pallas as pl
from jax.experimental.pallas import tpu as pltpu

_LANE = 128
_EPS = 1e-5


def _round_up(x, m):
    return ((x + m - 1) // m) * m


def _vmem_capacity_bytes():
    """Physical VMEM per TensorCore (falls back to the smallest generation, v7x)."""
    try:
        return int(pltpu.get_tpu_info().vmem_capacity_bytes)
    except Exception:
        return 64 * 1024 * 1024


def _merge_tile_bytes(th, w, c, wd1, cin):
    """Rough VMEM footprint of one merge-kernel grid step (buffers + temporaries)."""
    th2 = th // 2
    l = (th + 2) * w
    io = 2 * ((th + 2) * w * c * 4            # x0 main + halo rows (f32, double-buffered)
              + (th2 + 2) * wd1 * cin * 2     # x1 main + halo rows (bf16)
              + cin * c * 2 + 9 * c * c * 2   # conv1 / conv2 weights (bf16)
              + th * w * c * 4 + 2 * c * 4)   # y + stats outputs (f32)
    tmp = (l * c * (4 * 4 + 2 * 3)            # x0_blk / up_flat / m / rolls + 3 bf16 taps
           + th * w * c * 4                   # f32 accumulator
           + (th2 + 2) * wd1 * c * 8)         # top + up_rows (f32)
    return io + tmp


def _pick_merge_tile_h(h, w, c, wd1, cin, budget, max_rows=8192):
    best = 2
    for th in range(2, h + 1, 2):
        if h % th:
            continue
        if th * w <= max_rows and _merge_tile_bytes(th, w, c, wd1, cin) <= budget:
            best = th
    return best


def _pick_bn_tile_h(h, w, c, budget, max_rows=32768):
    best = 1
    for th in range(1, h + 1):
        if h % th:
            continue
        if th * w <= max_rows and 4 * th * w * c * 4 <= budget:
            best = th
    return best


# ----------------------------------------------------------------------------
# Kernel 1: fused 1x1 conv + nearest-2x upsample + lateral add + 3x3 conv
#           (+ per-tile BatchNorm partial sums)
# ----------------------------------------------------------------------------
def _merge_conv_kernel(x1m_ref, x1a_ref, x1b_ref,
                       x0m_ref, x0a_ref, x0b_ref,
                       w1_ref, w2_ref, y_ref, st_ref):
    # Block shapes:
    #   x1m: (1, TH2, W1, Cin) bf16   x1a/x1b: (1, 1, W1, Cin) bf16  (low-res halo rows)
    #   x0m: (1, TH,  W,  C  ) f32    x0a/x0b: (1, 1, W,  C  ) f32   (high-res halo rows)
    #   w1 : (Cin, C)          bf16   1x1-conv weight [ci, co]
    #   w2 : (3, 3, C, C)      bf16   3x3-conv weight [ky, kx, ci, co]
    #   y  : (1, TH, W, C)     f32    un-normalised conv output
    #   st : (1, 1, 2, C)      f32    per-tile [sum, sum_of_squares]
    rb = pl.program_id(1)
    last = pl.num_programs(1) - 1
    _, TH, W, C = x0m_ref.shape
    _, TH2, W1, CIN = x1m_ref.shape
    L = (TH + 2) * W
    M = TH * W

    # Border halo rows of the *merged* map are zero (3x3 conv zero padding); interior
    # halo rows come from the clamped single-row BlockSpecs.
    top_scale = jnp.where(rb == 0, 0.0, 1.0)
    bot_scale = jnp.where(rb == last, 0.0, 1.0)

    # ---- fused 1x1 conv on the TH2+2 low-res rows this tile needs (one MXU dot) ----
    x1_blk = jnp.concatenate([x1a_ref[0], x1m_ref[0], x1b_ref[0]], axis=0)
    top = jnp.dot(x1_blk.reshape((TH2 + 2) * W1, CIN), w1_ref[...],
                  preferred_element_type=jnp.float32).reshape(TH2 + 2, W1, C)

    # ---- nearest-2x upsample + lateral add (merged map never written to HBM) ----
    # merged halo-row b maps to top row (b+1)//2: [0, 1,1, 2,2, ..., TH2,TH2, TH2+1]
    mid = jnp.broadcast_to(top[1:TH2 + 1][:, None],
                           (TH2, 2, W1, C)).reshape(2 * TH2, W1, C)
    up_rows = jnp.concatenate(
        [top[0:1] * top_scale, mid, top[TH2 + 1:TH2 + 2] * bot_scale], axis=0)
    # Column doubling in flattened (row-major) form == pairwise row duplication.
    # NOTE: adding up_rows to x0 reshaped as (TH+2, W1, 2, C) would avoid this
    # interleave but forces a sparse 2-sublane layout onto the larger x0 operand;
    # interleaving the quarter-width upsampled operand is the cheaper option.
    uf = up_rows.reshape((TH + 2) * W1, C)
    up_flat = jnp.broadcast_to(uf[:, None, :], ((TH + 2) * W1, 2, C)).reshape(L, C)

    x0_blk = jnp.concatenate(
        [x0a_ref[0] * top_scale, x0m_ref[0], x0b_ref[0] * bot_scale], axis=0)
    m = x0_blk.reshape(L, C) + up_flat                                  # (L, C) f32

    # ---- +-1 column taps via XLU rolls + edge masks (no (L, 3C) im2col concat) ----
    col = lax.broadcasted_iota(jnp.int32, (L, 1), 0) % W
    mb = m.astype(jnp.bfloat16)
    left = jnp.where(col > 0,
                     pltpu.roll(m, shift=1, axis=0), 0.0).astype(jnp.bfloat16)
    right = jnp.where(col < W - 1,
                      pltpu.roll(m, shift=L - 1, axis=0), 0.0).astype(jnp.bfloat16)

    # ---- 3x3 conv as 9 K=C MXU dots with f32 accumulation ----
    taps = (left, mb, right)                                            # kx = 0, 1, 2
    acc = jnp.zeros((M, C), jnp.float32)
    for ky in range(3):
        for kx in range(3):
            acc = acc + jnp.dot(taps[kx][ky * W:ky * W + M], w2_ref[ky, kx],
                                preferred_element_type=jnp.float32)

    y_ref[0] = acc.reshape(TH, W, C)
    st_ref[0, 0] = jnp.concatenate(
        [jnp.sum(acc, axis=0, keepdims=True),
         jnp.sum(acc * acc, axis=0, keepdims=True)], axis=0)


def merge_conv3x3(x1_p, x0_p, w1_mat, w2_p, tile_h, vmem_limit):
    n, h, w, c = x0_p.shape
    _, h1, wd1, cin = x1_p.shape
    th2 = tile_h // 2
    nrb = h // tile_h

    x1m = pl.BlockSpec((1, th2, wd1, cin), lambda i, r: (i, r, 0, 0))
    x1a = pl.BlockSpec((1, 1, wd1, cin),
                       lambda i, r: (i, jnp.maximum(r * th2 - 1, 0), 0, 0))
    x1b = pl.BlockSpec((1, 1, wd1, cin),
                       lambda i, r: (i, jnp.minimum(r * th2 + th2, h1 - 1), 0, 0))
    x0m = pl.BlockSpec((1, tile_h, w, c), lambda i, r: (i, r, 0, 0))
    x0a = pl.BlockSpec((1, 1, w, c),
                       lambda i, r: (i, jnp.maximum(r * tile_h - 1, 0), 0, 0))
    x0b = pl.BlockSpec((1, 1, w, c),
                       lambda i, r: (i, jnp.minimum(r * tile_h + tile_h, h - 1), 0, 0))
    w1sp = pl.BlockSpec((cin, c), lambda i, r: (0, 0))
    w2sp = pl.BlockSpec((3, 3, c, c), lambda i, r: (0, 0, 0, 0))
    ysp = pl.BlockSpec((1, tile_h, w, c), lambda i, r: (i, r, 0, 0))
    ssp = pl.BlockSpec((1, 1, 2, c), lambda i, r: (i, r, 0, 0))

    return pl.pallas_call(
        _merge_conv_kernel,
        out_shape=(jax.ShapeDtypeStruct((n, h, w, c), jnp.float32),
                   jax.ShapeDtypeStruct((n, nrb, 2, c), jnp.float32)),
        grid=(n, nrb),
        in_specs=[x1m, x1a, x1b, x0m, x0a, x0b, w1sp, w2sp],
        out_specs=(ysp, ssp),
        compiler_params=pltpu.CompilerParams(
            dimension_semantics=("parallel", "parallel"),
            vmem_limit_bytes=vmem_limit),
    )(x1_p, x1_p, x1_p, x0_p, x0_p, x0_p, w1_mat, w2_p)


# ----------------------------------------------------------------------------
# Kernel 2: BatchNorm affine (scale/shift precomputed) applied in place
# ----------------------------------------------------------------------------
def _bn_apply_kernel(y_ref, sc_ref, sh_ref, o_ref):
    o_ref[...] = y_ref[...] * sc_ref[0] + sh_ref[0]


def bn_apply(y, scale, shift, tile_h, vmem_limit):
    n, h, w, c = y.shape
    return pl.pallas_call(
        _bn_apply_kernel,
        out_shape=jax.ShapeDtypeStruct((n, h, w, c), jnp.float32),
        grid=(n, h // tile_h),
        in_specs=[
            pl.BlockSpec((1, tile_h, w, c), lambda i, r: (i, r, 0, 0)),
            pl.BlockSpec((1, c), lambda i, r: (0, 0)),
            pl.BlockSpec((1, c), lambda i, r: (0, 0)),
        ],
        out_specs=pl.BlockSpec((1, tile_h, w, c), lambda i, r: (i, r, 0, 0)),
        input_output_aliases={0: 0},      # normalise y in place (no extra HBM alloc)
        compiler_params=pltpu.CompilerParams(
            dimension_semantics=("parallel", "parallel"),
            vmem_limit_bytes=vmem_limit),
    )(y, scale, shift)


# ----------------------------------------------------------------------------
# Wrapper (layout glue: NCHW<->NHWC, lane-dense channel padding, bf16 weights)
# ----------------------------------------------------------------------------
def crossx_fpn_forward(x0_nchw, x1_nchw, w1, w2, gamma, beta):
    """Pallas implementation of CrossXFPN.forward([x0, x1]); NCHW in / NCHW out."""
    n, cin, h1, wd1 = x1_nchw.shape
    n0, cout, h, wd = x0_nchw.shape
    assert n0 == n and (h, wd) == (2 * h1, 2 * wd1)
    assert w1.shape == (cout, cin, 1, 1) and w2.shape == (cout, cout, 3, 3)

    cin_p = _round_up(cin, _LANE)
    cout_p = _round_up(cout, _LANE)

    # TODO(synk): these NCHW<->NHWC transposes are full HBM round trips; keep the
    # surrounding model NHWC end-to-end (or fuse them into adjacent ops) to remove them.
    x1_p = jnp.pad(jnp.transpose(x1_nchw, (0, 2, 3, 1)).astype(jnp.float32),
                   ((0, 0), (0, 0), (0, 0), (0, cin_p - cin))).astype(jnp.bfloat16)
    x0_p = jnp.pad(jnp.transpose(x0_nchw, (0, 2, 3, 1)).astype(jnp.float32),
                   ((0, 0), (0, 0), (0, 0), (0, cout_p - cout)))

    w1_mat = jnp.pad(jnp.transpose(w1[:, :, 0, 0], (1, 0)),
                     ((0, cin_p - cin), (0, cout_p - cout))).astype(jnp.bfloat16)
    w2_p = jnp.pad(jnp.transpose(w2, (2, 3, 1, 0)),          # (ky, kx, ci, co)
                   ((0, 0), (0, 0), (0, cout_p - cout),
                    (0, cout_p - cout))).astype(jnp.bfloat16)

    # Padded channels use gamma/beta == 0 so their (all-zero) outputs stay exactly 0.
    gamma_p = jnp.pad(gamma.astype(jnp.float32), (0, cout_p - cout))
    beta_p = jnp.pad(beta.astype(jnp.float32), (0, cout_p - cout))

    # Generation-aware tile sizing / VMEM limit (v7x: 64 MiB per TC, v5e/v6e: 128 MiB).
    cap = _vmem_capacity_bytes()
    vmem_limit = min(int(cap * 0.8), 100 * 1024 * 1024)
    budget = int(cap * 0.4)
    tile_h = _pick_merge_tile_h(h, wd, cout_p, wd1, cin_p, budget)
    bn_tile_h = _pick_bn_tile_h(h, wd, cout_p, budget)

    # Kernel 1: fused 1x1 conv + nearest-2x upsample + lateral add + 3x3 conv
    #           (+ per-tile BN partial sums). `top` never touches HBM.
    y, st = merge_conv3x3(x1_p, x0_p, w1_mat, w2_p, tile_h, vmem_limit)

    # BN batch statistics -> per-channel scale/shift, reduced ONCE on the tiny
    # (N, RB, 2, C) partials with plain XLA (hoisted out of the apply kernel).
    count = float(n * h * wd)
    s = jnp.sum(st[:, :, 0, :], axis=(0, 1))
    ss = jnp.sum(st[:, :, 1, :], axis=(0, 1))
    mean = s / count
    # E[x^2] - E[x]^2 from f32 partials; clamp the tiny negative rounding could give.
    var = jnp.maximum(ss / count - mean * mean, 0.0)
    inv = lax.rsqrt(var + _EPS)
    scale = (gamma_p * inv).reshape(1, cout_p)
    shift = (beta_p - mean * gamma_p * inv).reshape(1, cout_p)

    # Kernel 2: BN affine applied in place (y aliased to the output).
    out_p = bn_apply(y, scale, shift, bn_tile_h, vmem_limit)
    # TODO(synk): BatchNorm running_mean / running_var buffer updates (a training-time
    # side-effect, not part of the returned tensor) are not emitted.

    return jnp.transpose(out_p[..., :cout], (0, 3, 1, 2))


# ----------------------------------------------------------------------------
# Pure-JAX reference with the same bf16-input / f32-accumulation matmul math.
# ----------------------------------------------------------------------------
def reference_forward(x0, x1, w1, w2, gamma, beta):
    dn = ('NCHW', 'OIHW', 'NCHW')
    bf = jnp.bfloat16
    top = lax.conv_general_dilated(x1.astype(bf), w1.astype(bf), (1, 1), 'VALID',
                                   dimension_numbers=dn,
                                   preferred_element_type=jnp.float32)
    top_up = jnp.repeat(jnp.repeat(top, 2, axis=2), 2, axis=3)
    merged = x0 + top_up
    y = lax.conv_general_dilated(merged.astype(bf), w2.astype(bf), (1, 1),
                                 ((1, 1), (1, 1)), dimension_numbers=dn,
                                 preferred_element_type=jnp.float32)
    mean = jnp.mean(y, axis=(0, 2, 3), keepdims=True)
    var = jnp.mean((y - mean) ** 2, axis=(0, 2, 3), keepdims=True)
    yn = (y - mean) * lax.rsqrt(var + _EPS)
    return yn * gamma.reshape(1, -1, 1, 1) + beta.reshape(1, -1, 1, 1)


if __name__ == "__main__":
    key = jax.random.PRNGKey(0)
    k0, k1, k2, k3 = jax.random.split(key, 4)

    N, CIN, COUT = 2, 4, 8
    H1 = W1 = 8          # low-res level (x[-1])
    H = W = 16           # high-res level (x[0])

    x0 = jax.random.normal(k0, (N, COUT, H, W), jnp.float32)    # x[0]  (NCHW)
    x1 = jax.random.normal(k1, (N, CIN, H1, W1), jnp.float32)   # x[1]  (NCHW)

    # deterministic parameter init (shapes per the module's __init__)
    w1 = jax.random.normal(k2, (COUT, CIN, 1, 1), jnp.float32) / (CIN ** 0.5)
    w2 = jax.random.normal(k3, (COUT, COUT, 3, 3), jnp.float32) / ((COUT * 9) ** 0.5)
    gamma = jnp.ones((COUT,), jnp.float32)    # nn.BatchNorm2d default weight
    beta = jnp.zeros((COUT,), jnp.float32)    # nn.BatchNorm2d default bias

    out = jax.jit(crossx_fpn_forward)(x0, x1, w1, w2, gamma, beta)
    out = jax.block_until_ready(out)

    ref = reference_forward(x0, x1, w1, w2, gamma, beta)
    assert out.shape == (N, COUT, H, W), out.shape
    err = float(jnp.max(jnp.abs(out - ref)))
    assert jnp.allclose(out, ref, atol=5e-3, rtol=5e-3), err
    print("KERNEL_OK")
</pallas_src>

<mosaic_0001>
module attributes {stable_mosaic.version = 11 : i64} {
  func.func @_merge_conv_kernel(%arg0: i32, %arg1: i32, %arg2: memref<1x8x8x128xbf16, #tpu.memory_space<vmem>>, %arg3: memref<1x1x8x128xbf16, #tpu.memory_space<vmem>>, %arg4: memref<1x1x8x128xbf16, #tpu.memory_space<vmem>>, %arg5: memref<1x16x16x128xf32, #tpu.memory_space<vmem>>, %arg6: memref<1x1x16x128xf32, #tpu.memory_space<vmem>>, %arg7: memref<1x1x16x128xf32, #tpu.memory_space<vmem>>, %arg8: memref<128x128xbf16, #tpu.memory_space<vmem>>, %arg9: memref<3x3x128x128xbf16, #tpu.memory_space<vmem>>, %arg10: memref<1x16x16x128xf32, #tpu.memory_space<vmem>>, %arg11: memref<1x1x2x128xf32, #tpu.memory_space<vmem>>) attributes {dimension_semantics = [#tpu.dimension_semantics<parallel>, #tpu.dimension_semantics<parallel>], iteration_bounds = array<i64: 2, 1>, scalar_prefetch = 0 : i64, scratch_operands = 0 : i64, tpu.core_type = #tpu.core_type<tc>, window_params = [{transform_indices = @transform_0, window_bounds = array<i64: 1, 8, 8, 128>}, {transform_indices = @transform_1, window_bounds = array<i64: 1, 1, 8, 128>}, {transform_indices = @transform_2, window_bounds = array<i64: 1, 1, 8, 128>}, {transform_indices = @transform_3, window_bounds = array<i64: 1, 16, 16, 128>}, {transform_indices = @transform_4, window_bounds = array<i64: 1, 1, 16, 128>}, {transform_indices = @transform_5, window_bounds = array<i64: 1, 1, 16, 128>}, {pipeline_mode = #tpu.pipeline_mode<synchronous>, transform_indices = @transform_6, window_bounds = array<i64: 128, 128>}, {pipeline_mode = #tpu.pipeline_mode<synchronous>, transform_indices = @transform_7, window_bounds = array<i64: 3, 3, 128, 128>}, {transform_indices = @transform_8, window_bounds = array<i64: 1, 16, 16, 128>}, {transform_indices = @transform_9, window_bounds = array<i64: 1, 1, 2, 128>}]} {
    %c0_i32 = arith.constant 0 : i32
    %0 = arith.cmpi eq, %arg1, %c0_i32 : i32
    %cst = arith.constant 0.000000e+00 : f32
    %cst_0 = arith.constant 1.000000e+00 : f32
    %1 = arith.select %0, %cst, %cst_0 : f32
    %c0_i32_1 = arith.constant 0 : i32
    %2 = arith.cmpi eq, %arg1, %c0_i32_1 : i32
    %cst_2 = arith.constant 0.000000e+00 : f32
    %cst_3 = arith.constant 1.000000e+00 : f32
    %3 = arith.select %2, %cst_2, %cst_3 : f32
    %c0 = arith.constant 0 : index
    %c0_4 = arith.constant 0 : index
    %c0_5 = arith.constant 0 : index
    %c0_6 = arith.constant 0 : index
    %4 = vector.load %arg3[%c0, %c0_4, %c0_5, %c0_6] : memref<1x1x8x128xbf16, #tpu.memory_space<vmem>>, vector<1x1x8x128xbf16>
    %5 = vector.shape_cast %4 : vector<1x1x8x128xbf16> to vector<1x8x128xbf16>
    %c0_7 = arith.constant 0 : index
    %c0_8 = arith.constant 0 : index
    %c0_9 = arith.constant 0 : index
    %c0_10 = arith.constant 0 : index
    %6 = vector.load %arg2[%c0_7, %c0_8, %c0_9, %c0_10] : memref<1x8x8x128xbf16, #tpu.memory_space<vmem>>, vector<1x8x8x128xbf16>
    %7 = vector.shape_cast %6 : vector<1x8x8x128xbf16> to vector<8x8x128xbf16>
    %c0_11 = arith.constant 0 : index
    %c0_12 = arith.constant 0 : index
    %c0_13 = arith.constant 0 : index
    %c0_14 = arith.constant 0 : index
    %8 = vector.load %arg4[%c0_11, %c0_12, %c0_13, %c0_14] : memref<1x1x8x128xbf16, #tpu.memory_space<vmem>>, vector<1x1x8x128xbf16>
    %9 = vector.shape_cast %8 : vector<1x1x8x128xbf16> to vector<1x8x128xbf16>
    %10 = tpu.concatenate %5, %7, %9 in 0 : vector<1x8x128xbf16>, vector<8x8x128xbf16>, vector<1x8x128xbf16> -> vector<10x8x128xbf16>
    %11 = vector.shape_cast %10 : vector<10x8x128xbf16> to vector<80x128xbf16>
    %c0_15 = arith.constant 0 : index
    %c0_16 = arith.constant 0 : index
    %12 = vector.load %arg8[%c0_15, %c0_16] : memref<128x128xbf16, #tpu.memory_space<vmem>>, vector<128x128xbf16>
    %cst_17 = arith.constant dense<0.000000e+00> : vector<80x128xf32>
    %13 = tpu.matmul %11, %12, %cst_17 {dimension_numbers = #tpu.dot_dimension_numbers<[1], [0], [0], [1], [0, 0, 1, 1], [], []>} : vector<80x128xbf16>, vector<128x128xbf16>, vector<80x128xf32> -> vector<80x128xf32>
    %14 = vector.shape_cast %13 : vector<80x128xf32> to vector<10x8x128xf32>
    %15 = vector.extract_strided_slice %14 {offsets = [1, 0, 0], sizes = [8, 8, 128], strides = [1, 1, 1]} : vector<10x8x128xf32> to vector<8x8x128xf32>
    %16 = vector.shape_cast %15 : vector<8x8x128xf32> to vector<8x1x8x128xf32>
    %17 = vector.shape_cast %16 : vector<8x1x8x128xf32> to vector<8x1x8x128xf32>
    %18 = vector.broadcast %17 : vector<8x1x8x128xf32> to vector<8x2x8x128xf32>
    %19 = vector.shape_cast %18 : vector<8x2x8x128xf32> to vector<16x8x128xf32>
    %20 = vector.extract_strided_slice %14 {offsets = [0, 0, 0], sizes = [1, 8, 128], strides = [1, 1, 1]} : vector<10x8x128xf32> to vector<1x8x128xf32>
    %21 = vector.broadcast %1 : f32 to vector<1x8x128xf32>
    %22 = arith.mulf %20, %21 : vector<1x8x128xf32>
    %23 = vector.extract_strided_slice %14 {offsets = [9, 0, 0], sizes = [1, 8, 128], strides = [1, 1, 1]} : vector<10x8x128xf32> to vector<1x8x128xf32>
    %24 = vector.broadcast %3 : f32 to vector<1x8x128xf32>
    %25 = arith.mulf %23, %24 : vector<1x8x128xf32>
    %26 = tpu.concatenate %22, %19, %25 in 0 : vector<1x8x128xf32>, vector<16x8x128xf32>, vector<1x8x128xf32> -> vector<18x8x128xf32>
    %27 = vector.shape_cast %26 : vector<18x8x128xf32> to vector<144x128xf32>
    %28 = vector.shape_cast %27 : vector<144x128xf32> to vector<144x1x128xf32>
    %29 = vector.shape_cast %28 : vector<144x1x128xf32> to vector<144x1x128xf32>
    %30 = vector.broadcast %29 : vector<144x1x128xf32> to vector<144x2x128xf32>
    %31 = vector.shape_cast %30 : vector<144x2x128xf32> to vector<288x128xf32>
    %c0_18 = arith.constant 0 : index
    %c0_19 = arith.constant 0 : index
    %c0_20 = arith.constant 0 : index
    %c0_21 = arith.constant 0 : index
    %32 = vector.load %arg6[%c0_18, %c0_19, %c0_20, %c0_21] : memref<1x1x16x128xf32, #tpu.memory_space<vmem>>, vector<1x1x16x128xf32>
    %33 = vector.shape_cast %32 : vector<1x1x16x128xf32> to vector<1x16x128xf32>
    %34 = vector.broadcast %1 : f32 to vector<1x16x128xf32>
    %35 = arith.mulf %33, %34 : vector<1x16x128xf32>
    %c0_22 = arith.constant 0 : index
    %c0_23 = arith.constant 0 : index
    %c0_24 = arith.constant 0 : index
    %c0_25 = arith.constant 0 : index
    %36 = vector.load %arg5[%c0_22, %c0_23, %c0_24, %c0_25] : memref<1x16x16x128xf32, #tpu.memory_space<vmem>>, vector<1x16x16x128xf32>
    %37 = vector.shape_cast %36 : vector<1x16x16x128xf32> to vector<16x16x128xf32>
    %c0_26 = arith.constant 0 : index
    %c0_27 = arith.constant 0 : index
    %c0_28 = arith.constant 0 : index
    %c0_29 = arith.constant 0 : index
    %38 = vector.load %arg7[%c0_26, %c0_27, %c0_28, %c0_29] : memref<1x1x16x128xf32, #tpu.memory_space<vmem>>, vector<1x1x16x128xf32>
    %39 = vector.shape_cast %38 : vector<1x1x16x128xf32> to vector<1x16x128xf32>
    %40 = vector.broadcast %3 : f32 to vector<1x16x128xf32>
    %41 = arith.mulf %39, %40 : vector<1x16x128xf32>
    %42 = tpu.concatenate %35, %37, %41 in 0 : vector<1x16x128xf32>, vector<16x16x128xf32>, vector<1x16x128xf32> -> vector<18x16x128xf32>
    %43 = vector.shape_cast %42 : vector<18x16x128xf32> to vector<288x128xf32>
    %44 = arith.addf %43, %31 : vector<288x128xf32>
    %45 = tpu.iota {dimensions = array<i32: 0>} : vector<288x1xi32>
    %c16_i32 = arith.constant 16 : i32
    %c0_i32_30 = arith.constant 0 : i32
    %46 = arith.cmpi eq, %c16_i32, %c0_i32_30 : i32
    %c1_i32 = arith.constant 1 : i32
    %47 = arith.select %46, %c1_i32, %c16_i32 : i32
    %48 = vector.broadcast %47 : i32 to vector<288x1xi32>
    %49 = arith.remsi %45, %48 : vector<288x1xi32>
    %c0_i32_31 = arith.constant 0 : i32
    %50 = vector.broadcast %c0_i32_31 : i32 to vector<288x1xi32>
    %51 = arith.cmpi ne, %49, %50 : vector<288x1xi32>
    %c0_i32_32 = arith.constant 0 : i32
    %52 = vector.broadcast %c0_i32_32 : i32 to vector<288x1xi32>
    %53 = arith.cmpi slt, %49, %52 : vector<288x1xi32>
    %c0_i32_33 = arith.constant 0 : i32
    %54 = arith.cmpi slt, %47, %c0_i32_33 : i32
    %55 = vector.broadcast %54 : i1 to vector<288x1xi1>
    %56 = vector.broadcast %55 : vector<288x1xi1> to vector<288x1xi1>
    %57 = arith.xori %53, %56 : vector<288x1xi1>
    %58 = arith.andi %57, %51 : vector<288x1xi1>
    %59 = vector.broadcast %47 : i32 to vector<288x1xi32>
    %60 = arith.addi %49, %59 : vector<288x1xi32>
    %61 = arith.select %58, %60, %49 : vector<288x1xi1>, vector<288x1xi32>
    %62 = arith.truncf %44 : vector<288x128xf32> to vector<288x128xbf16>
    %c0_i32_34 = arith.constant 0 : i32
    %63 = vector.broadcast %c0_i32_34 : i32 to vector<288x1xi32>
    %64 = arith.cmpi sgt, %61, %63 : vector<288x1xi32>
    %c1_i32_35 = arith.constant 1 : i32
    %65 = tpu.dynamic_rotate %44 by %c1_i32_35 dim 0 : vector<288x128xf32>, i32 -> vector<288x128xf32>
    %cst_36 = arith.constant 0.000000e+00 : f32
    %66 = vector.shape_cast %64 : vector<288x1xi1> to vector<288x1xi1>
    %67 = vector.broadcast %66 : vector<288x1xi1> to vector<288x128xi1>
    %68 = vector.broadcast %cst_36 : f32 to vector<288x128xf32>
    %69 = arith.select %67, %65, %68 : vector<288x128xi1>, vector<288x128xf32>
    %70 = arith.truncf %69 : vector<288x128xf32> to vector<288x128xbf16>
    %c15_i32 = arith.constant 15 : i32
    %71 = vector.broadcast %c15_i32 : i32 to vector<288x1xi32>
    %72 = arith.cmpi slt, %61, %71 : vector<288x1xi32>
    %c287_i32 = arith.constant 287 : i32
    %73 = tpu.dynamic_rotate %44 by %c287_i32 dim 0 : vector<288x128xf32>, i32 -> vector<288x128xf32>
    %cst_37 = arith.constant 0.000000e+00 : f32
    %74 = vector.shape_cast %72 : vector<288x1xi1> to vector<288x1xi1>
    %75 = vector.broadcast %74 : vector<288x1xi1> to vector<288x128xi1>
    %76 = vector.broadcast %cst_37 : f32 to vector<288x128xf32>
    %77 = arith.select %75, %73, %76 : vector<288x128xi1>, vector<288x128xf32>
    %78 = arith.truncf %77 : vector<288x128xf32> to vector<288x128xbf16>
    %cst_38 = arith.constant 0.000000e+00 : f32
    %79 = vector.broadcast %cst_38 : f32 to vector<256x128xf32>
    %80 = vector.extract_strided_slice %70 {offsets = [0, 0], sizes = [256, 128], strides = [1, 1]} : vector<288x128xbf16> to vector<256x128xbf16>
    %c0_39 = arith.constant 0 : index
    %c0_40 = arith.constant 0 : index
    %c0_41 = arith.constant 0 : index
    %c0_42 = arith.constant 0 : index
    %81 = vector.load %arg9[%c0_39, %c0_40, %c0_41, %c0_42] : memref<3x3x128x128xbf16, #tpu.memory_space<vmem>>, vector<1x1x128x128xbf16>
    %82 = vector.shape_cast %81 : vector<1x1x128x128xbf16> to vector<128x128xbf16>
    %cst_43 = arith.constant dense<0.000000e+00> : vector<256x128xf32>
    %83 = tpu.matmul %80, %82, %cst_43 {dimension_numbers = #tpu.dot_dimension_numbers<[1], [0], [0], [1], [0, 0, 1, 1], [], []>} : vector<256x128xbf16>, vector<128x128xbf16>, vector<256x128xf32> -> vector<256x128xf32>
    %84 = arith.addf %79, %83 : vector<256x128xf32>
    %85 = vector.extract_strided_slice %62 {offsets = [0, 0], sizes = [256, 128], strides = [1, 1]} : vector<288x128xbf16> to vector<256x128xbf16>
    %c0_44 = arith.constant 0 : index
    %c1 = arith.constant 1 : index
    %c0_45 = arith.constant 0 : index
    %c0_46 = arith.constant 0 : index
    %86 = vector.load %arg9[%c0_44, %c1, %c0_45, %c0_46] : memref<3x3x128x128xbf16, #tpu.memory_space<vmem>>, vector<1x1x128x128xbf16>
    %87 = vector.shape_cast %86 : vector<1x1x128x128xbf16> to vector<128x128xbf16>
    %cst_47 = arith.constant dense<0.000000e+00> : vector<256x128xf32>
    %88 = tpu.matmul %85, %87, %cst_47 {dimension_numbers = #tpu.dot_dimension_numbers<[1], [0], [0], [1], [0, 0, 1, 1], [], []>} : vector<256x128xbf16>, vector<128x128xbf16>, vector<256x128xf32> -> vector<256x128xf32>
    %89 = arith.addf %84, %88 : vector<256x128xf32>
    %90 = vector.extract_strided_slice %78 {offsets = [0, 0], sizes = [256, 128], strides = [1, 1]} : vector<288x128xbf16> to vector<256x128xbf16>
    %c0_48 = arith.constant 0 : index
    %c2 = arith.constant 2 : index
    %c0_49 = arith.constant 0 : index
    %c0_50 = arith.constant 0 : index
    %91 = vector.load %arg9[%c0_48, %c2, %c0_49, %c0_50] : memref<3x3x128x128xbf16, #tpu.memory_space<vmem>>, vector<1x1x128x128xbf16>
    %92 = vector.shape_cast %91 : vector<1x1x128x128xbf16> to vector<128x128xbf16>
    %cst_51 = arith.constant dense<0.000000e+00> : vector<256x128xf32>
    %93 = tpu.matmul %90, %92, %cst_51 {dimension_numbers = #tpu.dot_dimension_numbers<[1], [0], [0], [1], [0, 0, 1, 1], [], []>} : vector<256x128xbf16>, vector<128x128xbf16>, vector<256x128xf32> -> vector<256x128xf32>
    %94 = arith.addf %89, %93 : vector<256x128xf32>
    %95 = vector.extract_strided_slice %70 {offsets = [16, 0], sizes = [256, 128], strides = [1, 1]} : vector<288x128xbf16> to vector<256x128xbf16>
    %c1_52 = arith.constant 1 : index
    %c0_53 = arith.constant 0 : index
    %c0_54 = arith.constant 0 : index
    %c0_55 = arith.constant 0 : index
    %96 = vector.load %arg9[%c1_52, %c0_53, %c0_54, %c0_55] : memref<3x3x128x128xbf16, #tpu.memory_space<vmem>>, vector<1x1x128x128xbf16>
    %97 = vector.shape_cast %96 : vector<1x1x128x128xbf16> to vector<128x128xbf16>
    %cst_56 = arith.constant dense<0.000000e+00> : vector<256x128xf32>
    %98 = tpu.matmul %95, %97, %cst_56 {dimension_numbers = #tpu.dot_dimension_numbers<[1], [0], [0], [1], [0, 0, 1, 1], [], []>} : vector<256x128xbf16>, vector<128x128xbf16>, vector<256x128xf32> -> vector<256x128xf32>
    %99 = arith.addf %94, %98 : vector<256x128xf32>
    %100 = vector.extract_strided_slice %62 {offsets = [16, 0], sizes = [256, 128], strides = [1, 1]} : vector<288x128xbf16> to vector<256x128xbf16>
    %c1_57 = arith.constant 1 : index
    %c1_58 = arith.constant 1 : index
    %c0_59 = arith.constant 0 : index
    %c0_60 = arith.constant 0 : index
    %101 = vector.load %arg9[%c1_57, %c1_58, %c0_59, %c0_60] : memref<3x3x128x128xbf16, #tpu.memory_space<vmem>>, vector<1x1x128x128xbf16>
    %102 = vector.shape_cast %101 : vector<1x1x128x128xbf16> to vector<128x128xbf16>
    %cst_61 = arith.constant dense<0.000000e+00> : vector<256x128xf32>
    %103 = tpu.matmul %100, %102, %cst_61 {dimension_numbers = #tpu.dot_dimension_numbers<[1], [0], [0], [1], [0, 0, 1, 1], [], []>} : vector<256x128xbf16>, vector<128x128xbf16>, vector<256x128xf32> -> vector<256x128xf32>
    %104 = arith.addf %99, %103 : vector<256x128xf32>
    %105 = vector.extract_strided_slice %78 {offsets = [16, 0], sizes = [256, 128], strides = [1, 1]} : vector<288x128xbf16> to vector<256x128xbf16>
    %c1_62 = arith.constant 1 : index
    %c2_63 = arith.constant 2 : index
    %c0_64 = arith.constant 0 : index
    %c0_65 = arith.constant 0 : index
    %106 = vector.load %arg9[%c1_62, %c2_63, %c0_64, %c0_65] : memref<3x3x128x128xbf16, #tpu.memory_space<vmem>>, vector<1x1x128x128xbf16>
    %107 = vector.shape_cast %106 : vector<1x1x128x128xbf16> to vector<128x128xbf16>
    %cst_66 = arith.constant dense<0.000000e+00> : vector<256x128xf32>
    %108 = tpu.matmul %105, %107, %cst_66 {dimension_numbers = #tpu.dot_dimension_numbers<[1], [0], [0], [1], [0, 0, 1, 1], [], []>} : vector<256x128xbf16>, vector<128x128xbf16>, vector<256x128xf32> -> vector<256x128xf32>
    %109 = arith.addf %104, %108 : vector<256x128xf32>
    %110 = vector.extract_strided_slice %70 {offsets = [32, 0], sizes = [256, 128], strides = [1, 1]} : vector<288x128xbf16> to vector<256x128xbf16>
    %c2_67 = arith.constant 2 : index
    %c0_68 = arith.constant 0 : index
    %c0_69 = arith.constant 0 : index
    %c0_70 = arith.constant 0 : index
    %111 = vector.load %arg9[%c2_67, %c0_68, %c0_69, %c0_70] : memref<3x3x128x128xbf16, #tpu.memory_space<vmem>>, vector<1x1x128x128xbf16>
    %112 = vector.shape_cast %111 : vector<1x1x128x128xbf16> to vector<128x128xbf16>
    %cst_71 = arith.constant dense<0.000000e+00> : vector<256x128xf32>
    %113 = tpu.matmul %110, %112, %cst_71 {dimension_numbers = #tpu.dot_dimension_numbers<[1], [0], [0], [1], [0, 0, 1, 1], [], []>} : vector<256x128xbf16>, vector<128x128xbf16>, vector<256x128xf32> -> vector<256x128xf32>
    %114 = arith.addf %109, %113 : vector<256x128xf32>
    %115 = vector.extract_strided_slice %62 {offsets = [32, 0], sizes = [256, 128], strides = [1, 1]} : vector<288x128xbf16> to vector<256x128xbf16>
    %c2_72 = arith.constant 2 : index
    %c1_73 = arith.constant 1 : index
    %c0_74 = arith.constant 0 : index
    %c0_75 = arith.constant 0 : index
    %116 = vector.load %arg9[%c2_72, %c1_73, %c0_74, %c0_75] : memref<3x3x128x128xbf16, #tpu.memory_space<vmem>>, vector<1x1x128x128xbf16>
    %117 = vector.shape_cast %116 : vector<1x1x128x128xbf16> to vector<128x128xbf16>
    %cst_76 = arith.constant dense<0.000000e+00> : vector<256x128xf32>
    %118 = tpu.matmul %115, %117, %cst_76 {dimension_numbers = #tpu.dot_dimension_numbers<[1], [0], [0], [1], [0, 0, 1, 1], [], []>} : vector<256x128xbf16>, vector<128x128xbf16>, vector<256x128xf32> -> vector<256x128xf32>
    %119 = arith.addf %114, %118 : vector<256x128xf32>
    %120 = vector.extract_strided_slice %78 {offsets = [32, 0], sizes = [256, 128], strides = [1, 1]} : vector<288x128xbf16> to vector<256x128xbf16>
    %c2_77 = arith.constant 2 : index
    %c2_78 = arith.constant 2 : index
    %c0_79 = arith.constant 0 : index
    %c0_80 = arith.constant 0 : index
    %121 = vector.load %arg9[%c2_77, %c2_78, %c0_79, %c0_80] : memref<3x3x128x128xbf16, #tpu.memory_space<vmem>>, vector<1x1x128x128xbf16>
    %122 = vector.shape_cast %121 : vector<1x1x128x128xbf16> to vector<128x128xbf16>
    %cst_81 = arith.constant dense<0.000000e+00> : vector<256x128xf32>
    %123 = tpu.matmul %120, %122, %cst_81 {dimension_numbers = #tpu.dot_dimension_numbers<[1], [0], [0], [1], [0, 0, 1, 1], [], []>} : vector<256x128xbf16>, vector<128x128xbf16>, vector<256x128xf32> -> vector<256x128xf32>
    %124 = arith.addf %119, %123 : vector<256x128xf32>
    %125 = vector.shape_cast %124 : vector<256x128xf32> to vector<16x16x128xf32>
    %c0_82 = arith.constant 0 : index
    %c0_83 = arith.constant 0 : index
    %c0_84 = arith.constant 0 : index
    %c0_85 = arith.constant 0 : index
    %126 = vector.load %arg10[%c0_82, %c0_83, %c0_84, %c0_85] : memref<1x16x16x128xf32, #tpu.memory_space<vmem>>, vector<1x16x16x128xf32>
    %127 = vector.shape_cast %126 : vector<1x16x16x128xf32> to vector<16x16x128xf32>
    %128 = vector.shape_cast %125 : vector<16x16x128xf32> to vector<1x16x16x128xf32>
    tpu.vector_store %arg10[%c0_82, %c0_83, %c0_84, %c0_85], %128 {strides = array<i32>} : memref<1x16x16x128xf32, #tpu.memory_space<vmem>>, vector<1x16x16x128xf32>,
    %cst_86 = arith.constant dense<0.000000e+00> : vector<128xf32>
    %129 = vector.multi_reduction <add>, %124, %cst_86 [0] : vector<256x128xf32> to vector<128xf32>
    %130 = vector.shape_cast %129 : vector<128xf32> to vector<1x128xf32>
    %131 = arith.mulf %124, %124 : vector<256x128xf32>
    %cst_87 = arith.constant dense<0.000000e+00> : vector<128xf32>
    %132 = vector.multi_reduction <add>, %131, %cst_87 [0] : vector<256x128xf32> to vector<128xf32>
    %133 = vector.shape_cast %132 : vector<128xf32> to vector<1x128xf32>
    %134 = tpu.concatenate %130, %133 in 0 : vector<1x128xf32>, vector<1x128xf32> -> vector<2x128xf32>
    %c0_88 = arith.constant 0 : index
    %c0_89 = arith.constant 0 : index
    %c0_90 = arith.constant 0 : index
    %c0_91 = arith.constant 0 : index
    %135 = vector.load %arg11[%c0_88, %c0_89, %c0_90, %c0_91] : memref<1x1x2x128xf32, #tpu.memory_space<vmem>>, vector<1x1x2x128xf32>
    %136 = vector.shape_cast %135 : vector<1x1x2x128xf32> to vector<2x128xf32>
    %137 = vector.shape_cast %134 : vector<2x128xf32> to vector<1x1x2x128xf32>
    tpu.vector_store %arg11[%c0_88, %c0_89, %c0_90, %c0_91], %137 {strides = array<i32>} : memref<1x1x2x128xf32, #tpu.memory_space<vmem>>, vector<1x1x2x128xf32>,
    return
  }
  func.func @transform_0(%arg0: i32, %arg1: i32) -> (i32, i32, i32, i32) {
    %c0_i32 = arith.constant 0 : i32
    %c0_i32_0 = arith.constant 0 : i32
    %c0_i32_1 = arith.constant 0 : i32
    return %arg0, %arg1, %c0_i32, %c0_i32_0 : i32, i32, i32, i32
  }
  func.func @transform_1(%arg0: i32, %arg1: i32) -> (i32, i32, i32, i32) {
    %c8_i32 = arith.constant 8 : i32
    %0 = arith.muli %arg1, %c8_i32 : i32
    %c1_i32 = arith.constant 1 : i32
    %1 = arith.subi %0, %c1_i32 : i32
    %c0_i32 = arith.constant 0 : i32
    %2 = arith.maxsi %1, %c0_i32 : i32
    %c0_i32_0 = arith.constant 0 : i32
    %c0_i32_1 = arith.constant 0 : i32
    %c0_i32_2 = arith.constant 0 : i32
    return %arg0, %2, %c0_i32_0, %c0_i32_1 : i32, i32, i32, i32
  }
  func.func @transform_2(%arg0: i32, %arg1: i32) -> (i32, i32, i32, i32) {
    %c8_i32 = arith.constant 8 : i32
    %0 = arith.muli %arg1, %c8_i32 : i32
    %c8_i32_0 = arith.constant 8 : i32
    %1 = arith.addi %0, %c8_i32_0 : i32
    %c7_i32 = arith.constant 7 : i32
    %2 = arith.minsi %1, %c7_i32 : i32
    %c0_i32 = arith.constant 0 : i32
    %c0_i32_1 = arith.constant 0 : i32
    %c0_i32_2 = arith.constant 0 : i32
    return %arg0, %2, %c0_i32, %c0_i32_1 : i32, i32, i32, i32
  }
  func.func @transform_3(%arg0: i32, %arg1: i32) -> (i32, i32, i32, i32) {
    %c0_i32 = arith.constant 0 : i32
    %c0_i32_0 = arith.constant 0 : i32
    %c0_i32_1 = arith.constant 0 : i32
    return %arg0, %arg1, %c0_i32, %c0_i32_0 : i32, i32, i32, i32
  }
  func.func @transform_4(%arg0: i32, %arg1: i32) -> (i32, i32, i32, i32) {
    %c16_i32 = arith.constant 16 : i32
    %0 = arith.muli %arg1, %c16_i32 : i32
    %c1_i32 = arith.constant 1 : i32
    %1 = arith.subi %0, %c1_i32 : i32
    %c0_i32 = arith.constant 0 : i32
    %2 = arith.maxsi %1, %c0_i32 : i32
    %c0_i32_0 = arith.constant 0 : i32
    %c0_i32_1 = arith.constant 0 : i32
    %c0_i32_2 = arith.constant 0 : i32
    return %arg0, %2, %c0_i32_0, %c0_i32_1 : i32, i32, i32, i32
  }
  func.func @transform_5(%arg0: i32, %arg1: i32) -> (i32, i32, i32, i32) {
    %c16_i32 = arith.constant 16 : i32
    %0 = arith.muli %arg1, %c16_i32 : i32
    %c16_i32_0 = arith.constant 16 : i32
    %1 = arith.addi %0, %c16_i32_0 : i32
    %c15_i32 = arith.constant 15 : i32
    %2 = arith.minsi %1, %c15_i32 : i32
    %c0_i32 = arith.constant 0 : i32
    %c0_i32_1 = arith.constant 0 : i32
    %c0_i32_2 = arith.constant 0 : i32
    return %arg0, %2, %c0_i32, %c0_i32_1 : i32, i32, i32, i32
  }
  func.func @transform_6(%arg0: i32, %arg1: i32) -> (i32, i32) {
    %c0_i32 = arith.constant 0 : i32
    %c0_i32_0 = arith.constant 0 : i32
    %c0_i32_1 = arith.constant 0 : i32
    return %c0_i32, %c0_i32_0 : i32, i32
  }
  func.func @transform_7(%arg0: i32, %arg1: i32) -> (i32, i32, i32, i32) {
    %c0_i32 = arith.constant 0 : i32
    %c0_i32_0 = arith.constant 0 : i32
    %c0_i32_1 = arith.constant 0 : i32
    %c0_i32_2 = arith.constant 0 : i32
    %c0_i32_3 = arith.constant 0 : i32
    return %c0_i32, %c0_i32_0, %c0_i32_1, %c0_i32_2 : i32, i32, i32, i32
  }
  func.func @transform_8(%arg0: i32, %arg1: i32) -> (i32, i32, i32, i32) {
    %c0_i32 = arith.constant 0 : i32
    %c0_i32_0 = arith.constant 0 : i32
    %c0_i32_1 = arith.constant 0 : i32
    return %arg0, %arg1, %c0_i32, %c0_i32_0 : i32, i32, i32, i32
  }
  func.func @transform_9(%arg0: i32, %arg1: i32) -> (i32, i32, i32, i32) {
    %c0_i32 = arith.constant 0 : i32
    %c0_i32_0 = arith.constant 0 : i32
    %c0_i32_1 = arith.constant 0 : i32
    return %arg0, %arg1, %c0_i32, %c0_i32_0 : i32, i32, i32, i32
  }
}

module attributes {stable_mosaic.version = 11 : i64} {
  func.func @_bn_apply_kernel(%arg0: i32, %arg1: i32, %arg2: memref<1x16x16x128xf32, #tpu.memory_space<vmem>>, %arg3: memref<1x128xf32, #tpu.memory_space<vmem>>, %arg4: memref<1x128xf32, #tpu.memory_space<vmem>>, %arg5: memref<1x16x16x128xf32, #tpu.memory_space<vmem>>) attributes {dimension_semantics = [#tpu.dimension_semantics<parallel>, #tpu.dimension_semantics<parallel>], iteration_bounds = array<i64: 2, 1>, scalar_prefetch = 0 : i64, scratch_operands = 0 : i64, tpu.core_type = #tpu.core_type<tc>, window_params = [{transform_indices = @transform_0, window_bounds = array<i64: 1, 16, 16, 128>}, {pipeline_mode = #tpu.pipeline_mode<synchronous>, transform_indices = @transform_1, window_bounds = array<i64: 1, 128>}, {pipeline_mode = #tpu.pipeline_mode<synchronous>, transform_indices = @transform_2, window_bounds = array<i64: 1, 128>}, {transform_indices = @transform_3, window_bounds = array<i64: 1, 16, 16, 128>}]} {
    %c0 = arith.constant 0 : index
    %c0_0 = arith.constant 0 : index
    %c0_1 = arith.constant 0 : index
    %c0_2 = arith.constant 0 : index
    %0 = vector.load %arg2[%c0, %c0_0, %c0_1, %c0_2] : memref<1x16x16x128xf32, #tpu.memory_space<vmem>>, vector<1x16x16x128xf32>
    %c0_3 = arith.constant 0 : index
    %c0_4 = arith.constant 0 : index
    %1 = vector.load %arg3[%c0_3, %c0_4] : memref<1x128xf32, #tpu.memory_space<vmem>>, vector<1x128xf32>
    %2 = vector.shape_cast %1 : vector<1x128xf32> to vector<128xf32>
    %3 = vector.shape_cast %2 : vector<128xf32> to vector<1x1x1x128xf32>
    %4 = vector.broadcast %3 : vector<1x1x1x128xf32> to vector<1x16x16x128xf32>
    %5 = arith.mulf %0, %4 : vector<1x16x16x128xf32>
    %c0_5 = arith.constant 0 : index
    %c0_6 = arith.constant 0 : index
    %6 = vector.load %arg4[%c0_5, %c0_6] : memref<1x128xf32, #tpu.memory_space<vmem>>, vector<1x128xf32>
    %7 = vector.shape_cast %6 : vector<1x128xf32> to vector<128xf32>
    %8 = vector.shape_cast %7 : vector<128xf32> to vector<1x1x1x128xf32>
    %9 = vector.broadcast %8 : vector<1x1x1x128xf32> to vector<1x16x16x128xf32>
    %10 = arith.addf %5, %9 : vector<1x16x16x128xf32>
    %c0_7 = arith.constant 0 : index
    %c0_8 = arith.constant 0 : index
    %c0_9 = arith.constant 0 : index
    %c0_10 = arith.constant 0 : index
    %11 = vector.load %arg5[%c0_7, %c0_8, %c0_9, %c0_10] : memref<1x16x16x128xf32, #tpu.memory_space<vmem>>, vector<1x16x16x128xf32>
    tpu.vector_store %arg5[%c0_7, %c0_8, %c0_9, %c0_10], %10 {strides = array<i32>} : memref<1x16x16x128xf32, #tpu.memory_space<vmem>>, vector<1x16x16x128xf32>,
    return
  }
  func.func @transform_0(%arg0: i32, %arg1: i32) -> (i32, i32, i32, i32) {
    %c0_i32 = arith.constant 0 : i32
    %c0_i32_0 = arith.constant 0 : i32
    %c0_i32_1 = arith.constant 0 : i32
    return %arg0, %arg1, %c0_i32, %c0_i32_0 : i32, i32, i32, i32
  }
  func.func @transform_1(%arg0: i32, %arg1: i32) -> (i32, i32) {
    %c0_i32 = arith.constant 0 : i32
    %c0_i32_0 = arith.constant 0 : i32
    %c0_i32_1 = arith.constant 0 : i32
    return %c0_i32, %c0_i32_0 : i32, i32
  }
  func.func @transform_2(%arg0: i32, %arg1: i32) -> (i32, i32) {
    %c0_i32 = arith.constant 0 : i32
    %c0_i32_0 = arith.constant 0 : i32
    %c0_i32_1 = arith.constant 0 : i32
    return %c0_i32, %c0_i32_0 : i32, i32
  }
  func.func @transform_3(%arg0: i32, %arg1: i32) -> (i32, i32, i32, i32) {
    %c0_i32 = arith.constant 0 : i32
    %c0_i32_0 = arith.constant 0 : i32
    %c0_i32_1 = arith.constant 0 : i32
    return %arg0, %arg1, %c0_i32, %c0_i32_0 : i32, i32, i32, i32
  }
}

</mosaic_0001>

<llo_original>
// kernel: crossx_fpn_forward.3
$region0: #{crossx_fpn_forward.3}
  #allocation0 [shape = 'u32[]', space=smem, size = 0x4, offset = 0x4, fixed_abs, tag = 'smem constant byte address 0x4 - core index']
  #allocation1 [shape = 'u32[144,128]{1,0:T(1,128)}', space=vmem, size = 0x12000, scoped, tag = 'internal scratch']
  %s0 = inlined_call_operand.vmem [shape: f32[2,16,16,128], index: 0, kind: input, shape index: {}, may-alias: {0,3}]
  %s1 = inlined_call_operand.vmem [shape: f32[1,128], index: 1, kind: input, shape index: {}]
  %s2 = inlined_call_operand.vmem [shape: f32[1,128], index: 2, kind: input, shape index: {}]
  %s3 = inlined_call_operand.vmem [shape: f32[2,16,16,128], index: 3, kind: output, shape index: {}, may-alias: {0,3}]
  %s4 = sld [smem:[#allocation0]]
  $region45: #{crossx_fpn_forward.3} parent=0
    _
  %s6 = ssub.s32 1, %s4
  %s7 = scalar_select 0, %s6, %s4
  loop: start=0, step=1, limit=4
  $region2: #{crossx_fpn_forward.3} parent=0 // loop_pre_header
    _
  $region3: #{crossx_fpn_forward.3} parent=0 // loop_header
    %s9 = sphi 0, %s13
    %p10 = scmp.ge.s32.totalorder %s9, 4
    %s16 = sphi 0, %s28
    %s17 = sphi 0, %s24
    %s18 = sphi 0, %s16
    %s19 = sphi 0, %s17
    %s20 = sphi 0, %s18
    %s21 = sphi 0, %s19
    %s33 = sphi 0, %s35
    %s36 = sphi 0, %s33
    %s37 = sphi 0, %s36
    %s53 = sphi 0, %s37
    %s57 = sphi 0, %s57
    %s59 = sphi 0, %s57
    %s60 = sphi 0, %s59
    %s74 = sphi 0, %s60
    %s78 = sphi 0, %s78
    %s80 = sphi 0, %s78
    %s81 = sphi 0, %s80
    %s95 = sphi 0, %s81
    %s103 = sphi 0, %s105
    %s106 = sphi 0, %s103
    %s107 = sphi 0, %s106
    %s123 = sphi 0, %s107
  $region4: #{crossx_fpn_forward.3} parent=0 // loop_header_branch
    %12 = sbr.rel (%p10) target = $region8
  $region5: #{crossx_fpn_forward.3} parent=0 // loop_body
    %s14 = ssub.s32 %s9, 1
    %s15 = ssub.s32 %s9, 2
    %s22 = sadd.s32 1, %s17
    %p23 = scmp.ge.s32.totalorder %s22, 1
    %s24 = scalar_select %p23, 0, %s22
    %s25 = sadd.s32 1, %s16
    %s26 = scalar_select %p23, %s25, %s16
    %p27 = scmp.ge.s32.totalorder %s26, 2
    %s28 = scalar_select %p27, 0, %s26
    %s29 = ssub.s32 %s16, %s28
    %s30 = ssub.s32 %s17, %s24
    %s31 = sor.u32 %s29, %s30
    %p32 = scmp.eq.s32.totalorder %s31, 0
    %s34 = sadd.s32 %s33, 1
    %s35 = scalar_select %p32, %s33, %s34
    %p38 = pneg %p32
    %p39 = scmp.eq.s32.totalorder %s9, 1
    %p40 = por %p38, %p39
    %p41 = scmp.ne.s32.totalorder %s33, %s36
    %p42 = scmp.eq.s32.totalorder %s9, 0
    %p43 = por %p41, %p42
    %p44 = scmp.ne.s32.totalorder %s33, %s36
    %p45 = scmp.eq.s32.totalorder %s14, 1
    %p46 = por %p44, %p45
    %p47 = scmp.ne.s32.totalorder %s36, %s37
    %p48 = scmp.eq.s32.totalorder %s14, 0
    %p49 = por %p47, %p48
    %p50 = scmp.ne.s32.totalorder %s36, %s37
    %p51 = scmp.eq.s32.totalorder %s15, 1
    %p52 = por %p50, %p51
    %p54 = scmp.ne.s32.totalorder %s37, %s53
    %p55 = scmp.eq.s32.totalorder %s15, 0
    %p56 = por %p54, %p55
    %s58 = sadd.s32 %s57, 1
    %p61 = scmp.eq.s32.totalorder %s9, 1
    %p62 = scmp.ne.s32.totalorder %s57, %s59
    %p63 = scmp.eq.s32.totalorder %s9, 0
    %p64 = por %p62, %p63
    %p65 = scmp.ne.s32.totalorder %s57, %s59
    %p66 = scmp.eq.s32.totalorder %s14, 1
    %p67 = por %p65, %p66
    %p68 = scmp.ne.s32.totalorder %s59, %s60
    %p69 = scmp.eq.s32.totalorder %s14, 0
    %p70 = por %p68, %p69
    %p71 = scmp.ne.s32.totalorder %s59, %s60
    %p72 = scmp.eq.s32.totalorder %s15, 1
    %p73 = por %p71, %p72
    %p75 = scmp.ne.s32.totalorder %s60, %s74
    %p76 = scmp.eq.s32.totalorder %s15, 0
    %p77 = por %p75, %p76
    %s79 = sadd.s32 %s78, 1
    %p82 = scmp.eq.s32.totalorder %s9, 1
    %p83 = scmp.ne.s32.totalorder %s78, %s80
    %p84 = scmp.eq.s32.totalorder %s9, 0
    %p85 = por %p83, %p84
    %p86 = scmp.ne.s32.totalorder %s78, %s80
    %p87 = scmp.eq.s32.totalorder %s14, 1
    %p88 = por %p86, %p87
    %p89 = scmp.ne.s32.totalorder %s80, %s81
    %p90 = scmp.eq.s32.totalorder %s14, 0
    %p91 = por %p89, %p90
    %p92 = scmp.ne.s32.totalorder %s80, %s81
    %p93 = scmp.eq.s32.totalorder %s15, 1
    %p94 = por %p92, %p93
    %p96 = scmp.ne.s32.totalorder %s81, %s95
    %p97 = scmp.eq.s32.totalorder %s15, 0
    %p98 = por %p96, %p97
    %s99 = ssub.s32 %s16, %s28
    %s100 = ssub.s32 %s17, %s24
    %s101 = sor.u32 %s99, %s100
    %p102 = scmp.eq.s32.totalorder %s101, 0
    %s104 = sadd.s32 %s103, 1
    %s105 = scalar_select %p102, %s103, %s104
    %p108 = pneg %p102
    %p109 = scmp.eq.s32.totalorder %s9, 1
    %p110 = por %p108, %p109
    %p111 = scmp.ne.s32.totalorder %s103, %s106
    %p112 = scmp.eq.s32.totalorder %s9, 0
    %p113 = por %p111, %p112
    %p114 = scmp.ne.s32.totalorder %s103, %s106
    %p115 = scmp.eq.s32.totalorder %s14, 1
    %p116 = por %p114, %p115
    %p117 = scmp.ne.s32.totalorder %s106, %s107
    %p118 = scmp.eq.s32.totalorder %s14, 0
    %p119 = por %p117, %p118
    %p120 = scmp.ne.s32.totalorder %s106, %s107
    %p121 = scmp.eq.s32.totalorder %s15, 1
    %p122 = por %p120, %p121
    %p124 = scmp.ne.s32.totalorder %s107, %s123
    %p125 = scmp.eq.s32.totalorder %s15, 0
    %p126 = por %p124, %p125
    %p127 = scmp.le.s32.totalorder 1, %s9
    %p128 = scmp.lt.s32.totalorder %s9, 3
    %p129 = pnand %p127, %p128
    %p130 = pneg %p129
    // Predicated region
    $region9: #{crossx_fpn_forward.3} parent=5 // pred_check
      _
    $region10: #{crossx_fpn_forward.3} parent=5 // pred_check_branch
      %132 = sbr.rel (%p129) target = $region12
    $region11: #{crossx_fpn_forward.3} parent=5 // pred_region
      %s133 = ssub.s32 %s9, 1
      // Predicated region
      $region13: #{crossx_fpn_forward.3} parent=11 // pred_check
        %p134 = pneg %p70
      $region14: #{crossx_fpn_forward.3} parent=11 // pred_check_branch
        %136 = sbr.rel (%p134) target = $region16
      $region15: #{crossx_fpn_forward.3} parent=11 // pred_region
        _
      $region16: #{crossx_fpn_forward.3} parent=11 // pred_fallthru
        _
      // Predicated region
      $region17: #{crossx_fpn_forward.3} parent=11 // pred_check
        %p137 = pneg %p91
      $region18: #{crossx_fpn_forward.3} parent=11 // pred_check_branch
        %139 = sbr.rel (%p137) target = $region20
      $region19: #{crossx_fpn_forward.3} parent=11 // pred_region
        _
      $region20: #{crossx_fpn_forward.3} parent=11 // pred_fallthru
        _
    $region12: #{crossx_fpn_forward.3} parent=5 // pred_fallthru
      _
    %p140 = scmp.lt.s32.totalorder %s9, 2
    // Predicated region
    $region21: #{crossx_fpn_forward.3} parent=5 // pred_check
      %p141 = pneg %p140
    $region22: #{crossx_fpn_forward.3} parent=5 // pred_check_branch
      %143 = sbr.rel (%p141) target = $region24
    $region23: #{crossx_fpn_forward.3} parent=5 // pred_region
      // Predicated region
      $region25: #{crossx_fpn_forward.3} parent=23 // pred_check
        %p144 = pneg %p43
      $region26: #{crossx_fpn_forward.3} parent=23 // pred_check_branch
        %146 = sbr.rel (%p144) target = $region28
      $region27: #{crossx_fpn_forward.3} parent=23 // pred_region
        %s147 = smul.u32 16, %s17
        %p148 = scmp.lt.s32.totalorder %s16, 1
        %s149 = scalar_select %p148, %s16, 1
        %p150 = scmp.lt.s32.totalorder %s147, 15
        %s151 = scalar_select %p150, %s147, 15
        %s152 = smul.addr %s151, 2
        %s153 = smul.addr %s149, 32
        %s154 = sadd.s32 %s152, %s153
        %s155 = smul.addr %s154, 8
        %s156 = scalar_lea.vmem %s0, %s155
        %s157 = smul.u32 16, %s17
      $region28: #{crossx_fpn_forward.3} parent=23 // pred_fallthru
        _
    $region24: #{crossx_fpn_forward.3} parent=5 // pred_fallthru
      _
    %p158 = scmp.le.s32.totalorder 1, %s9
    %p159 = scmp.lt.s32.totalorder %s9, 3
    %p160 = pnand %p158, %p159
    %p161 = pneg %p160
    // Predicated region
    $region29: #{crossx_fpn_forward.3} parent=5 // pred_check
      _
    $region30: #{crossx_fpn_forward.3} parent=5 // pred_check_branch
      %163 = sbr.rel (%p160) target = $region32
    $region31: #{crossx_fpn_forward.3} parent=5 // pred_region
      %s164 = ssub.s32 %s9, 1
      %s165 = smul.u32 16, %s19
      %p166 = scmp.lt.s32.totalorder %s18, 1
      %s167 = scalar_select %p166, %s18, 1
      %p168 = scmp.lt.s32.totalorder %s165, 15
      %s169 = scalar_select %p168, %s165, 15
      %s170 = smul.addr %s169, 2
      %s171 = smul.addr %s167, 32
      %s172 = sadd.s32 %s170, %s171
      %s173 = smul.addr %s172, 8
      %s174 = scalar_lea.vmem %s0, %s173
      %p175 = pneg %p49
      %p176 = pneg %p46
      %p177 = pneg %p70
      %p178 = pneg %p67
      %p179 = pneg %p91
      %p180 = pneg %p88
      %p181 = pneg %p119
      %p182 = pneg %p116
      %s183 = smul.u32 16, %s19
      %p184 = scmp.lt.s32.totalorder %s18, 1
      %s185 = scalar_select %p184, %s18, 1
      %p186 = scmp.lt.s32.totalorder %s183, 15
      %s187 = scalar_select %p186, %s183, 15
      %s188 = smul.addr %s187, 2
      %s189 = smul.addr %s185, 32
      %s190 = sadd.s32 %s188, %s189
      %s191 = smul.addr %s190, 8
      %s192 = scalar_lea.vmem %s3, %s191
      %s193 = smul.u32 16, %s19
      %p194 = scmp.lt.s32.totalorder %s18, 1
      %s195 = scalar_select %p194, %s18, 1
      %p196 = scmp.lt.s32.totalorder %s193, 15
      %s197 = scalar_select %p196, %s193, 15
      %s198 = smul.addr %s197, 2
      %s199 = smul.addr %s195, 32
      %s200 = sadd.s32 %s198, %s199
      %s201 = smul.addr %s200, 8
      %s202 = scalar_lea.vmem %s0, %s201
      %s203 = smul.u32 16, %s19
      %s204 = smul.u32 16, %s19
      %p205 = scmp.lt.s32.totalorder %s18, 1
      %s206 = scalar_select %p205, %s18, 1
      %p207 = scmp.lt.s32.totalorder %s204, 15
      %s208 = scalar_select %p207, %s204, 15
      %s209 = smul.addr %s208, 2
      %s210 = smul.addr %s206, 32
      %s211 = sadd.s32 %s209, %s210
      %s212 = smul.addr %s211, 8
      %s213 = scalar_lea.vmem %s3, %s212
      %s214 = smul.u32 16, %s19
      %v215 = vld [vmem:[%s202] sm:$0xff]
      %v216 = vld [vmem:[%s202 + $0x8] sm:$0xff]
      %v217 = vld [vmem:[%s202 + $0x10] sm:$0xff]
      %v218 = vld [vmem:[%s202 + $0x18] sm:$0xff]
      %v219 = vld [vmem:[%s202 + $0x20] sm:$0xff]
      %v220 = vld [vmem:[%s202 + $0x28] sm:$0xff]
      %v221 = vld [vmem:[%s202 + $0x30] sm:$0xff]
      %v222 = vld [vmem:[%s202 + $0x38] sm:$0xff]
      %v223 = vld [vmem:[%s202 + $0x40] sm:$0xff]
      %v224 = vld [vmem:[%s202 + $0x48] sm:$0xff]
      %v225 = vld [vmem:[%s202 + $0x50] sm:$0xff]
      %v226 = vld [vmem:[%s202 + $0x58] sm:$0xff]
      %v227 = vld [vmem:[%s202 + $0x60] sm:$0xff]
      %v228 = vld [vmem:[%s202 + $0x68] sm:$0xff]
      %v229 = vld [vmem:[%s202 + $0x70] sm:$0xff]
      %v230 = vld [vmem:[%s202 + $0x78] sm:$0xff]
      %v231 = vld [vmem:[%s202 + $0x80] sm:$0xff]
      %v232 = vld [vmem:[%s202 + $0x88] sm:$0xff]
      %v233 = vld [vmem:[%s202 + $0x90] sm:$0xff]
      %v234 = vld [vmem:[%s202 + $0x98] sm:$0xff]
      %v235 = vld [vmem:[%s202 + $0xa0] sm:$0xff]
      %v236 = vld [vmem:[%s202 + $0xa8] sm:$0xff]
      %v237 = vld [vmem:[%s202 + $0xb0] sm:$0xff]
      %v238 = vld [vmem:[%s202 + $0xb8] sm:$0xff]
      %v239 = vld [vmem:[%s202 + $0xc0] sm:$0xff]
      %v240 = vld [vmem:[%s202 + $0xc8] sm:$0xff]
      %v241 = vld [vmem:[%s202 + $0xd0] sm:$0xff]
      %v242 = vld [vmem:[%s202 + $0xd8] sm:$0xff]
      %v243 = vld [vmem:[%s202 + $0xe0] sm:$0xff]
      %v244 = vld [vmem:[%s202 + $0xe8] sm:$0xff]
      %v245 = vld [vmem:[%s202 + $0xf0] sm:$0xff]
      %v246 = vld [vmem:[%s202 + $0xf8] sm:$0xff]
      %v247 = vld [vmem:[%s1] sm:$0x1]
      %v249 = vlaneseq
      %v250 = vshrl.u32 %v249, 7
      %v251 = vsub.s32 0, %v250
      %v252 = vrot.slane %v247, %v251
      %v254 = vmul.f32 %v215, %v252
      %v255 = vmul.f32 %v216, %v252
      %v256 = vmul.f32 %v217, %v252
      %v257 = vmul.f32 %v218, %v252
      %v258 = vmul.f32 %v219, %v252
      %v259 = vmul.f32 %v220, %v252
      %v260 = vmul.f32 %v221, %v252
      %v261 = vmul.f32 %v222, %v252
      %v262 = vmul.f32 %v223, %v252
      %v263 = vmul.f32 %v224, %v252
      %v264 = vmul.f32 %v225, %v252
      %v265 = vmul.f32 %v226, %v252
      %v266 = vmul.f32 %v227, %v252
      %v267 = vmul.f32 %v228, %v252
      %v268 = vmul.f32 %v229, %v252
      %v269 = vmul.f32 %v230, %v252
      %v270 = vmul.f32 %v231, %v252
      %v271 = vmul.f32 %v232, %v252
      %v272 = vmul.f32 %v233, %v252
      %v273 = vmul.f32 %v234, %v252
      %v274 = vmul.f32 %v235, %v252
      %v275 = vmul.f32 %v236, %v252
      %v276 = vmul.f32 %v237, %v252
      %v277 = vmul.f32 %v238, %v252
      %v278 = vmul.f32 %v239, %v252
      %v279 = vmul.f32 %v240, %v252
      %v280 = vmul.f32 %v241, %v252
      %v281 = vmul.f32 %v242, %v252
      %v282 = vmul.f32 %v243, %v252
      %v283 = vmul.f32 %v244, %v252
      %v284 = vmul.f32 %v245, %v252
      %v285 = vmul.f32 %v246, %v252
      %v286 = vld [vmem:[%s2] sm:$0x1]
      %v288 = vlaneseq
      %v289 = vshrl.u32 %v288, 7
      %v290 = vsub.s32 0, %v289
      %v291 = vrot.slane %v286, %v290
      %v293 = vadd.f32 %v254, %v291
      %v294 = vadd.f32 %v255, %v291
      %v295 = vadd.f32 %v256, %v291
      %v296 = vadd.f32 %v257, %v291
      %v297 = vadd.f32 %v258, %v291
      %v298 = vadd.f32 %v259, %v291
      %v299 = vadd.f32 %v260, %v291
      %v300 = vadd.f32 %v261, %v291
      %v301 = vadd.f32 %v262, %v291
      %v302 = vadd.f32 %v263, %v291
      %v303 = vadd.f32 %v264, %v291
      %v304 = vadd.f32 %v265, %v291
      %v305 = vadd.f32 %v266, %v291
      %v306 = vadd.f32 %v267, %v291
      %v307 = vadd.f32 %v268, %v291
      %v308 = vadd.f32 %v269, %v291
      %v309 = vadd.f32 %v270, %v291
      %v310 = vadd.f32 %v271, %v291
      %v311 = vadd.f32 %v272, %v291
      %v312 = vadd.f32 %v273, %v291
      %v313 = vadd.f32 %v274, %v291
      %v314 = vadd.f32 %v275, %v291
      %v315 = vadd.f32 %v276, %v291
      %v316 = vadd.f32 %v277, %v291
      %v317 = vadd.f32 %v278, %v291
      %v318 = vadd.f32 %v279, %v291
      %v319 = vadd.f32 %v280, %v291
      %v320 = vadd.f32 %v281, %v291
      %v321 = vadd.f32 %v282, %v291
      %v322 = vadd.f32 %v283, %v291
      %v323 = vadd.f32 %v284, %v291
      %v324 = vadd.f32 %v285, %v291
      %325 = vst [vmem:[%s213] sm:$0xff] %v293
      %326 = vst [vmem:[%s213 + $0x8] sm:$0xff] %v294
      %327 = vst [vmem:[%s213 + $0x10] sm:$0xff] %v295
      %328 = vst [vmem:[%s213 + $0x18] sm:$0xff] %v296
      %329 = vst [vmem:[%s213 + $0x20] sm:$0xff] %v297
      %330 = vst [vmem:[%s213 + $0x28] sm:$0xff] %v298
      %331 = vst [vmem:[%s213 + $0x30] sm:$0xff] %v299
      %332 = vst [vmem:[%s213 + $0x38] sm:$0xff] %v300
      %333 = vst [vmem:[%s213 + $0x40] sm:$0xff] %v301
      %334 = vst [vmem:[%s213 + $0x48] sm:$0xff] %v302
      %335 = vst [vmem:[%s213 + $0x50] sm:$0xff] %v303
      %336 = vst [vmem:[%s213 + $0x58] sm:$0xff] %v304
      %337 = vst [vmem:[%s213 + $0x60] sm:$0xff] %v305
      %338 = vst [vmem:[%s213 + $0x68] sm:$0xff] %v306
      %339 = vst [vmem:[%s213 + $0x70] sm:$0xff] %v307
      %340 = vst [vmem:[%s213 + $0x78] sm:$0xff] %v308
      %341 = vst [vmem:[%s213 + $0x80] sm:$0xff] %v309
      %342 = vst [vmem:[%s213 + $0x88] sm:$0xff] %v310
      %343 = vst [vmem:[%s213 + $0x90] sm:$0xff] %v311
      %344 = vst [vmem:[%s213 + $0x98] sm:$0xff] %v312
      %345 = vst [vmem:[%s213 + $0xa0] sm:$0xff] %v313
      %346 = vst [vmem:[%s213 + $0xa8] sm:$0xff] %v314
      %347 = vst [vmem:[%s213 + $0xb0] sm:$0xff] %v315
      %348 = vst [vmem:[%s213 + $0xb8] sm:$0xff] %v316
      %349 = vst [vmem:[%s213 + $0xc0] sm:$0xff] %v317
      %350 = vst [vmem:[%s213 + $0xc8] sm:$0xff] %v318
      %351 = vst [vmem:[%s213 + $0xd0] sm:$0xff] %v319
      %352 = vst [vmem:[%s213 + $0xd8] sm:$0xff] %v320
      %353 = vst [vmem:[%s213 + $0xe0] sm:$0xff] %v321
      %354 = vst [vmem:[%s213 + $0xe8] sm:$0xff] %v322
      %355 = vst [vmem:[%s213 + $0xf0] sm:$0xff] %v323
      %356 = vst [vmem:[%s213 + $0xf8] sm:$0xff] %v324
      %s357 = smul.u32 16, %s19
      %p358 = scmp.lt.s32.totalorder %s18, 1
      %s359 = scalar_select %p358, %s18, 1
      %p360 = scmp.lt.s32.totalorder %s357, 15
      %s361 = scalar_select %p360, %s357, 15
      %s362 = smul.addr %s361, 2
      %s363 = smul.addr %s359, 32
      %s364 = sadd.s32 %s362, %s363
      %s365 = smul.addr %s364, 8
      %s366 = scalar_lea.vmem %s3, %s365
      // Predicated region
      $region33: #{crossx_fpn_forward.3} parent=31 // pred_check
        %p367 = pneg %p116
      $region34: #{crossx_fpn_forward.3} parent=31 // pred_check_branch
        %369 = sbr.rel (%p367) target = $region36
      $region35: #{crossx_fpn_forward.3} parent=31 // pred_region
        %s370 = smul.u32 16, %s19
      $region36: #{crossx_fpn_forward.3} parent=31 // pred_fallthru
        _
    $region32: #{crossx_fpn_forward.3} parent=5 // pred_fallthru
      _
    %p371 = scmp.le.s32.totalorder 2, %s9
    // Predicated region
    $region37: #{crossx_fpn_forward.3} parent=5 // pred_check
      %p372 = pneg %p371
    $region38: #{crossx_fpn_forward.3} parent=5 // pred_check_branch
      %374 = sbr.rel (%p372) target = $region40
    $region39: #{crossx_fpn_forward.3} parent=5 // pred_region
      %s375 = ssub.s32 %s9, 2
      // Predicated region
      $region41: #{crossx_fpn_forward.3} parent=39 // pred_check
        %p376 = pneg %p122
      $region42: #{crossx_fpn_forward.3} parent=39 // pred_check_branch
        %378 = sbr.rel (%p376) target = $region44
      $region43: #{crossx_fpn_forward.3} parent=39 // pred_region
        %s379 = smul.u32 16, %s21
        %p380 = scmp.lt.s32.totalorder %s20, 1
        %s381 = scalar_select %p380, %s20, 1
        %p382 = scmp.lt.s32.totalorder %s379, 15
        %s383 = scalar_select %p382, %s379, 15
        %s384 = smul.addr %s383, 2
        %s385 = smul.addr %s381, 32
        %s386 = sadd.s32 %s384, %s385
        %s387 = smul.addr %s386, 8
        %s388 = scalar_lea.vmem %s3, %s387
      $region44: #{crossx_fpn_forward.3} parent=39 // pred_fallthru
        _
    $region40: #{crossx_fpn_forward.3} parent=5 // pred_fallthru
      _
  $region6: #{crossx_fpn_forward.3} parent=0 // loop_footer
    %s13 = sadd.s32 1, %s9
  $region7: #{crossx_fpn_forward.3} parent=0 // loop_footer_branch
    %8 = sbr.rel target = $region3
  $region8: #{crossx_fpn_forward.3} parent=0 // loop_exit
    _

// kernel: crossx_fpn_forward.2
$region0: #{crossx_fpn_forward.2}
  #allocation0 [shape = 'u32[]', space=smem, size = 0x4, offset = 0x4, fixed_abs, tag = 'smem constant byte address 0x4 - core index']
  #allocation1 [shape = 'u32[144,128]{1,0:T(1,128)}', space=vmem, size = 0x12000, scoped, tag = 'internal scratch']
  %s0 = inlined_call_operand.vmem [shape: bf16[2,8,8,128], index: 0, kind: input, shape index: {}, may-alias: {0,1,2}]
  %s1 = inlined_call_operand.vmem [shape: bf16[2,8,8,128], index: 1, kind: input, shape index: {}, may-alias: {0,1,2}]
  %s2 = inlined_call_operand.vmem [shape: bf16[2,8,8,128], index: 2, kind: input, shape index: {}, may-alias: {0,1,2}]
  %s3 = inlined_call_operand.vmem [shape: f32[2,16,16,128], index: 3, kind: input, shape index: {}, may-alias: {3,4,5}]
  %s4 = inlined_call_operand.vmem [shape: f32[2,16,16,128], index: 4, kind: input, shape index: {}, may-alias: {3,4,5}]
  %s5 = inlined_call_operand.vmem [shape: f32[2,16,16,128], index: 5, kind: input, shape index: {}, may-alias: {3,4,5}]
  %s6 = inlined_call_operand.vmem [shape: bf16[128,128], index: 6, kind: input, shape index: {}]
  %s7 = inlined_call_operand.vmem [shape: bf16[3,3,128,128], index: 7, kind: input, shape index: {}]
  %s8 = inlined_call_operand.vmem [shape: f32[2,16,16,128], index: 8, kind: output, shape index: {0}]
  %s9 = inlined_call_operand.vmem [shape: f32[2,1,2,128], index: 9, kind: output, shape index: {1}]
  %10 = xla_tuple %s8, %s9
  %s11 = sld [smem:[#allocation0]]
  $region73: #{crossx_fpn_forward.2} parent=0
    _
  %s13 = ssub.s32 1, %s11
  %s14 = scalar_select 0, %s13, %s11
  loop: start=0, step=1, limit=4
  $region2: #{crossx_fpn_forward.2} parent=0 // loop_pre_header
    _
  $region3: #{crossx_fpn_forward.2} parent=0 // loop_header
    %s16 = sphi 0, %s20
    %p17 = scmp.ge.s32.totalorder %s16, 4
    %s23 = sphi 0, %s35
    %s24 = sphi 0, %s31
    %s25 = sphi 0, %s23
    %s26 = sphi 0, %s24
    %s27 = sphi 0, %s25
    %s28 = sphi 0, %s26
    %s40 = sphi 0, %s42
    %s43 = sphi 0, %s40
    %s44 = sphi 0, %s43
    %s60 = sphi 0, %s44
    %s76 = sphi 0, %s78
    %s79 = sphi 0, %s76
    %s80 = sphi 0, %s79
    %s96 = sphi 0, %s80
    %s112 = sphi 0, %s114
    %s115 = sphi 0, %s112
    %s116 = sphi 0, %s115
    %s132 = sphi 0, %s116
    %s140 = sphi 0, %s142
    %s143 = sphi 0, %s140
    %s144 = sphi 0, %s143
    %s160 = sphi 0, %s144
    %s176 = sphi 0, %s178
    %s179 = sphi 0, %s176
    %s180 = sphi 0, %s179
    %s196 = sphi 0, %s180
    %s212 = sphi 0, %s214
    %s215 = sphi 0, %s212
    %s216 = sphi 0, %s215
    %s232 = sphi 0, %s216
    %s236 = sphi 0, %s236
    %s238 = sphi 0, %s236
    %s239 = sphi 0, %s238
    %s253 = sphi 0, %s239
    %s257 = sphi 0, %s257
    %s259 = sphi 0, %s257
    %s260 = sphi 0, %s259
    %s274 = sphi 0, %s260
    %s282 = sphi 0, %s284
    %s285 = sphi 0, %s282
    %s286 = sphi 0, %s285
    %s302 = sphi 0, %s286
    %s310 = sphi 0, %s312
    %s313 = sphi 0, %s310
    %s314 = sphi 0, %s313
    %s330 = sphi 0, %s314
  $region4: #{crossx_fpn_forward.2} parent=0 // loop_header_branch
    %19 = sbr.rel (%p17) target = $region8
  $region5: #{crossx_fpn_forward.2} parent=0 // loop_body
    %s21 = ssub.s32 %s16, 1
    %s22 = ssub.s32 %s16, 2
    %s29 = sadd.s32 1, %s24
    %p30 = scmp.ge.s32.totalorder %s29, 1
    %s31 = scalar_select %p30, 0, %s29
    %s32 = sadd.s32 1, %s23
    %s33 = scalar_select %p30, %s32, %s23
    %p34 = scmp.ge.s32.totalorder %s33, 2
    %s35 = scalar_select %p34, 0, %s33
    %s36 = ssub.s32 %s23, %s35
    %s37 = ssub.s32 %s24, %s31
    %s38 = sor.u32 %s36, %s37
    %p39 = scmp.eq.s32.totalorder %s38, 0
    %s41 = sadd.s32 %s40, 1
    %s42 = scalar_select %p39, %s40, %s41
    %p45 = pneg %p39
    %p46 = scmp.eq.s32.totalorder %s16, 1
    %p47 = por %p45, %p46
    %p48 = scmp.ne.s32.totalorder %s40, %s43
    %p49 = scmp.eq.s32.totalorder %s16, 0
    %p50 = por %p48, %p49
    %p51 = scmp.ne.s32.totalorder %s40, %s43
    %p52 = scmp.eq.s32.totalorder %s21, 1
    %p53 = por %p51, %p52
    %p54 = scmp.ne.s32.totalorder %s43, %s44
    %p55 = scmp.eq.s32.totalorder %s21, 0
    %p56 = por %p54, %p55
    %p57 = scmp.ne.s32.totalorder %s43, %s44
    %p58 = scmp.eq.s32.totalorder %s22, 1
    %p59 = por %p57, %p58
    %p61 = scmp.ne.s32.totalorder %s44, %s60
    %p62 = scmp.eq.s32.totalorder %s22, 0
    %p63 = por %p61, %p62
    %s64 = smul.u32 %s24, 8
    %s65 = ssub.s32 %s64, 1
    %p66 = scmp.gt.s32.totalorder %s65, 0
    %s67 = scalar_select %p66, %s65, 0
    %s68 = smul.u32 %s31, 8
    %s69 = ssub.s32 %s68, 1
    %p70 = scmp.gt.s32.totalorder %s69, 0
    %s71 = scalar_select %p70, %s69, 0
    %s72 = ssub.s32 %s23, %s35
    %s73 = ssub.s32 %s67, %s71
    %s74 = sor.u32 %s72, %s73
    %p75 = scmp.eq.s32.totalorder %s74, 0
    %s77 = sadd.s32 %s76, 1
    %s78 = scalar_select %p75, %s76, %s77
    %p81 = pneg %p75
    %p82 = scmp.eq.s32.totalorder %s16, 1
    %p83 = por %p81, %p82
    %p84 = scmp.ne.s32.totalorder %s76, %s79
    %p85 = scmp.eq.s32.totalorder %s16, 0
    %p86 = por %p84, %p85
    %p87 = scmp.ne.s32.totalorder %s76, %s79
    %p88 = scmp.eq.s32.totalorder %s21, 1
    %p89 = por %p87, %p88
    %p90 = scmp.ne.s32.totalorder %s79, %s80
    %p91 = scmp.eq.s32.totalorder %s21, 0
    %p92 = por %p90, %p91
    %p93 = scmp.ne.s32.totalorder %s79, %s80
    %p94 = scmp.eq.s32.totalorder %s22, 1
    %p95 = por %p93, %p94
    %p97 = scmp.ne.s32.totalorder %s80, %s96
    %p98 = scmp.eq.s32.totalorder %s22, 0
    %p99 = por %p97, %p98
    %s100 = smul.u32 %s24, 8
    %s101 = sadd.s32 %s100, 8
    %p102 = scmp.lt.s32.totalorder %s101, 7
    %s103 = scalar_select %p102, %s101, 7
    %s104 = smul.u32 %s31, 8
    %s105 = sadd.s32 %s104, 8
    %p106 = scmp.lt.s32.totalorder %s105, 7
    %s107 = scalar_select %p106, %s105, 7
    %s108 = ssub.s32 %s23, %s35
    %s109 = ssub.s32 %s103, %s107
    %s110 = sor.u32 %s108, %s109
    %p111 = scmp.eq.s32.totalorder %s110, 0
    %s113 = sadd.s32 %s112, 1
    %s114 = scalar_select %p111, %s112, %s113
    %p117 = pneg %p111
    %p118 = scmp.eq.s32.totalorder %s16, 1
    %p119 = por %p117, %p118
    %p120 = scmp.ne.s32.totalorder %s112, %s115
    %p121 = scmp.eq.s32.totalorder %s16, 0
    %p122 = por %p120, %p121
    %p123 = scmp.ne.s32.totalorder %s112, %s115
    %p124 = scmp.eq.s32.totalorder %s21, 1
    %p125 = por %p123, %p124
    %p126 = scmp.ne.s32.totalorder %s115, %s116
    %p127 = scmp.eq.s32.totalorder %s21, 0
    %p128 = por %p126, %p127
    %p129 = scmp.ne.s32.totalorder %s115, %s116
    %p130 = scmp.eq.s32.totalorder %s22, 1
    %p131 = por %p129, %p130
    %p133 = scmp.ne.s32.totalorder %s116, %s132
    %p134 = scmp.eq.s32.totalorder %s22, 0
    %p135 = por %p133, %p134
    %s136 = ssub.s32 %s23, %s35
    %s137 = ssub.s32 %s24, %s31
    %s138 = sor.u32 %s136, %s137
    %p139 = scmp.eq.s32.totalorder %s138, 0
    %s141 = sadd.s32 %s140, 1
    %s142 = scalar_select %p139, %s140, %s141
    %p145 = pneg %p139
    %p146 = scmp.eq.s32.totalorder %s16, 1
    %p147 = por %p145, %p146
    %p148 = scmp.ne.s32.totalorder %s140, %s143
    %p149 = scmp.eq.s32.totalorder %s16, 0
    %p150 = por %p148, %p149
    %p151 = scmp.ne.s32.totalorder %s140, %s143
    %p152 = scmp.eq.s32.totalorder %s21, 1
    %p153 = por %p151, %p152
    %p154 = scmp.ne.s32.totalorder %s143, %s144
    %p155 = scmp.eq.s32.totalorder %s21, 0
    %p156 = por %p154, %p155
    %p157 = scmp.ne.s32.totalorder %s143, %s144
    %p158 = scmp.eq.s32.totalorder %s22, 1
    %p159 = por %p157, %p158
    %p161 = scmp.ne.s32.totalorder %s144, %s160
    %p162 = scmp.eq.s32.totalorder %s22, 0
    %p163 = por %p161, %p162
    %s164 = smul.u32 %s24, 16
    %s165 = ssub.s32 %s164, 1
    %p166 = scmp.gt.s32.totalorder %s165, 0
    %s167 = scalar_select %p166, %s165, 0
    %s168 = smul.u32 %s31, 16
    %s169 = ssub.s32 %s168, 1
    %p170 = scmp.gt.s32.totalorder %s169, 0
    %s171 = scalar_select %p170, %s169, 0
    %s172 = ssub.s32 %s23, %s35
    %s173 = ssub.s32 %s167, %s171
    %s174 = sor.u32 %s172, %s173
    %p175 = scmp.eq.s32.totalorder %s174, 0
    %s177 = sadd.s32 %s176, 1
    %s178 = scalar_select %p175, %s176, %s177
    %p181 = pneg %p175
    %p182 = scmp.eq.s32.totalorder %s16, 1
    %p183 = por %p181, %p182
    %p184 = scmp.ne.s32.totalorder %s176, %s179
    %p185 = scmp.eq.s32.totalorder %s16, 0
    %p186 = por %p184, %p185
    %p187 = scmp.ne.s32.totalorder %s176, %s179
    %p188 = scmp.eq.s32.totalorder %s21, 1
    %p189 = por %p187, %p188
    %p190 = scmp.ne.s32.totalorder %s179, %s180
    %p191 = scmp.eq.s32.totalorder %s21, 0
    %p192 = por %p190, %p191
    %p193 = scmp.ne.s32.totalorder %s179, %s180
    %p194 = scmp.eq.s32.totalorder %s22, 1
    %p195 = por %p193, %p194
    %p197 = scmp.ne.s32.totalorder %s180, %s196
    %p198 = scmp.eq.s32.totalorder %s22, 0
    %p199 = por %p197, %p198
    %s200 = smul.u32 %s24, 16
    %s201 = sadd.s32 %s200, 16
    %p202 = scmp.lt.s32.totalorder %s201, 15
    %s203 = scalar_select %p202, %s201, 15
    %s204 = smul.u32 %s31, 16
    %s205 = sadd.s32 %s204, 16
    %p206 = scmp.lt.s32.totalorder %s205, 15
    %s207 = scalar_select %p206, %s205, 15
    %s208 = ssub.s32 %s23, %s35
    %s209 = ssub.s32 %s203, %s207
    %s210 = sor.u32 %s208, %s209
    %p211 = scmp.eq.s32.totalorder %s210, 0
    %s213 = sadd.s32 %s212, 1
    %s214 = scalar_select %p211, %s212, %s213
    %p217 = pneg %p211
    %p218 = scmp.eq.s32.totalorder %s16, 1
    %p219 = por %p217, %p218
    %p220 = scmp.ne.s32.totalorder %s212, %s215
    %p221 = scmp.eq.s32.totalorder %s16, 0
    %p222 = por %p220, %p221
    %p223 = scmp.ne.s32.totalorder %s212, %s215
    %p224 = scmp.eq.s32.totalorder %s21, 1
    %p225 = por %p223, %p224
    %p226 = scmp.ne.s32.totalorder %s215, %s216
    %p227 = scmp.eq.s32.totalorder %s21, 0
    %p228 = por %p226, %p227
    %p229 = scmp.ne.s32.totalorder %s215, %s216
    %p230 = scmp.eq.s32.totalorder %s22, 1
    %p231 = por %p229, %p230
    %p233 = scmp.ne.s32.totalorder %s216, %s232
    %p234 = scmp.eq.s32.totalorder %s22, 0
    %p235 = por %p233, %p234
    %s237 = sadd.s32 %s236, 1
    %p240 = scmp.eq.s32.totalorder %s16, 1
    %p241 = scmp.ne.s32.totalorder %s236, %s238
    %p242 = scmp.eq.s32.totalorder %s16, 0
    %p243 = por %p241, %p242
    %p244 = scmp.ne.s32.totalorder %s236, %s238
    %p245 = scmp.eq.s32.totalorder %s21, 1
    %p246 = por %p244, %p245
    %p247 = scmp.ne.s32.totalorder %s238, %s239
    %p248 = scmp.eq.s32.totalorder %s21, 0
    %p249 = por %p247, %p248
    %p250 = scmp.ne.s32.totalorder %s238, %s239
    %p251 = scmp.eq.s32.totalorder %s22, 1
    %p252 = por %p250, %p251
    %p254 = scmp.ne.s32.totalorder %s239, %s253
    %p255 = scmp.eq.s32.totalorder %s22, 0
    %p256 = por %p254, %p255
    %s258 = sadd.s32 %s257, 1
    %p261 = scmp.eq.s32.totalorder %s16, 1
    %p262 = scmp.ne.s32.totalorder %s257, %s259
    %p263 = scmp.eq.s32.totalorder %s16, 0
    %p264 = por %p262, %p263
    %p265 = scmp.ne.s32.totalorder %s257, %s259
    %p266 = scmp.eq.s32.totalorder %s21, 1
    %p267 = por %p265, %p266
    %p268 = scmp.ne.s32.totalorder %s259, %s260
    %p269 = scmp.eq.s32.totalorder %s21, 0
    %p270 = por %p268, %p269
    %p271 = scmp.ne.s32.totalorder %s259, %s260
    %p272 = scmp.eq.s32.totalorder %s22, 1
    %p273 = por %p271, %p272
    %p275 = scmp.ne.s32.totalorder %s260, %s274
    %p276 = scmp.eq.s32.totalorder %s22, 0
    %p277 = por %p275, %p276
    %s278 = ssub.s32 %s23, %s35
    %s279 = ssub.s32 %s24, %s31
    %s280 = sor.u32 %s278, %s279
    %p281 = scmp.eq.s32.totalorder %s280, 0
    %s283 = sadd.s32 %s282, 1
    %s284 = scalar_select %p281, %s282, %s283
    %p287 = pneg %p281
    %p288 = scmp.eq.s32.totalorder %s16, 1
    %p289 = por %p287, %p288
    %p290 = scmp.ne.s32.totalorder %s282, %s285
    %p291 = scmp.eq.s32.totalorder %s16, 0
    %p292 = por %p290, %p291
    %p293 = scmp.ne.s32.totalorder %s282, %s285
    %p294 = scmp.eq.s32.totalorder %s21, 1
    %p295 = por %p293, %p294
    %p296 = scmp.ne.s32.totalorder %s285, %s286
    %p297 = scmp.eq.s32.totalorder %s21, 0
    %p298 = por %p296, %p297
    %p299 = scmp.ne.s32.totalorder %s285, %s286
    %p300 = scmp.eq.s32.totalorder %s22, 1
    %p301 = por %p299, %p300
    %p303 = scmp.ne.s32.totalorder %s286, %s302
    %p304 = scmp.eq.s32.totalorder %s22, 0
    %p305 = por %p303, %p304
    %s306 = ssub.s32 %s23, %s35
    %s307 = ssub.s32 %s24, %s31
    %s308 = sor.u32 %s306, %s307
    %p309 = scmp.eq.s32.totalorder %s308, 0
    %s311 = sadd.s32 %s310, 1
    %s312 = scalar_select %p309, %s310, %s311
    %p315 = pneg %p309
    %p316 = scmp.eq.s32.totalorder %s16, 1
    %p317 = por %p315, %p316
    %p318 = scmp.ne.s32.totalorder %s310, %s313
    %p319 = scmp.eq.s32.totalorder %s16, 0
    %p320 = por %p318, %p319
    %p321 = scmp.ne.s32.totalorder %s310, %s313
    %p322 = scmp.eq.s32.totalorder %s21, 1
    %p323 = por %p321, %p322
    %p324 = scmp.ne.s32.totalorder %s313, %s314
    %p325 = scmp.eq.s32.totalorder %s21, 0
    %p326 = por %p324, %p325
    %p327 = scmp.ne.s32.totalorder %s313, %s314
    %p328 = scmp.eq.s32.totalorder %s22, 1
    %p329 = por %p327, %p328
    %p331 = scmp.ne.s32.totalorder %s314, %s330
    %p332 = scmp.eq.s32.totalorder %s22, 0
    %p333 = por %p331, %p332
    %p334 = scmp.le.s32.totalorder 1, %s16
    %p335 = scmp.lt.s32.totalorder %s16, 3
    %p336 = pnand %p334, %p335
    %p337 = pneg %p336
    // Predicated region
    $region9: #{crossx_fpn_forward.2} parent=5 // pred_check
      _
    $region10: #{crossx_fpn_forward.2} parent=5 // pred_check_branch
      %339 = sbr.rel (%p336) target = $region12
    $region11: #{crossx_fpn_forward.2} parent=5 // pred_region
      %s340 = ssub.s32 %s16, 1
      // Predicated region
      $region13: #{crossx_fpn_forward.2} parent=11 // pred_check
        %p341 = pneg %p249
      $region14: #{crossx_fpn_forward.2} parent=11 // pred_check_branch
        %343 = sbr.rel (%p341) target = $region16
      $region15: #{crossx_fpn_forward.2} parent=11 // pred_region
        _
      $region16: #{crossx_fpn_forward.2} parent=11 // pred_fallthru
        _
      // Predicated region
      $region17: #{crossx_fpn_forward.2} parent=11 // pred_check
        %p344 = pneg %p270
      $region18: #{crossx_fpn_forward.2} parent=11 // pred_check_branch
        %346 = sbr.rel (%p344) target = $region20
      $region19: #{crossx_fpn_forward.2} parent=11 // pred_region
        _
      $region20: #{crossx_fpn_forward.2} parent=11 // pred_fallthru
        _
    $region12: #{crossx_fpn_forward.2} parent=5 // pred_fallthru
      _
    %p347 = scmp.lt.s32.totalorder %s16, 2
    // Predicated region
    $region21: #{crossx_fpn_forward.2} parent=5 // pred_check
      %p348 = pneg %p347
    $region22: #{crossx_fpn_forward.2} parent=5 // pred_check_branch
      %350 = sbr.rel (%p348) target = $region24
    $region23: #{crossx_fpn_forward.2} parent=5 // pred_region
      // Predicated region
      $region25: #{crossx_fpn_forward.2} parent=23 // pred_check
        %p351 = pneg %p50
      $region26: #{crossx_fpn_forward.2} parent=23 // pred_check_branch
        %353 = sbr.rel (%p351) target = $region28
      $region27: #{crossx_fpn_forward.2} parent=23 // pred_region
        %s354 = smul.u32 8, %s24
        %p355 = scmp.lt.s32.totalorder %s23, 1
        %s356 = scalar_select %p355, %s23, 1
        %p357 = scmp.lt.s32.totalorder %s354, 7
        %s358 = scalar_select %p357, %s354, 7
        %s359 = smul.addr %s356, 8
        %s360 = sadd.s32 %s358, %s359
        %s361 = smul.addr %s360, 4
        %s362 = scalar_lea.vmem %s0, %s361
        %s363 = smul.u32 8, %s24
      $region28: #{crossx_fpn_forward.2} parent=23 // pred_fallthru
        _
      // Predicated region
      $region29: #{crossx_fpn_forward.2} parent=23 // pred_check
        %p364 = pneg %p86
      $region30: #{crossx_fpn_forward.2} parent=23 // pred_check_branch
        %366 = sbr.rel (%p364) target = $region32
      $region31: #{crossx_fpn_forward.2} parent=23 // pred_region
        %s367 = smul.u32 %s24, 8
        %s368 = ssub.s32 %s367, 1
        %p369 = scmp.gt.s32.totalorder %s368, 0
        %s370 = scalar_select %p369, %s368, 0
        %p371 = scmp.lt.s32.totalorder %s23, 1
        %s372 = scalar_select %p371, %s23, 1
        %p373 = scmp.lt.s32.totalorder %s370, 7
        %s374 = scalar_select %p373, %s370, 7
        %s375 = smul.addr %s372, 8
        %s376 = sadd.s32 %s374, %s375
        %s377 = smul.addr %s376, 4
        %s378 = scalar_lea.vmem %s1, %s377
        %s379 = smul.u32 %s24, 8
        %s380 = ssub.s32 %s379, 1
        %p381 = scmp.gt.s32.totalorder %s380, 0
        %s382 = scalar_select %p381, %s380, 0
      $region32: #{crossx_fpn_forward.2} parent=23 // pred_fallthru
        _
      // Predicated region
      $region33: #{crossx_fpn_forward.2} parent=23 // pred_check
        %p383 = pneg %p122
      $region34: #{crossx_fpn_forward.2} parent=23 // pred_check_branch
        %385 = sbr.rel (%p383) target = $region36
      $region35: #{crossx_fpn_forward.2} parent=23 // pred_region
        %s386 = smul.u32 %s24, 8
        %s387 = sadd.s32 %s386, 8
        %p388 = scmp.lt.s32.totalorder %s387, 7
        %s389 = scalar_select %p388, %s387, 7
        %p390 = scmp.lt.s32.totalorder %s23, 1
        %s391 = scalar_select %p390, %s23, 1
        %p392 = scmp.lt.s32.totalorder %s389, 7
        %s393 = scalar_select %p392, %s389, 7
        %s394 = smul.addr %s391, 8
        %s395 = sadd.s32 %s393, %s394
        %s396 = smul.addr %s395, 4
        %s397 = scalar_lea.vmem %s2, %s396
        %s398 = smul.u32 %s24, 8
        %s399 = sadd.s32 %s398, 8
        %p400 = scmp.lt.s32.totalorder %s399, 7
        %s401 = scalar_select %p400, %s399, 7
      $region36: #{crossx_fpn_forward.2} parent=23 // pred_fallthru
        _
      // Predicated region
      $region37: #{crossx_fpn_forward.2} parent=23 // pred_check
        %p402 = pneg %p150
      $region38: #{crossx_fpn_forward.2} parent=23 // pred_check_branch
        %404 = sbr.rel (%p402) target = $region40
      $region39: #{crossx_fpn_forward.2} parent=23 // pred_region
        %s405 = smul.u32 16, %s24
        %p406 = scmp.lt.s32.totalorder %s23, 1
        %s407 = scalar_select %p406, %s23, 1
        %p408 = scmp.lt.s32.totalorder %s405, 15
        %s409 = scalar_select %p408, %s405, 15
        %s410 = smul.addr %s409, 2
        %s411 = smul.addr %s407, 32
        %s412 = sadd.s32 %s410, %s411
        %s413 = smul.addr %s412, 8
        %s414 = scalar_lea.vmem %s3, %s413
        %s415 = smul.u32 16, %s24
      $region40: #{crossx_fpn_forward.2} parent=23 // pred_fallthru
        _
      // Predicated region
      $region41: #{crossx_fpn_forward.2} parent=23 // pred_check
        %p416 = pneg %p186
      $region42: #{crossx_fpn_forward.2} parent=23 // pred_check_branch
        %418 = sbr.rel (%p416) target = $region44
      $region43: #{crossx_fpn_forward.2} parent=23 // pred_region
        %s419 = smul.u32 %s24, 16
        %s420 = ssub.s32 %s419, 1
        %p421 = scmp.gt.s32.totalorder %s420, 0
        %s422 = scalar_select %p421, %s420, 0
        %p423 = scmp.lt.s32.totalorder %s23, 1
        %s424 = scalar_select %p423, %s23, 1
        %p425 = scmp.lt.s32.totalorder %s422, 15
        %s426 = scalar_select %p425, %s422, 15
        %s427 = smul.addr %s426, 2
        %s428 = smul.addr %s424, 32
        %s429 = sadd.s32 %s427, %s428
        %s430 = smul.addr %s429, 8
        %s431 = scalar_lea.vmem %s4, %s430
        %s432 = smul.u32 %s24, 16
        %s433 = ssub.s32 %s432, 1
        %p434 = scmp.gt.s32.totalorder %s433, 0
        %s435 = scalar_select %p434, %s433, 0
      $region44: #{crossx_fpn_forward.2} parent=23 // pred_fallthru
        _
      // Predicated region
      $region45: #{crossx_fpn_forward.2} parent=23 // pred_check
        %p436 = pneg %p222
      $region46: #{crossx_fpn_forward.2} parent=23 // pred_check_branch
        %438 = sbr.rel (%p436) target = $region48
      $region47: #{crossx_fpn_forward.2} parent=23 // pred_region
        %s439 = smul.u32 %s24, 16
        %s440 = sadd.s32 %s439, 16
        %p441 = scmp.lt.s32.totalorder %s440, 15
        %s442 = scalar_select %p441, %s440, 15
        %p443 = scmp.lt.s32.totalorder %s23, 1
        %s444 = scalar_select %p443, %s23, 1
        %p445 = scmp.lt.s32.totalorder %s442, 15
        %s446 = scalar_select %p445, %s442, 15
        %s447 = smul.addr %s446, 2
        %s448 = smul.addr %s444, 32
        %s449 = sadd.s32 %s447, %s448
        %s450 = smul.addr %s449, 8
        %s451 = scalar_lea.vmem %s5, %s450
        %s452 = smul.u32 %s24, 16
        %s453 = sadd.s32 %s452, 16
        %p454 = scmp.lt.s32.totalorder %s453, 15
        %s455 = scalar_select %p454, %s453, 15
      $region48: #{crossx_fpn_forward.2} parent=23 // pred_fallthru
        _
    $region24: #{crossx_fpn_forward.2} parent=5 // pred_fallthru
      _
    %p456 = scmp.le.s32.totalorder 1, %s16
    %p457 = scmp.lt.s32.totalorder %s16, 3
    %p458 = pnand %p456, %p457
    %p459 = pneg %p458
    // Predicated region
    $region49: #{crossx_fpn_forward.2} parent=5 // pred_check
      _
    $region50: #{crossx_fpn_forward.2} parent=5 // pred_check_branch
      %461 = sbr.rel (%p458) target = $region52
    $region51: #{crossx_fpn_forward.2} parent=5 // pred_region
      %s462 = ssub.s32 %s16, 1
      %s463 = smul.u32 8, %s26
      %p464 = scmp.lt.s32.totalorder %s25, 1
      %s465 = scalar_select %p464, %s25, 1
      %p466 = scmp.lt.s32.totalorder %s463, 7
      %s467 = scalar_select %p466, %s463, 7
      %s468 = smul.addr %s465, 8
      %s469 = sadd.s32 %s467, %s468
      %s470 = smul.addr %s469, 4
      %s471 = scalar_lea.vmem %s0, %s470
      %p472 = pneg %p56
      %p473 = pneg %p53
      %s474 = smul.u32 %s26, 8
      %s475 = ssub.s32 %s474, 1
      %p476 = scmp.gt.s32.totalorder %s475, 0
      %s477 = scalar_select %p476, %s475, 0
      %p478 = scmp.lt.s32.totalorder %s25, 1
      %s479 = scalar_select %p478, %s25, 1
      %p480 = scmp.lt.s32.totalorder %s477, 7
      %s481 = scalar_select %p480, %s477, 7
      %s482 = smul.addr %s479, 8
      %s483 = sadd.s32 %s481, %s482
      %s484 = smul.addr %s483, 4
      %s485 = scalar_lea.vmem %s1, %s484
      %p486 = pneg %p92
      %p487 = pneg %p89
      %s488 = smul.u32 %s26, 8
      %s489 = sadd.s32 %s488, 8
      %p490 = scmp.lt.s32.totalorder %s489, 7
      %s491 = scalar_select %p490, %s489, 7
      %p492 = scmp.lt.s32.totalorder %s25, 1
      %s493 = scalar_select %p492, %s25, 1
      %p494 = scmp.lt.s32.totalorder %s491, 7
      %s495 = scalar_select %p494, %s491, 7
      %s496 = smul.addr %s493, 8
      %s497 = sadd.s32 %s495, %s496
      %s498 = smul.addr %s497, 4
      %s499 = scalar_lea.vmem %s2, %s498
      %p500 = pneg %p128
      %p501 = pneg %p125
      %s502 = smul.u32 16, %s26
      %p503 = scmp.lt.s32.totalorder %s25, 1
      %s504 = scalar_select %p503, %s25, 1
      %p505 = scmp.lt.s32.totalorder %s502, 15
      %s506 = scalar_select %p505, %s502, 15
      %s507 = smul.addr %s506, 2
      %s508 = smul.addr %s504, 32
      %s509 = sadd.s32 %s507, %s508
      %s510 = smul.addr %s509, 8
      %s511 = scalar_lea.vmem %s3, %s510
      %p512 = pneg %p156
      %p513 = pneg %p153
      %s514 = smul.u32 %s26, 16
      %s515 = ssub.s32 %s514, 1
      %p516 = scmp.gt.s32.totalorder %s515, 0
      %s517 = scalar_select %p516, %s515, 0
      %p518 = scmp.lt.s32.totalorder %s25, 1
      %s519 = scalar_select %p518, %s25, 1
      %p520 = scmp.lt.s32.totalorder %s517, 15
      %s521 = scalar_select %p520, %s517, 15
      %s522 = smul.addr %s521, 2
      %s523 = smul.addr %s519, 32
      %s524 = sadd.s32 %s522, %s523
      %s525 = smul.addr %s524, 8
      %s526 = scalar_lea.vmem %s4, %s525
      %p527 = pneg %p192
      %p528 = pneg %p189
      %s529 = smul.u32 %s26, 16
      %s530 = sadd.s32 %s529, 16
      %p531 = scmp.lt.s32.totalorder %s530, 15
      %s532 = scalar_select %p531, %s530, 15
      %p533 = scmp.lt.s32.totalorder %s25, 1
      %s534 = scalar_select %p533, %s25, 1
      %p535 = scmp.lt.s32.totalorder %s532, 15
      %s536 = scalar_select %p535, %s532, 15
      %s537 = smul.addr %s536, 2
      %s538 = smul.addr %s534, 32
      %s539 = sadd.s32 %s537, %s538
      %s540 = smul.addr %s539, 8
      %s541 = scalar_lea.vmem %s5, %s540
      %p542 = pneg %p228
      %p543 = pneg %p225
      %p544 = pneg %p249
      %p545 = pneg %p246
      %p546 = pneg %p270
      %p547 = pneg %p267
      %p548 = pneg %p298
      %p549 = pneg %p295
      %s550 = smul.u32 16, %s26
      %p551 = scmp.lt.s32.totalorder %s25, 1
      %s552 = scalar_select %p551, %s25, 1
      %p553 = scmp.lt.s32.totalorder %s550, 15
      %s554 = scalar_select %p553, %s550, 15
      %s555 = smul.addr %s554, 2
      %s556 = smul.addr %s552, 32
      %s557 = sadd.s32 %s555, %s556
      %s558 = smul.addr %s557, 8
      %s559 = scalar_lea.vmem %s8, %s558
      %p560 = pneg %p326
      %p561 = pneg %p323
      %p562 = scmp.lt.s32.totalorder %s25, 1
      %s563 = scalar_select %p562, %s25, 1
      %p564 = scmp.lt.s32.totalorder %s26, 0
      %s565 = scalar_select %p564, %s26, 0
      %s566 = sadd.s32 %s565, %s563
      %s567 = smul.addr %s566, 2
      %s568 = scalar_lea.vmem %s9, %s567
      %s569 = smul.u32 8, %s26
      %p570 = scmp.lt.s32.totalorder %s25, 1
      %s571 = scalar_select %p570, %s25, 1
      %p572 = scmp.lt.s32.totalorder %s569, 7
      %s573 = scalar_select %p572, %s569, 7
      %s574 = smul.addr %s571, 8
      %s575 = sadd.s32 %s573, %s574
      %s576 = smul.addr %s575, 4
      %s577 = scalar_lea.vmem %s0, %s576
      %s578 = smul.u32 8, %s26
      %s579 = smul.u32 %s26, 8
      %s580 = ssub.s32 %s579, 1
      %p581 = scmp.gt.s32.totalorder %s580, 0
      %s582 = scalar_select %p581, %s580, 0
      %p583 = scmp.lt.s32.totalorder %s25, 1
      %s584 = scalar_select %p583, %s25, 1
      %p585 = scmp.lt.s32.totalorder %s582, 7
      %s586 = scalar_select %p585, %s582, 7
      %s587 = smul.addr %s584, 8
      %s588 = sadd.s32 %s586, %s587
      %s589 = smul.addr %s588, 4
      %s590 = scalar_lea.vmem %s1, %s589
      %s591 = smul.u32 %s26, 8
      %s592 = ssub.s32 %s591, 1
      %p593 = scmp.gt.s32.totalorder %s592, 0
      %s594 = scalar_select %p593, %s592, 0
      %s595 = smul.u32 %s26, 8
      %s596 = sadd.s32 %s595, 8
      %p597 = scmp.lt.s32.totalorder %s596, 7
      %s598 = scalar_select %p597, %s596, 7
      %p599 = scmp.lt.s32.totalorder %s25, 1
      %s600 = scalar_select %p599, %s25, 1
      %p601 = scmp.lt.s32.totalorder %s598, 7
      %s602 = scalar_select %p601, %s598, 7
      %s603 = smul.addr %s600, 8
      %s604 = sadd.s32 %s602, %s603
      %s605 = smul.addr %s604, 4
      %s606 = scalar_lea.vmem %s2, %s605
      %s607 = smul.u32 %s26, 8
      %s608 = sadd.s32 %s607, 8
      %p609 = scmp.lt.s32.totalorder %s608, 7
      %s610 = scalar_select %p609, %s608, 7
      %s611 = smul.u32 16, %s26
      %p612 = scmp.lt.s32.totalorder %s25, 1
      %s613 = scalar_select %p612, %s25, 1
      %p614 = scmp.lt.s32.totalorder %s611, 15
      %s615 = scalar_select %p614, %s611, 15
      %s616 = smul.addr %s615, 2
      %s617 = smul.addr %s613, 32
      %s618 = sadd.s32 %s616, %s617
      %s619 = smul.addr %s618, 8
      %s620 = scalar_lea.vmem %s3, %s619
      %s621 = smul.u32 16, %s26
      %s622 = smul.u32 %s26, 16
      %s623 = ssub.s32 %s622, 1
      %p624 = scmp.gt.s32.totalorder %s623, 0
      %s625 = scalar_select %p624, %s623, 0
      %p626 = scmp.lt.s32.totalorder %s25, 1
      %s627 = scalar_select %p626, %s25, 1
      %p628 = scmp.lt.s32.totalorder %s625, 15
      %s629 = scalar_select %p628, %s625, 15
      %s630 = smul.addr %s629, 2
      %s631 = smul.addr %s627, 32
      %s632 = sadd.s32 %s630, %s631
      %s633 = smul.addr %s632, 8
      %s634 = scalar_lea.vmem %s4, %s633
      %s635 = smul.u32 %s26, 16
      %s636 = ssub.s32 %s635, 1
      %p637 = scmp.gt.s32.totalorder %s636, 0
      %s638 = scalar_select %p637, %s636, 0
      %s639 = smul.u32 %s26, 16
      %s640 = sadd.s32 %s639, 16
      %p641 = scmp.lt.s32.totalorder %s640, 15
      %s642 = scalar_select %p641, %s640, 15
      %p643 = scmp.lt.s32.totalorder %s25, 1
      %s644 = scalar_select %p643, %s25, 1
      %p645 = scmp.lt.s32.totalorder %s642, 15
      %s646 = scalar_select %p645, %s642, 15
      %s647 = smul.addr %s646, 2
      %s648 = smul.addr %s644, 32
      %s649 = sadd.s32 %s647, %s648
      %s650 = smul.addr %s649, 8
      %s651 = scalar_lea.vmem %s5, %s650
      %s652 = smul.u32 %s26, 16
      %s653 = sadd.s32 %s652, 16
      %p654 = scmp.lt.s32.totalorder %s653, 15
      %s655 = scalar_select %p654, %s653, 15
      %s656 = smul.u32 16, %s26
      %p657 = scmp.lt.s32.totalorder %s25, 1
      %s658 = scalar_select %p657, %s25, 1
      %p659 = scmp.lt.s32.totalorder %s656, 15
      %s660 = scalar_select %p659, %s656, 15
      %s661 = smul.addr %s660, 2
      %s662 = smul.addr %s658, 32
      %s663 = sadd.s32 %s661, %s662
      %s664 = smul.addr %s663, 8
      %s665 = scalar_lea.vmem %s8, %s664
      %s666 = smul.u32 16, %s26
      %p667 = scmp.lt.s32.totalorder %s25, 1
      %s668 = scalar_select %p667, %s25, 1
      %p669 = scmp.lt.s32.totalorder %s26, 0
      %s670 = scalar_select %p669, %s26, 0
      %s671 = sadd.s32 %s670, %s668
      %s672 = smul.addr %s671, 2
      %s673 = scalar_lea.vmem %s9, %s672
      %p675 = scmp.eq.s32.totalorder %s26, 0
      %s676 = scalar_select %p675, 0.0, 1.0
      %v677 = vld [vmem:[%s590] sm:$0xf]
      %v678 = vld [vmem:[%s577] sm:$0xf]
      %v679 = vld [vmem:[%s577 + $0x4] sm:$0xf]
      %v680 = vld [vmem:[%s577 + $0x8] sm:$0xf]
      %v681 = vld [vmem:[%s577 + $0xc] sm:$0xf]
      %v682 = vld [vmem:[%s577 + $0x10] sm:$0xf]
      %v683 = vld [vmem:[%s577 + $0x14] sm:$0xf]
      %v684 = vld [vmem:[%s577 + $0x18] sm:$0xf]
      %v685 = vld [vmem:[%s577 + $0x1c] sm:$0xf]
      %v686 = vld [vmem:[%s606] sm:$0xf]
      %v687 = vld [vmem:[%s6] sm:$0xf]
      %v688 = vld [vmem:[%s6 + $0x4] sm:$0xf]
      %v689 = vld [vmem:[%s6 + $0x8] sm:$0xf]
      %v690 = vld [vmem:[%s6 + $0xc] sm:$0xf]
      %v691 = vld [vmem:[%s6 + $0x10] sm:$0xf]
      %v692 = vld [vmem:[%s6 + $0x14] sm:$0xf]
      %v693 = vld [vmem:[%s6 + $0x18] sm:$0xf]
      %v694 = vld [vmem:[%s6 + $0x1c] sm:$0xf]
      %v695 = vld [vmem:[%s6 + $0x20] sm:$0xf]
      %v696 = vld [vmem:[%s6 + $0x24] sm:$0xf]
      %v697 = vld [vmem:[%s6 + $0x28] sm:$0xf]
      %v698 = vld [vmem:[%s6 + $0x2c] sm:$0xf]
      %v699 = vld [vmem:[%s6 + $0x30] sm:$0xf]
      %v700 = vld [vmem:[%s6 + $0x34] sm:$0xf]
      %v701 = vld [vmem:[%s6 + $0x38] sm:$0xf]
      %v702 = vld [vmem:[%s6 + $0x3c] sm:$0xf]
      %v713 = vunpack.c.l.b16 %v677
      %v714 = vunpack.c.l.b16 %v678
      %v715 = vunpack.c.l.b16 %v679
      %v716 = vunpack.c.l.b16 %v680
      %v717 = vunpack.c.l.b16 %v681
      %v718 = vunpack.c.l.b16 %v682
      %v719 = vunpack.c.l.b16 %v683
      %v720 = vunpack.c.l.b16 %v684
      %v721 = vunpack.c.l.b16 %v685
      %v722 = vunpack.c.l.b16 %v686
      %v723 = vpack.c.b16 %v714, %v713
      %v724 = vpack.c.b16 %v716, %v715
      %v725 = vpack.c.b16 %v718, %v717
      %v726 = vpack.c.b16 %v720, %v719
      %v727 = vpack.c.b16 %v722, %v721
      %v749 = vunpack.c.l.b16 %v687
      %v750 = vunpack.c.l.b16 %v688
      %v751 = vunpack.c.l.b16 %v689
      %v752 = vunpack.c.l.b16 %v690
      %v753 = vunpack.c.l.b16 %v691
      %v754 = vunpack.c.l.b16 %v692
      %v755 = vunpack.c.l.b16 %v693
      %v756 = vunpack.c.l.b16 %v694
      %v757 = vunpack.c.l.b16 %v695
      %v758 = vunpack.c.l.b16 %v696
      %v759 = vunpack.c.l.b16 %v697
      %v760 = vunpack.c.l.b16 %v698
      %v761 = vunpack.c.l.b16 %v699
      %v762 = vunpack.c.l.b16 %v700
      %v763 = vunpack.c.l.b16 %v701
      %v764 = vunpack.c.l.b16 %v702
      %v765 = vpack.c.b16 %v750, %v749
      %v766 = vpack.c.b16 %v752, %v751
      %v767 = vpack.c.b16 %v754, %v753
      %v768 = vpack.c.b16 %v756, %v755
      %v769 = vpack.c.b16 %v758, %v757
      %v770 = vpack.c.b16 %v760, %v759
      %v771 = vpack.c.b16 %v762, %v761
      %v772 = vpack.c.b16 %v764, %v763
      %781 = vmatprep.subr.bf16.mxu0 0
      %782 = vmatpush1.bf16.msra.mxu0 %v765
      %783 = vmatprep.subr.bf16.mxu0 0
      %784 = vmatpush1.bf16.msra.mxu0 %v766
      %785 = vmatprep.subr.bf16.mxu0 0
      %786 = vmatpush1.bf16.msra.mxu0 %v767
      %787 = vmatprep.subr.bf16.mxu0 0
      %788 = vmatpush1.bf16.msra.mxu0 %v768
      %789 = vmatprep.subr.bf16.mxu0 0
      %790 = vmatpush1.bf16.msra.mxu0 %v769
      %791 = vmatprep.subr.bf16.mxu0 0
      %792 = vmatpush1.bf16.msra.mxu0 %v770
      %793 = vmatprep.subr.bf16.mxu0 0
      %794 = vmatpush1.bf16.msra.mxu0 %v771
      %795 = vmatprep.subr.bf16.mxu0 0
      %796 = vmatpush1.bf16.msra.mxu0 %v772
      %797 = vmatprep.subr.bf16.mxu0 0
      %798 = vmatpush1.bf16.msra.mxu0 0
      %799 = vmatprep.subr.bf16.mxu0 0
      %800 = vmatpush1.bf16.msra.mxu0 0
      %801 = vmatprep.subr.bf16.mxu0 0
      %802 = vmatpush1.bf16.msra.mxu0 0
      %803 = vmatprep.subr.bf16.mxu0 0
      %804 = vmatpush1.bf16.msra.mxu0 0
      %805 = vmatprep.subr.bf16.mxu0 0
      %806 = vmatpush1.bf16.msra.mxu0 0
      %807 = vmatprep.subr.bf16.mxu0 0
      %808 = vmatpush1.bf16.msra.mxu0 0
      %809 = vmatprep.subr.bf16.mxu0 0
      %810 = vmatpush1.bf16.msra.mxu0 0
      %811 = vmatprep.subr.bf16.mxu0 0
      %812 = vmatpush1.bf16.msra.mxu0 0
      %813 = vmatprep.mubr.bf16.mxu0 0
      %814 = vmatmul.mubr.bf16.gmra.mrb[0].mxu0 %v723
      %v815 = vpop.f32.mrb[0].mxu0
      %v816 = vadd.f32 0.0, %v815
      %v817 = vpop.f32.mrb[0].mxu0
      %v818 = vpop.f32.mrb[0].mxu0
      %v819 = vadd.f32 0.0, %v818
      %v820 = vpop.f32.mrb[0].mxu0
      %821 = vmatprep.mubr.bf16.mxu0 0
      %822 = vmatmul.mubr.bf16.gmra.mrb[0].mxu0 %v724
      %v823 = vpop.f32.mrb[0].mxu0
      %v824 = vadd.f32 0.0, %v823
      %v825 = vpop.f32.mrb[0].mxu0
      %v826 = vpop.f32.mrb[0].mxu0
      %v827 = vadd.f32 0.0, %v826
      %v828 = vpop.f32.mrb[0].mxu0
      %829 = vmatprep.mubr.bf16.mxu0 0
      %830 = vmatmul.mubr.bf16.gmra.mrb[0].mxu0 %v725
      %v831 = vpop.f32.mrb[0].mxu0
      %v832 = vadd.f32 0.0, %v831
      %v833 = vpop.f32.mrb[0].mxu0
      %v834 = vpop.f32.mrb[0].mxu0
      %v835 = vadd.f32 0.0, %v834
      %v836 = vpop.f32.mrb[0].mxu0
      %837 = vmatprep.mubr.bf16.mxu0 0
      %838 = vmatmul.mubr.bf16.gmra.mrb[0].mxu0 %v726
      %v839 = vpop.f32.mrb[0].mxu0
      %v840 = vadd.f32 0.0, %v839
      %v841 = vpop.f32.mrb[0].mxu0
      %v842 = vpop.f32.mrb[0].mxu0
      %v843 = vadd.f32 0.0, %v842
      %v844 = vpop.f32.mrb[0].mxu0
      %845 = vmatprep.mubr.bf16.mxu0 0
      %846 = vmatmul.mubr.bf16.gmra.mrb[0].mxu0 %v727
      %v847 = vpop.f32.mrb[0].mxu0
      %v848 = vadd.f32 0.0, %v847
      %v849 = vpop.f32.mrb[0].mxu0
      %v850 = vpop.f32.mrb[0].mxu0
      %v851 = vadd.f32 0.0, %v850
      %v852 = vpop.f32.mrb[0].mxu0
      %853 = vdwg.mxu0
      %v854 = vstv %s676
      %v855 = vmul.f32 %v816, %v854
      %v856 = vmul.f32 %v851, %v854
      %v867 = vcombine.high %v855, %v855
      %v869 = vunpack.c.l.s4 1966171168
      %v870 = vunpack.c.0.s8 %v869
      %v871 = vlaneseq
      %v872 = vshrl.u32 %v871, 7
      %v873 = vsub.s32 %v870, %v872
      %v874 = vrot.slane %v855, %v873
      %v876 = vunpack.c.l.s4 1966171168
      %v877 = vunpack.c.0.s8 %v876
      %v878 = vlaneseq
      %v879 = vshrl.u32 %v878, 7
      %v880 = vsub.s32 %v877, %v879
      %v881 = vrot.slane %v867, %v880
      %v882 = vcombine.high %v874, %v874
      %v883 = vcombine.high %v881, %v881
      %v885 = vunpack.c.l.s4 1966171168
      %v886 = vunpack.c.0.s8 %v885
      %v887 = vlaneseq
      %v888 = vshrl.u32 %v887, 7
      %v889 = vsub.s32 %v886, %v888
      %v890 = vrot.slane %v874, %v889
      %v892 = vunpack.c.l.s4 1966171168
      %v893 = vunpack.c.0.s8 %v892
      %v894 = vlaneseq
      %v895 = vshrl.u32 %v894, 7
      %v896 = vsub.s32 %v893, %v895
      %v897 = vrot.slane %v881, %v896
      %v899 = vunpack.c.l.s4 1966171168
      %v900 = vunpack.c.0.s8 %v899
      %v901 = vlaneseq
      %v902 = vshrl.u32 %v901, 7
      %v903 = vsub.s32 %v900, %v902
      %v904 = vrot.slane %v882, %v903
      %v906 = vunpack.c.l.s4 1966171168
      %v907 = vunpack.c.0.s8 %v906
      %v908 = vlaneseq
      %v909 = vshrl.u32 %v908, 7
      %v910 = vsub.s32 %v907, %v909
      %v911 = vrot.slane %v883, %v910
      %v912 = vcombine.high %v890, %v890
      %v913 = vcombine.high %v897, %v897
      %v914 = vcombine.high %v904, %v904
      %v915 = vcombine.high %v911, %v911
      %v916 = vcombine.high %v819, %v819
      %v918 = vunpack.c.l.s4 1966171168
      %v919 = vunpack.c.0.s8 %v918
      %v920 = vlaneseq
      %v921 = vshrl.u32 %v920, 7
      %v922 = vsub.s32 %v919, %v921
      %v923 = vrot.slane %v819, %v922
      %v925 = vunpack.c.l.s4 1966171168
      %v926 = vunpack.c.0.s8 %v925
      %v927 = vlaneseq
      %v928 = vshrl.u32 %v927, 7
      %v929 = vsub.s32 %v926, %v928
      %v930 = vrot.slane %v916, %v929
      %v931 = vcombine.high %v923, %v923
      %v932 = vcombine.high %v930, %v930
      %v934 = vunpack.c.l.s4 1966171168
      %v935 = vunpack.c.0.s8 %v934
      %v936 = vlaneseq
      %v937 = vshrl.u32 %v936, 7
      %v938 = vsub.s32 %v935, %v937
      %v939 = vrot.slane %v923, %v938
      %v941 = vunpack.c.l.s4 1966171168
      %v942 = vunpack.c.0.s8 %v941
      %v943 = vlaneseq
      %v944 = vshrl.u32 %v943, 7
      %v945 = vsub.s32 %v942, %v944
      %v946 = vrot.slane %v930, %v945
      %v948 = vunpack.c.l.s4 1966171168
      %v949 = vunpack.c.0.s8 %v948
      %v950 = vlaneseq
      %v951 = vshrl.u32 %v950, 7
      %v952 = vsub.s32 %v949, %v951
      %v953 = vrot.slane %v931, %v952
      %v955 = vunpack.c.l.s4 1966171168
      %v956 = vunpack.c.0.s8 %v955
      %v957 = vlaneseq
      %v958 = vshrl.u32 %v957, 7
      %v959 = vsub.s32 %v956, %v958
      %v960 = vrot.slane %v932, %v959
      %v961 = vcombine.high %v939, %v939
      %v962 = vcombine.high %v946, %v946
      %v963 = vcombine.high %v953, %v953
      %v964 = vcombine.high %v960, %v960
      %v965 = vcombine.high %v824, %v824
      %v967 = vunpack.c.l.s4 1966171168
      %v968 = vunpack.c.0.s8 %v967
      %v969 = vlaneseq
      %v970 = vshrl.u32 %v969, 7
      %v971 = vsub.s32 %v968, %v970
      %v972 = vrot.slane %v824, %v971
      %v974 = vunpack.c.l.s4 1966171168
      %v975 = vunpack.c.0.s8 %v974
      %v976 = vlaneseq
      %v977 = vshrl.u32 %v976, 7
      %v978 = vsub.s32 %v975, %v977
      %v979 = vrot.slane %v965, %v978
      %v980 = vcombine.high %v972, %v972
      %v981 = vcombine.high %v979, %v979
      %v983 = vunpack.c.l.s4 1966171168
      %v984 = vunpack.c.0.s8 %v983
      %v985 = vlaneseq
      %v986 = vshrl.u32 %v985, 7
      %v987 = vsub.s32 %v984, %v986
      %v988 = vrot.slane %v972, %v987
      %v990 = vunpack.c.l.s4 1966171168
      %v991 = vunpack.c.0.s8 %v990
      %v992 = vlaneseq
      %v993 = vshrl.u32 %v992, 7
      %v994 = vsub.s32 %v991, %v993
      %v995 = vrot.slane %v979, %v994
      %v997 = vunpack.c.l.s4 1966171168
      %v998 = vunpack.c.0.s8 %v997
      %v999 = vlaneseq
      %v1000 = vshrl.u32 %v999, 7
      %v1001 = vsub.s32 %v998, %v1000
      %v1002 = vrot.slane %v980, %v1001
      %v1004 = vunpack.c.l.s4 1966171168
      %v1005 = vunpack.c.0.s8 %v1004
      %v1006 = vlaneseq
      %v1007 = vshrl.u32 %v1006, 7
      %v1008 = vsub.s32 %v1005, %v1007
      %v1009 = vrot.slane %v981, %v1008
      %v1010 = vcombine.high %v988, %v988
      %v1011 = vcombine.high %v995, %v995
      %v1012 = vcombine.high %v1002, %v1002
      %v1013 = vcombine.high %v1009, %v1009
      %v1014 = vcombine.high %v827, %v827
      %v1016 = vunpack.c.l.s4 1966171168
      %v1017 = vunpack.c.0.s8 %v1016
      %v1018 = vlaneseq
      %v1019 = vshrl.u32 %v1018, 7
      %v1020 = vsub.s32 %v1017, %v1019
      %v1021 = vrot.slane %v827, %v1020
      %v1023 = vunpack.c.l.s4 1966171168
      %v1024 = vunpack.c.0.s8 %v1023
      %v1025 = vlaneseq
      %v1026 = vshrl.u32 %v1025, 7
      %v1027 = vsub.s32 %v1024, %v1026
      %v1028 = vrot.slane %v1014, %v1027
      %v1029 = vcombine.high %v1021, %v1021
      %v1030 = vcombine.high %v1028, %v1028
      %v1032 = vunpack.c.l.s4 1966171168
      %v1033 = vunpack.c.0.s8 %v1032
      %v1034 = vlaneseq
      %v1035 = vshrl.u32 %v1034, 7
      %v1036 = vsub.s32 %v1033, %v1035
      %v1037 = vrot.slane %v1021, %v1036
      %v1039 = vunpack.c.l.s4 1966171168
      %v1040 = vunpack.c.0.s8 %v1039
      %v1041 = vlaneseq
      %v1042 = vshrl.u32 %v1041, 7
      %v1043 = vsub.s32 %v1040, %v1042
      %v1044 = vrot.slane %v1028, %v1043
      %v1046 = vunpack.c.l.s4 1966171168
      %v1047 = vunpack.c.0.s8 %v1046
      %v1048 = vlaneseq
      %v1049 = vshrl.u32 %v1048, 7
      %v1050 = vsub.s32 %v1047, %v1049
      %v1051 = vrot.slane %v1029, %v1050
      %v1053 = vunpack.c.l.s4 1966171168
      %v1054 = vunpack.c.0.s8 %v1053
      %v1055 = vlaneseq
      %v1056 = vshrl.u32 %v1055, 7
      %v1057 = vsub.s32 %v1054, %v1056
      %v1058 = vrot.slane %v1030, %v1057
      %v1059 = vcombine.high %v1037, %v1037
      %v1060 = vcombine.high %v1044, %v1044
      %v1061 = vcombine.high %v1051, %v1051
      %v1062 = vcombine.high %v1058, %v1058
      %v1063 = vcombine.high %v832, %v832
      %v1065 = vunpack.c.l.s4 1966171168
      %v1066 = vunpack.c.0.s8 %v1065
      %v1067 = vlaneseq
      %v1068 = vshrl.u32 %v1067, 7
      %v1069 = vsub.s32 %v1066, %v1068
      %v1070 = vrot.slane %v832, %v1069
      %v1072 = vunpack.c.l.s4 1966171168
      %v1073 = vunpack.c.0.s8 %v1072
      %v1074 = vlaneseq
      %v1075 = vshrl.u32 %v1074, 7
      %v1076 = vsub.s32 %v1073, %v1075
      %v1077 = vrot.slane %v1063, %v1076
      %v1078 = vcombine.high %v1070, %v1070
      %v1079 = vcombine.high %v1077, %v1077
      %v1081 = vunpack.c.l.s4 1966171168
      %v1082 = vunpack.c.0.s8 %v1081
      %v1083 = vlaneseq
      %v1084 = vshrl.u32 %v1083, 7
      %v1085 = vsub.s32 %v1082, %v1084
      %v1086 = vrot.slane %v1070, %v1085
      %v1088 = vunpack.c.l.s4 1966171168
      %v1089 = vunpack.c.0.s8 %v1088
      %v1090 = vlaneseq
      %v1091 = vshrl.u32 %v1090, 7
      %v1092 = vsub.s32 %v1089, %v1091
      %v1093 = vrot.slane %v1077, %v1092
      %v1095 = vunpack.c.l.s4 1966171168
      %v1096 = vunpack.c.0.s8 %v1095
      %v1097 = vlaneseq
      %v1098 = vshrl.u32 %v1097, 7
      %v1099 = vsub.s32 %v1096, %v1098
      %v1100 = vrot.slane %v1078, %v1099
      %v1102 = vunpack.c.l.s4 1966171168
      %v1103 = vunpack.c.0.s8 %v1102
      %v1104 = vlaneseq
      %v1105 = vshrl.u32 %v1104, 7
      %v1106 = vsub.s32 %v1103, %v1105
      %v1107 = vrot.slane %v1079, %v1106
      %v1108 = vcombine.high %v1086, %v1086
      %v1109 = vcombine.high %v1093, %v1093
      %v1110 = vcombine.high %v1100, %v1100
      %v1111 = vcombine.high %v1107, %v1107
      %v1112 = vcombine.high %v835, %v835
      %v1114 = vunpack.c.l.s4 1966171168
      %v1115 = vunpack.c.0.s8 %v1114
      %v1116 = vlaneseq
      %v1117 = vshrl.u32 %v1116, 7
      %v1118 = vsub.s32 %v1115, %v1117
      %v1119 = vrot.slane %v835, %v1118
      %v1121 = vunpack.c.l.s4 1966171168
      %v1122 = vunpack.c.0.s8 %v1121
      %v1123 = vlaneseq
      %v1124 = vshrl.u32 %v1123, 7
      %v1125 = vsub.s32 %v1122, %v1124
      %v1126 = vrot.slane %v1112, %v1125
      %v1127 = vcombine.high %v1119, %v1119
      %v1128 = vcombine.high %v1126, %v1126
      %v1130 = vunpack.c.l.s4 1966171168
      %v1131 = vunpack.c.0.s8 %v1130
      %v1132 = vlaneseq
      %v1133 = vshrl.u32 %v1132, 7
      %v1134 = vsub.s32 %v1131, %v1133
      %v1135 = vrot.slane %v1119, %v1134
      %v1137 = vunpack.c.l.s4 1966171168
      %v1138 = vunpack.c.0.s8 %v1137
      %v1139 = vlaneseq
      %v1140 = vshrl.u32 %v1139, 7
      %v1141 = vsub.s32 %v1138, %v1140
      %v1142 = vrot.slane %v1126, %v1141
      %v1144 = vunpack.c.l.s4 1966171168
      %v1145 = vunpack.c.0.s8 %v1144
      %v1146 = vlaneseq
      %v1147 = vshrl.u32 %v1146, 7
      %v1148 = vsub.s32 %v1145, %v1147
      %v1149 = vrot.slane %v1127, %v1148
      %v1151 = vunpack.c.l.s4 1966171168
      %v1152 = vunpack.c.0.s8 %v1151
      %v1153 = vlaneseq
      %v1154 = vshrl.u32 %v1153, 7
      %v1155 = vsub.s32 %v1152, %v1154
      %v1156 = vrot.slane %v1128, %v1155
      %v1157 = vcombine.high %v1135, %v1135
      %v1158 = vcombine.high %v1142, %v1142
      %v1159 = vcombine.high %v1149, %v1149
      %v1160 = vcombine.high %v1156, %v1156
      %v1161 = vcombine.high %v840, %v840
      %v1163 = vunpack.c.l.s4 1966171168
      %v1164 = vunpack.c.0.s8 %v1163
      %v1165 = vlaneseq
      %v1166 = vshrl.u32 %v1165, 7
      %v1167 = vsub.s32 %v1164, %v1166
      %v1168 = vrot.slane %v840, %v1167
      %v1170 = vunpack.c.l.s4 1966171168
      %v1171 = vunpack.c.0.s8 %v1170
      %v1172 = vlaneseq
      %v1173 = vshrl.u32 %v1172, 7
      %v1174 = vsub.s32 %v1171, %v1173
      %v1175 = vrot.slane %v1161, %v1174
      %v1176 = vcombine.high %v1168, %v1168
      %v1177 = vcombine.high %v1175, %v1175
      %v1179 = vunpack.c.l.s4 1966171168
      %v1180 = vunpack.c.0.s8 %v1179
      %v1181 = vlaneseq
      %v1182 = vshrl.u32 %v1181, 7
      %v1183 = vsub.s32 %v1180, %v1182
      %v1184 = vrot.slane %v1168, %v1183
      %v1186 = vunpack.c.l.s4 1966171168
      %v1187 = vunpack.c.0.s8 %v1186
      %v1188 = vlaneseq
      %v1189 = vshrl.u32 %v1188, 7
      %v1190 = vsub.s32 %v1187, %v1189
      %v1191 = vrot.slane %v1175, %v1190
      %v1193 = vunpack.c.l.s4 1966171168
      %v1194 = vunpack.c.0.s8 %v1193
      %v1195 = vlaneseq
      %v1196 = vshrl.u32 %v1195, 7
      %v1197 = vsub.s32 %v1194, %v1196
      %v1198 = vrot.slane %v1176, %v1197
      %v1200 = vunpack.c.l.s4 1966171168
      %v1201 = vunpack.c.0.s8 %v1200
      %v1202 = vlaneseq
      %v1203 = vshrl.u32 %v1202, 7
      %v1204 = vsub.s32 %v1201, %v1203
      %v1205 = vrot.slane %v1177, %v1204
      %v1206 = vcombine.high %v1184, %v1184
      %v1207 = vcombine.high %v1191, %v1191
      %v1208 = vcombine.high %v1198, %v1198
      %v1209 = vcombine.high %v1205, %v1205
      %v1210 = vcombine.high %v843, %v843
      %v1212 = vunpack.c.l.s4 1966171168
      %v1213 = vunpack.c.0.s8 %v1212
      %v1214 = vlaneseq
      %v1215 = vshrl.u32 %v1214, 7
      %v1216 = vsub.s32 %v1213, %v1215
      %v1217 = vrot.slane %v843, %v1216
      %v1219 = vunpack.c.l.s4 1966171168
      %v1220 = vunpack.c.0.s8 %v1219
      %v1221 = vlaneseq
      %v1222 = vshrl.u32 %v1221, 7
      %v1223 = vsub.s32 %v1220, %v1222
      %v1224 = vrot.slane %v1210, %v1223
      %v1225 = vcombine.high %v1217, %v1217
      %v1226 = vcombine.high %v1224, %v1224
      %v1228 = vunpack.c.l.s4 1966171168
      %v1229 = vunpack.c.0.s8 %v1228
      %v1230 = vlaneseq
      %v1231 = vshrl.u32 %v1230, 7
      %v1232 = vsub.s32 %v1229, %v1231
      %v1233 = vrot.slane %v1217, %v1232
      %v1235 = vunpack.c.l.s4 1966171168
      %v1236 = vunpack.c.0.s8 %v1235
      %v1237 = vlaneseq
      %v1238 = vshrl.u32 %v1237, 7
      %v1239 = vsub.s32 %v1236, %v1238
      %v1240 = vrot.slane %v1224, %v1239
      %v1242 = vunpack.c.l.s4 1966171168
      %v1243 = vunpack.c.0.s8 %v1242
      %v1244 = vlaneseq
      %v1245 = vshrl.u32 %v1244, 7
      %v1246 = vsub.s32 %v1243, %v1245
      %v1247 = vrot.slane %v1225, %v1246
      %v1249 = vunpack.c.l.s4 1966171168
      %v1250 = vunpack.c.0.s8 %v1249
      %v1251 = vlaneseq
      %v1252 = vshrl.u32 %v1251, 7
      %v1253 = vsub.s32 %v1250, %v1252
      %v1254 = vrot.slane %v1226, %v1253
      %v1255 = vcombine.high %v1233, %v1233
      %v1256 = vcombine.high %v1240, %v1240
      %v1257 = vcombine.high %v1247, %v1247
      %v1258 = vcombine.high %v1254, %v1254
      %v1259 = vcombine.high %v848, %v848
      %v1261 = vunpack.c.l.s4 1966171168
      %v1262 = vunpack.c.0.s8 %v1261
      %v1263 = vlaneseq
      %v1264 = vshrl.u32 %v1263, 7
      %v1265 = vsub.s32 %v1262, %v1264
      %v1266 = vrot.slane %v848, %v1265
      %v1268 = vunpack.c.l.s4 1966171168
      %v1269 = vunpack.c.0.s8 %v1268
      %v1270 = vlaneseq
      %v1271 = vshrl.u32 %v1270, 7
      %v1272 = vsub.s32 %v1269, %v1271
      %v1273 = vrot.slane %v1259, %v1272
      %v1274 = vcombine.high %v1266, %v1266
      %v1275 = vcombine.high %v1273, %v1273
      %v1277 = vunpack.c.l.s4 1966171168
      %v1278 = vunpack.c.0.s8 %v1277
      %v1279 = vlaneseq
      %v1280 = vshrl.u32 %v1279, 7
      %v1281 = vsub.s32 %v1278, %v1280
      %v1282 = vrot.slane %v1266, %v1281
      %v1284 = vunpack.c.l.s4 1966171168
      %v1285 = vunpack.c.0.s8 %v1284
      %v1286 = vlaneseq
      %v1287 = vshrl.u32 %v1286, 7
      %v1288 = vsub.s32 %v1285, %v1287
      %v1289 = vrot.slane %v1273, %v1288
      %v1291 = vunpack.c.l.s4 1966171168
      %v1292 = vunpack.c.0.s8 %v1291
      %v1293 = vlaneseq
      %v1294 = vshrl.u32 %v1293, 7
      %v1295 = vsub.s32 %v1292, %v1294
      %v1296 = vrot.slane %v1274, %v1295
      %v1298 = vunpack.c.l.s4 1966171168
      %v1299 = vunpack.c.0.s8 %v1298
      %v1300 = vlaneseq
      %v1301 = vshrl.u32 %v1300, 7
      %v1302 = vsub.s32 %v1299, %v1301
      %v1303 = vrot.slane %v1275, %v1302
      %v1304 = vcombine.high %v1282, %v1282
      %v1305 = vcombine.high %v1289, %v1289
      %v1306 = vcombine.high %v1296, %v1296
      %v1307 = vcombine.high %v1303, %v1303
      %v1308 = vcombine.high %v856, %v856
      %v1310 = vunpack.c.l.s4 1966171168
      %v1311 = vunpack.c.0.s8 %v1310
      %v1312 = vlaneseq
      %v1313 = vshrl.u32 %v1312, 7
      %v1314 = vsub.s32 %v1311, %v1313
      %v1315 = vrot.slane %v856, %v1314
      %v1317 = vunpack.c.l.s4 1966171168
      %v1318 = vunpack.c.0.s8 %v1317
      %v1319 = vlaneseq
      %v1320 = vshrl.u32 %v1319, 7
      %v1321 = vsub.s32 %v1318, %v1320
      %v1322 = vrot.slane %v1308, %v1321
      %v1323 = vcombine.high %v1315, %v1315
      %v1324 = vcombine.high %v1322, %v1322
      %v1326 = vunpack.c.l.s4 1966171168
      %v1327 = vunpack.c.0.s8 %v1326
      %v1328 = vlaneseq
      %v1329 = vshrl.u32 %v1328, 7
      %v1330 = vsub.s32 %v1327, %v1329
      %v1331 = vrot.slane %v1315, %v1330
      %v1333 = vunpack.c.l.s4 1966171168
      %v1334 = vunpack.c.0.s8 %v1333
      %v1335 = vlaneseq
      %v1336 = vshrl.u32 %v1335, 7
      %v1337 = vsub.s32 %v1334, %v1336
      %v1338 = vrot.slane %v1322, %v1337
      %v1340 = vunpack.c.l.s4 1966171168
      %v1341 = vunpack.c.0.s8 %v1340
      %v1342 = vlaneseq
      %v1343 = vshrl.u32 %v1342, 7
      %v1344 = vsub.s32 %v1341, %v1343
      %v1345 = vrot.slane %v1323, %v1344
      %v1347 = vunpack.c.l.s4 1966171168
      %v1348 = vunpack.c.0.s8 %v1347
      %v1349 = vlaneseq
      %v1350 = vshrl.u32 %v1349, 7
      %v1351 = vsub.s32 %v1348, %v1350
      %v1352 = vrot.slane %v1324, %v1351
      %v1353 = vcombine.high %v1331, %v1331
      %v1354 = vcombine.high %v1338, %v1338
      %v1355 = vcombine.high %v1345, %v1345
      %v1356 = vcombine.high %v1352, %v1352
      %v1357 = vlaneseq
      %v1358 = vshrl.u32 %v1357, 7
      %v1359 = vsub.s32 0, %v1358
      %v1360 = vrot.slane %v890, %v1359
      %v1361 = vlaneseq
      %v1362 = vshrl.u32 %v1361, 7
      %v1363 = vsub.s32 0, %v1362
      %v1364 = vrot.slane %v904, %v1363
      %v1365 = vlaneseq
      %v1366 = vshrl.u32 %v1365, 7
      %v1367 = vsub.s32 0, %v1366
      %v1368 = vrot.slane %v912, %v1367
      %v1369 = vlaneseq
      %v1370 = vshrl.u32 %v1369, 7
      %v1371 = vsub.s32 0, %v1370
      %v1372 = vrot.slane %v914, %v1371
      %v1373 = vlaneseq
      %v1374 = vshrl.u32 %v1373, 7
      %v1375 = vsub.s32 0, %v1374
      %v1376 = vrot.slane %v897, %v1375
      %v1377 = vlaneseq
      %v1378 = vshrl.u32 %v1377, 7
      %v1379 = vsub.s32 0, %v1378
      %v1380 = vrot.slane %v911, %v1379
      %v1381 = vlaneseq
      %v1382 = vshrl.u32 %v1381, 7
      %v1383 = vsub.s32 0, %v1382
      %v1384 = vrot.slane %v913, %v1383
      %v1385 = vlaneseq
      %v1386 = vshrl.u32 %v1385, 7
      %v1387 = vsub.s32 0, %v1386
      %v1388 = vrot.slane %v915, %v1387
      %v1389 = vlaneseq
      %v1390 = vshrl.u32 %v1389, 7
      %v1391 = vsub.s32 0, %v1390
      %v1392 = vrot.slane %v939, %v1391
      %v1393 = vlaneseq
      %v1394 = vshrl.u32 %v1393, 7
      %v1395 = vsub.s32 0, %v1394
      %v1396 = vrot.slane %v953, %v1395
      %v1397 = vlaneseq
      %v1398 = vshrl.u32 %v1397, 7
      %v1399 = vsub.s32 0, %v1398
      %v1400 = vrot.slane %v961, %v1399
      %v1401 = vlaneseq
      %v1402 = vshrl.u32 %v1401, 7
      %v1403 = vsub.s32 0, %v1402
      %v1404 = vrot.slane %v963, %v1403
      %v1405 = vlaneseq
      %v1406 = vshrl.u32 %v1405, 7
      %v1407 = vsub.s32 0, %v1406
      %v1408 = vrot.slane %v946, %v1407
      %v1409 = vlaneseq
      %v1410 = vshrl.u32 %v1409, 7
      %v1411 = vsub.s32 0, %v1410
      %v1412 = vrot.slane %v960, %v1411
      %v1413 = vlaneseq
      %v1414 = vshrl.u32 %v1413, 7
      %v1415 = vsub.s32 0, %v1414
      %v1416 = vrot.slane %v962, %v1415
      %v1417 = vlaneseq
      %v1418 = vshrl.u32 %v1417, 7
      %v1419 = vsub.s32 0, %v1418
      %v1420 = vrot.slane %v964, %v1419
      %v1421 = vlaneseq
      %v1422 = vshrl.u32 %v1421, 7
      %v1423 = vsub.s32 0, %v1422
      %v1424 = vrot.slane %v988, %v1423
      %v1425 = vlaneseq
      %v1426 = vshrl.u32 %v1425, 7
      %v1427 = vsub.s32 0, %v1426
      %v1428 = vrot.slane %v1002, %v1427
      %v1429 = vlaneseq
      %v1430 = vshrl.u32 %v1429, 7
      %v1431 = vsub.s32 0, %v1430
      %v1432 = vrot.slane %v1010, %v1431
      %v1433 = vlaneseq
      %v1434 = vshrl.u32 %v1433, 7
      %v1435 = vsub.s32 0, %v1434
      %v1436 = vrot.slane %v1012, %v1435
      %v1437 = vlaneseq
      %v1438 = vshrl.u32 %v1437, 7
      %v1439 = vsub.s32 0, %v1438
      %v1440 = vrot.slane %v995, %v1439
      %v1441 = vlaneseq
      %v1442 = vshrl.u32 %v1441, 7
      %v1443 = vsub.s32 0, %v1442
      %v1444 = vrot.slane %v1009, %v1443
      %v1445 = vlaneseq
      %v1446 = vshrl.u32 %v1445, 7
      %v1447 = vsub.s32 0, %v1446
      %v1448 = vrot.slane %v1011, %v1447
      %v1449 = vlaneseq
      %v1450 = vshrl.u32 %v1449, 7
      %v1451 = vsub.s32 0, %v1450
      %v1452 = vrot.slane %v1013, %v1451
      %v1453 = vlaneseq
      %v1454 = vshrl.u32 %v1453, 7
      %v1455 = vsub.s32 0, %v1454
      %v1456 = vrot.slane %v1037, %v1455
      %v1457 = vlaneseq
      %v1458 = vshrl.u32 %v1457, 7
      %v1459 = vsub.s32 0, %v1458
      %v1460 = vrot.slane %v1051, %v1459
      %v1461 = vlaneseq
      %v1462 = vshrl.u32 %v1461, 7
      %v1463 = vsub.s32 0, %v1462
      %v1464 = vrot.slane %v1059, %v1463
      %v1465 = vlaneseq
      %v1466 = vshrl.u32 %v1465, 7
      %v1467 = vsub.s32 0, %v1466
      %v1468 = vrot.slane %v1061, %v1467
      %v1469 = vlaneseq
      %v1470 = vshrl.u32 %v1469, 7
      %v1471 = vsub.s32 0, %v1470
      %v1472 = vrot.slane %v1044, %v1471
      %v1473 = vlaneseq
      %v1474 = vshrl.u32 %v1473, 7
      %v1475 = vsub.s32 0, %v1474
      %v1476 = vrot.slane %v1058, %v1475
      %v1477 = vlaneseq
      %v1478 = vshrl.u32 %v1477, 7
      %v1479 = vsub.s32 0, %v1478
      %v1480 = vrot.slane %v1060, %v1479
      %v1481 = vlaneseq
      %v1482 = vshrl.u32 %v1481, 7
      %v1483 = vsub.s32 0, %v1482
      %v1484 = vrot.slane %v1062, %v1483
      %v1485 = vlaneseq
      %v1486 = vshrl.u32 %v1485, 7
      %v1487 = vsub.s32 0, %v1486
      %v1488 = vrot.slane %v1086, %v1487
      %v1489 = vlaneseq
      %v1490 = vshrl.u32 %v1489, 7
      %v1491 = vsub.s32 0, %v1490
      %v1492 = vrot.slane %v1100, %v1491
      %v1493 = vlaneseq
      %v1494 = vshrl.u32 %v1493, 7
      %v1495 = vsub.s32 0, %v1494
      %v1496 = vrot.slane %v1108, %v1495
      %v1497 = vlaneseq
      %v1498 = vshrl.u32 %v1497, 7
      %v1499 = vsub.s32 0, %v1498
      %v1500 = vrot.slane %v1110, %v1499
      %v1501 = vlaneseq
      %v1502 = vshrl.u32 %v1501, 7
      %v1503 = vsub.s32 0, %v1502
      %v1504 = vrot.slane %v1093, %v1503
      %v1505 = vlaneseq
      %v1506 = vshrl.u32 %v1505, 7
      %v1507 = vsub.s32 0, %v1506
      %v1508 = vrot.slane %v1107, %v1507
      %v1509 = vlaneseq
      %v1510 = vshrl.u32 %v1509, 7
      %v1511 = vsub.s32 0, %v1510
      %v1512 = vrot.slane %v1109, %v1511
      %v1513 = vlaneseq
      %v1514 = vshrl.u32 %v1513, 7
      %v1515 = vsub.s32 0, %v1514
      %v1516 = vrot.slane %v1111, %v1515
      %v1517 = vlaneseq
      %v1518 = vshrl.u32 %v1517, 7
      %v1519 = vsub.s32 0, %v1518
      %v1520 = vrot.slane %v1135, %v1519
      %v1521 = vlaneseq
      %v1522 = vshrl.u32 %v1521, 7
      %v1523 = vsub.s32 0, %v1522
      %v1524 = vrot.slane %v1149, %v1523
      %v1525 = vlaneseq
      %v1526 = vshrl.u32 %v1525, 7
      %v1527 = vsub.s32 0, %v1526
      %v1528 = vrot.slane %v1157, %v1527
      %v1529 = vlaneseq
      %v1530 = vshrl.u32 %v1529, 7
      %v1531 = vsub.s32 0, %v1530
      %v1532 = vrot.slane %v1159, %v1531
      %v1533 = vlaneseq
      %v1534 = vshrl.u32 %v1533, 7
      %v1535 = vsub.s32 0, %v1534
      %v1536 = vrot.slane %v1142, %v1535
      %v1537 = vlaneseq
      %v1538 = vshrl.u32 %v1537, 7
      %v1539 = vsub.s32 0, %v1538
      %v1540 = vrot.slane %v1156, %v1539
      %v1541 = vlaneseq
      %v1542 = vshrl.u32 %v1541, 7
      %v1543 = vsub.s32 0, %v1542
      %v1544 = vrot.slane %v1158, %v1543
      %v1545 = vlaneseq
      %v1546 = vshrl.u32 %v1545, 7
      %v1547 = vsub.s32 0, %v1546
      %v1548 = vrot.slane %v1160, %v1547
      %v1549 = vlaneseq
      %v1550 = vshrl.u32 %v1549, 7
      %v1551 = vsub.s32 0, %v1550
      %v1552 = vrot.slane %v1184, %v1551
      %v1553 = vlaneseq
      %v1554 = vshrl.u32 %v1553, 7
      %v1555 = vsub.s32 0, %v1554
      %v1556 = vrot.slane %v1198, %v1555
      %v1557 = vlaneseq
      %v1558 = vshrl.u32 %v1557, 7
      %v1559 = vsub.s32 0, %v1558
      %v1560 = vrot.slane %v1206, %v1559
      %v1561 = vlaneseq
      %v1562 = vshrl.u32 %v1561, 7
      %v1563 = vsub.s32 0, %v1562
      %v1564 = vrot.slane %v1208, %v1563
      %v1565 = vlaneseq
      %v1566 = vshrl.u32 %v1565, 7
      %v1567 = vsub.s32 0, %v1566
      %v1568 = vrot.slane %v1191, %v1567
      %v1569 = vlaneseq
      %v1570 = vshrl.u32 %v1569, 7
      %v1571 = vsub.s32 0, %v1570
      %v1572 = vrot.slane %v1205, %v1571
      %v1573 = vlaneseq
      %v1574 = vshrl.u32 %v1573, 7
      %v1575 = vsub.s32 0, %v1574
      %v1576 = vrot.slane %v1207, %v1575
      %v1577 = vlaneseq
      %v1578 = vshrl.u32 %v1577, 7
      %v1579 = vsub.s32 0, %v1578
      %v1580 = vrot.slane %v1209, %v1579
      %v1581 = vlaneseq
      %v1582 = vshrl.u32 %v1581, 7
      %v1583 = vsub.s32 0, %v1582
      %v1584 = vrot.slane %v1233, %v1583
      %v1585 = vlaneseq
      %v1586 = vshrl.u32 %v1585, 7
      %v1587 = vsub.s32 0, %v1586
      %v1588 = vrot.slane %v1247, %v1587
      %v1589 = vlaneseq
      %v1590 = vshrl.u32 %v1589, 7
      %v1591 = vsub.s32 0, %v1590
      %v1592 = vrot.slane %v1255, %v1591
      %v1593 = vlaneseq
      %v1594 = vshrl.u32 %v1593, 7
      %v1595 = vsub.s32 0, %v1594
      %v1596 = vrot.slane %v1257, %v1595
      %v1597 = vlaneseq
      %v1598 = vshrl.u32 %v1597, 7
      %v1599 = vsub.s32 0, %v1598
      %v1600 = vrot.slane %v1240, %v1599
      %v1601 = vlaneseq
      %v1602 = vshrl.u32 %v1601, 7
      %v1603 = vsub.s32 0, %v1602
      %v1604 = vrot.slane %v1254, %v1603
      %v1605 = vlaneseq
      %v1606 = vshrl.u32 %v1605, 7
      %v1607 = vsub.s32 0, %v1606
      %v1608 = vrot.slane %v1256, %v1607
      %v1609 = vlaneseq
      %v1610 = vshrl.u32 %v1609, 7
      %v1611 = vsub.s32 0, %v1610
      %v1612 = vrot.slane %v1258, %v1611
      %v1613 = vlaneseq
      %v1614 = vshrl.u32 %v1613, 7
      %v1615 = vsub.s32 0, %v1614
      %v1616 = vrot.slane %v1282, %v1615
      %v1617 = vlaneseq
      %v1618 = vshrl.u32 %v1617, 7
      %v1619 = vsub.s32 0, %v1618
      %v1620 = vrot.slane %v1296, %v1619
      %v1621 = vlaneseq
      %v1622 = vshrl.u32 %v1621, 7
      %v1623 = vsub.s32 0, %v1622
      %v1624 = vrot.slane %v1304, %v1623
      %v1625 = vlaneseq
      %v1626 = vshrl.u32 %v1625, 7
      %v1627 = vsub.s32 0, %v1626
      %v1628 = vrot.slane %v1306, %v1627
      %v1629 = vlaneseq
      %v1630 = vshrl.u32 %v1629, 7
      %v1631 = vsub.s32 0, %v1630
      %v1632 = vrot.slane %v1289, %v1631
      %v1633 = vlaneseq
      %v1634 = vshrl.u32 %v1633, 7
      %v1635 = vsub.s32 0, %v1634
      %v1636 = vrot.slane %v1303, %v1635
      %v1637 = vlaneseq
      %v1638 = vshrl.u32 %v1637, 7
      %v1639 = vsub.s32 0, %v1638
      %v1640 = vrot.slane %v1305, %v1639
      %v1641 = vlaneseq
      %v1642 = vshrl.u32 %v1641, 7
      %v1643 = vsub.s32 0, %v1642
      %v1644 = vrot.slane %v1307, %v1643
      %v1645 = vlaneseq
      %v1646 = vshrl.u32 %v1645, 7
      %v1647 = vsub.s32 0, %v1646
      %v1648 = vrot.slane %v1331, %v1647
      %v1649 = vlaneseq
      %v1650 = vshrl.u32 %v1649, 7
      %v1651 = vsub.s32 0, %v1650
      %v1652 = vrot.slane %v1345, %v1651
      %v1653 = vlaneseq
      %v1654 = vshrl.u32 %v1653, 7
      %v1655 = vsub.s32 0, %v1654
      %v1656 = vrot.slane %v1353, %v1655
      %v1657 = vlaneseq
      %v1658 = vshrl.u32 %v1657, 7
      %v1659 = vsub.s32 0, %v1658
      %v1660 = vrot.slane %v1355, %v1659
      %v1661 = vlaneseq
      %v1662 = vshrl.u32 %v1661, 7
      %v1663 = vsub.s32 0, %v1662
      %v1664 = vrot.slane %v1338, %v1663
      %v1665 = vlaneseq
      %v1666 = vshrl.u32 %v1665, 7
      %v1667 = vsub.s32 0, %v1666
      %v1668 = vrot.slane %v1352, %v1667
      %v1669 = vlaneseq
      %v1670 = vshrl.u32 %v1669, 7
      %v1671 = vsub.s32 0, %v1670
      %v1672 = vrot.slane %v1354, %v1671
      %v1673 = vlaneseq
      %v1674 = vshrl.u32 %v1673, 7
      %v1675 = vsub.s32 0, %v1674
      %v1676 = vrot.slane %v1356, %v1675
      %v1677 = vld [vmem:[%s634] sm:$0xff]
      %v1678 = vld [vmem:[%s634 + $0x8] sm:$0xff]
      %v1679 = vmul.f32 %v1677, %v854
      %v1680 = vmul.f32 %v1678, %v854
      %v1681 = vld [vmem:[%s620] sm:$0xff]
      %v1682 = vld [vmem:[%s620 + $0x8] sm:$0xff]
      %v1683 = vld [vmem:[%s620 + $0x10] sm:$0xff]
      %v1684 = vld [vmem:[%s620 + $0x18] sm:$0xff]
      %v1685 = vld [vmem:[%s620 + $0x20] sm:$0xff]
      %v1686 = vld [vmem:[%s620 + $0x28] sm:$0xff]
      %v1687 = vld [vmem:[%s620 + $0x30] sm:$0xff]
      %v1688 = vld [vmem:[%s620 + $0x38] sm:$0xff]
      %v1689 = vld [vmem:[%s620 + $0x40] sm:$0xff]
      %v1690 = vld [vmem:[%s620 + $0x48] sm:$0xff]
      %v1691 = vld [vmem:[%s620 + $0x50] sm:$0xff]
      %v1692 = vld [vmem:[%s620 + $0x58] sm:$0xff]
      %v1693 = vld [vmem:[%s620 + $0x60] sm:$0xff]
      %v1694 = vld [vmem:[%s620 + $0x68] sm:$0xff]
      %v1695 = vld [vmem:[%s620 + $0x70] sm:$0xff]
      %v1696 = vld [vmem:[%s620 + $0x78] sm:$0xff]
      %v1697 = vld [vmem:[%s620 + $0x80] sm:$0xff]
      %v1698 = vld [vmem:[%s620 + $0x88] sm:$0xff]
      %v1699 = vld [vmem:[%s620 + $0x90] sm:$0xff]
      %v1700 = vld [vmem:[%s620 + $0x98] sm:$0xff]
      %v1701 = vld [vmem:[%s620 + $0xa0] sm:$0xff]
      %v1702 = vld [vmem:[%s620 + $0xa8] sm:$0xff]
      %v1703 = vld [vmem:[%s620 + $0xb0] sm:$0xff]
      %v1704 = vld [vmem:[%s620 + $0xb8] sm:$0xff]
      %v1705 = vld [vmem:[%s620 + $0xc0] sm:$0xff]
      %v1706 = vld [vmem:[%s620 + $0xc8] sm:$0xff]
      %v1707 = vld [vmem:[%s620 + $0xd0] sm:$0xff]
      %v1708 = vld [vmem:[%s620 + $0xd8] sm:$0xff]
      %v1709 = vld [vmem:[%s620 + $0xe0] sm:$0xff]
      %v1710 = vld [vmem:[%s620 + $0xe8] sm:$0xff]
      %v1711 = vld [vmem:[%s620 + $0xf0] sm:$0xff]
      %v1712 = vld [vmem:[%s620 + $0xf8] sm:$0xff]
      %v1713 = vld [vmem:[%s651] sm:$0xff]
      %v1714 = vld [vmem:[%s651 + $0x8] sm:$0xff]
      %v1715 = vmul.f32 %v1713, %v854
      %v1716 = vmul.f32 %v1714, %v854
      %v1717 = vcombine.low %v1360, %v1364
      %v1718 = vcombine.low %v1368, %v1372
      %v1720 = vunpack.c.l.s4 1983009808
      %v1721 = vunpack.c.0.s8 %v1720
      %v1722 = vlaneseq
      %v1723 = vshrl.u32 %v1722, 7
      %v1724 = vsub.s32 %v1721, %v1723
      %v1725 = vrot.slane %v1717, %v1724
      %v1727 = vunpack.c.l.s4 1983009808
      %v1728 = vunpack.c.0.s8 %v1727
      %v1729 = vlaneseq
      %v1730 = vshrl.u32 %v1729, 7
      %v1731 = vsub.s32 %v1728, %v1730
      %v1732 = vrot.slane %v1718, %v1731
      %v1733 = vcombine.low %v1725, %v1732
      %v1734 = vcombine.low %v1376, %v1380
      %v1735 = vcombine.low %v1384, %v1388
      %v1737 = vunpack.c.l.s4 1983009808
      %v1738 = vunpack.c.0.s8 %v1737
      %v1739 = vlaneseq
      %v1740 = vshrl.u32 %v1739, 7
      %v1741 = vsub.s32 %v1738, %v1740
      %v1742 = vrot.slane %v1734, %v1741
      %v1744 = vunpack.c.l.s4 1983009808
      %v1745 = vunpack.c.0.s8 %v1744
      %v1746 = vlaneseq
      %v1747 = vshrl.u32 %v1746, 7
      %v1748 = vsub.s32 %v1745, %v1747
      %v1749 = vrot.slane %v1735, %v1748
      %v1750 = vcombine.low %v1742, %v1749
      %v1751 = vcombine.low %v1392, %v1396
      %v1752 = vcombine.low %v1400, %v1404
      %v1754 = vunpack.c.l.s4 1983009808
      %v1755 = vunpack.c.0.s8 %v1754
      %v1756 = vlaneseq
      %v1757 = vshrl.u32 %v1756, 7
      %v1758 = vsub.s32 %v1755, %v1757
      %v1759 = vrot.slane %v1751, %v1758
      %v1761 = vunpack.c.l.s4 1983009808
      %v1762 = vunpack.c.0.s8 %v1761
      %v1763 = vlaneseq
      %v1764 = vshrl.u32 %v1763, 7
      %v1765 = vsub.s32 %v1762, %v1764
      %v1766 = vrot.slane %v1752, %v1765
      %v1767 = vcombine.low %v1759, %v1766
      %v1768 = vcombine.low %v1408, %v1412
      %v1769 = vcombine.low %v1416, %v1420
      %v1771 = vunpack.c.l.s4 1983009808
      %v1772 = vunpack.c.0.s8 %v1771
      %v1773 = vlaneseq
      %v1774 = vshrl.u32 %v1773, 7
      %v1775 = vsub.s32 %v1772, %v1774
      %v1776 = vrot.slane %v1768, %v1775
      %v1778 = vunpack.c.l.s4 1983009808
      %v1779 = vunpack.c.0.s8 %v1778
      %v1780 = vlaneseq
      %v1781 = vshrl.u32 %v1780, 7
      %v1782 = vsub.s32 %v1779, %v1781
      %v1783 = vrot.slane %v1769, %v1782
      %v1784 = vcombine.low %v1776, %v1783
      %v1785 = vcombine.low %v1424, %v1428
      %v1786 = vcombine.low %v1432, %v1436
      %v1788 = vunpack.c.l.s4 1983009808
      %v1789 = vunpack.c.0.s8 %v1788
      %v1790 = vlaneseq
      %v1791 = vshrl.u32 %v1790, 7
      %v1792 = vsub.s32 %v1789, %v1791
      %v1793 = vrot.slane %v1785, %v1792
      %v1795 = vunpack.c.l.s4 1983009808
      %v1796 = vunpack.c.0.s8 %v1795
      %v1797 = vlaneseq
      %v1798 = vshrl.u32 %v1797, 7
      %v1799 = vsub.s32 %v1796, %v1798
      %v1800 = vrot.slane %v1786, %v1799
      %v1801 = vcombine.low %v1793, %v1800
      %v1802 = vcombine.low %v1440, %v1444
      %v1803 = vcombine.low %v1448, %v1452
      %v1805 = vunpack.c.l.s4 1983009808
      %v1806 = vunpack.c.0.s8 %v1805
      %v1807 = vlaneseq
      %v1808 = vshrl.u32 %v1807, 7
      %v1809 = vsub.s32 %v1806, %v1808
      %v1810 = vrot.slane %v1802, %v1809
      %v1812 = vunpack.c.l.s4 1983009808
      %v1813 = vunpack.c.0.s8 %v1812
      %v1814 = vlaneseq
      %v1815 = vshrl.u32 %v1814, 7
      %v1816 = vsub.s32 %v1813, %v1815
      %v1817 = vrot.slane %v1803, %v1816
      %v1818 = vcombine.low %v1810, %v1817
      %v1819 = vcombine.low %v1456, %v1460
      %v1820 = vcombine.low %v1464, %v1468
      %v1822 = vunpack.c.l.s4 1983009808
      %v1823 = vunpack.c.0.s8 %v1822
      %v1824 = vlaneseq
      %v1825 = vshrl.u32 %v1824, 7
      %v1826 = vsub.s32 %v1823, %v1825
      %v1827 = vrot.slane %v1819, %v1826
      %v1829 = vunpack.c.l.s4 1983009808
      %v1830 = vunpack.c.0.s8 %v1829
      %v1831 = vlaneseq
      %v1832 = vshrl.u32 %v1831, 7
      %v1833 = vsub.s32 %v1830, %v1832
      %v1834 = vrot.slane %v1820, %v1833
      %v1835 = vcombine.low %v1827, %v1834
      %v1836 = vcombine.low %v1472, %v1476
      %v1837 = vcombine.low %v1480, %v1484
      %v1839 = vunpack.c.l.s4 1983009808
      %v1840 = vunpack.c.0.s8 %v1839
      %v1841 = vlaneseq
      %v1842 = vshrl.u32 %v1841, 7
      %v1843 = vsub.s32 %v1840, %v1842
      %v1844 = vrot.slane %v1836, %v1843
      %v1846 = vunpack.c.l.s4 1983009808
      %v1847 = vunpack.c.0.s8 %v1846
      %v1848 = vlaneseq
      %v1849 = vshrl.u32 %v1848, 7
      %v1850 = vsub.s32 %v1847, %v1849
      %v1851 = vrot.slane %v1837, %v1850
      %v1852 = vcombine.low %v1844, %v1851
      %v1853 = vcombine.low %v1488, %v1492
      %v1854 = vcombine.low %v1496, %v1500
      %v1856 = vunpack.c.l.s4 1983009808
      %v1857 = vunpack.c.0.s8 %v1856
      %v1858 = vlaneseq
      %v1859 = vshrl.u32 %v1858, 7
      %v1860 = vsub.s32 %v1857, %v1859
      %v1861 = vrot.slane %v1853, %v1860
      %v1863 = vunpack.c.l.s4 1983009808
      %v1864 = vunpack.c.0.s8 %v1863
      %v1865 = vlaneseq
      %v1866 = vshrl.u32 %v1865, 7
      %v1867 = vsub.s32 %v1864, %v1866
      %v1868 = vrot.slane %v1854, %v1867
      %v1869 = vcombine.low %v1861, %v1868
      %v1870 = vcombine.low %v1504, %v1508
      %v1871 = vcombine.low %v1512, %v1516
      %v1873 = vunpack.c.l.s4 1983009808
      %v1874 = vunpack.c.0.s8 %v1873
      %v1875 = vlaneseq
      %v1876 = vshrl.u32 %v1875, 7
      %v1877 = vsub.s32 %v1874, %v1876
      %v1878 = vrot.slane %v1870, %v1877
      %v1880 = vunpack.c.l.s4 1983009808
      %v1881 = vunpack.c.0.s8 %v1880
      %v1882 = vlaneseq
      %v1883 = vshrl.u32 %v1882, 7
      %v1884 = vsub.s32 %v1881, %v1883
      %v1885 = vrot.slane %v1871, %v1884
      %v1886 = vcombine.low %v1878, %v1885
      %v1887 = vcombine.low %v1520, %v1524
      %v1888 = vcombine.low %v1528, %v1532
      %v1890 = vunpack.c.l.s4 1983009808
      %v1891 = vunpack.c.0.s8 %v1890
      %v1892 = vlaneseq
      %v1893 = vshrl.u32 %v1892, 7
      %v1894 = vsub.s32 %v1891, %v1893
      %v1895 = vrot.slane %v1887, %v1894
      %v1897 = vunpack.c.l.s4 1983009808
      %v1898 = vunpack.c.0.s8 %v1897
      %v1899 = vlaneseq
      %v1900 = vshrl.u32 %v1899, 7
      %v1901 = vsub.s32 %v1898, %v1900
      %v1902 = vrot.slane %v1888, %v1901
      %v1903 = vcombine.low %v1895, %v1902
      %v1904 = vcombine.low %v1536, %v1540
      %v1905 = vcombine.low %v1544, %v1548
      %v1907 = vunpack.c.l.s4 1983009808
      %v1908 = vunpack.c.0.s8 %v1907
      %v1909 = vlaneseq
      %v1910 = vshrl.u32 %v1909, 7
      %v1911 = vsub.s32 %v1908, %v1910
      %v1912 = vrot.slane %v1904, %v1911
      %v1914 = vunpack.c.l.s4 1983009808
      %v1915 = vunpack.c.0.s8 %v1914
      %v1916 = vlaneseq
      %v1917 = vshrl.u32 %v1916, 7
      %v1918 = vsub.s32 %v1915, %v1917
      %v1919 = vrot.slane %v1905, %v1918
      %v1920 = vcombine.low %v1912, %v1919
      %v1921 = vcombine.low %v1552, %v1556
      %v1922 = vcombine.low %v1560, %v1564
      %v1924 = vunpack.c.l.s4 1983009808
      %v1925 = vunpack.c.0.s8 %v1924
      %v1926 = vlaneseq
      %v1927 = vshrl.u32 %v1926, 7
      %v1928 = vsub.s32 %v1925, %v1927
      %v1929 = vrot.slane %v1921, %v1928
      %v1931 = vunpack.c.l.s4 1983009808
      %v1932 = vunpack.c.0.s8 %v1931
      %v1933 = vlaneseq
      %v1934 = vshrl.u32 %v1933, 7
      %v1935 = vsub.s32 %v1932, %v1934
      %v1936 = vrot.slane %v1922, %v1935
      %v1937 = vcombine.low %v1929, %v1936
      %v1938 = vcombine.low %v1568, %v1572
      %v1939 = vcombine.low %v1576, %v1580
      %v1941 = vunpack.c.l.s4 1983009808
      %v1942 = vunpack.c.0.s8 %v1941
      %v1943 = vlaneseq
      %v1944 = vshrl.u32 %v1943, 7
      %v1945 = vsub.s32 %v1942, %v1944
      %v1946 = vrot.slane %v1938, %v1945
      %v1948 = vunpack.c.l.s4 1983009808
      %v1949 = vunpack.c.0.s8 %v1948
      %v1950 = vlaneseq
      %v1951 = vshrl.u32 %v1950, 7
      %v1952 = vsub.s32 %v1949, %v1951
      %v1953 = vrot.slane %v1939, %v1952
      %v1954 = vcombine.low %v1946, %v1953
      %v1955 = vcombine.low %v1584, %v1588
      %v1956 = vcombine.low %v1592, %v1596
      %v1958 = vunpack.c.l.s4 1983009808
      %v1959 = vunpack.c.0.s8 %v1958
      %v1960 = vlaneseq
      %v1961 = vshrl.u32 %v1960, 7
      %v1962 = vsub.s32 %v1959, %v1961
      %v1963 = vrot.slane %v1955, %v1962
      %v1965 = vunpack.c.l.s4 1983009808
      %v1966 = vunpack.c.0.s8 %v1965
      %v1967 = vlaneseq
      %v1968 = vshrl.u32 %v1967, 7
      %v1969 = vsub.s32 %v1966, %v1968
      %v1970 = vrot.slane %v1956, %v1969
      %v1971 = vcombine.low %v1963, %v1970
      %v1972 = vcombine.low %v1600, %v1604
      %v1973 = vcombine.low %v1608, %v1612
      %v1975 = vunpack.c.l.s4 1983009808
      %v1976 = vunpack.c.0.s8 %v1975
      %v1977 = vlaneseq
      %v1978 = vshrl.u32 %v1977, 7
      %v1979 = vsub.s32 %v1976, %v1978
      %v1980 = vrot.slane %v1972, %v1979
      %v1982 = vunpack.c.l.s4 1983009808
      %v1983 = vunpack.c.0.s8 %v1982
      %v1984 = vlaneseq
      %v1985 = vshrl.u32 %v1984, 7
      %v1986 = vsub.s32 %v1983, %v1985
      %v1987 = vrot.slane %v1973, %v1986
      %v1988 = vcombine.low %v1980, %v1987
      %v1989 = vcombine.low %v1616, %v1620
      %v1990 = vcombine.low %v1624, %v1628
      %v1992 = vunpack.c.l.s4 1983009808
      %v1993 = vunpack.c.0.s8 %v1992
      %v1994 = vlaneseq
      %v1995 = vshrl.u32 %v1994, 7
      %v1996 = vsub.s32 %v1993, %v1995
      %v1997 = vrot.slane %v1989, %v1996
      %v1999 = vunpack.c.l.s4 1983009808
      %v2000 = vunpack.c.0.s8 %v1999
      %v2001 = vlaneseq
      %v2002 = vshrl.u32 %v2001, 7
      %v2003 = vsub.s32 %v2000, %v2002
      %v2004 = vrot.slane %v1990, %v2003
      %v2005 = vcombine.low %v1997, %v2004
      %v2006 = vcombine.low %v1632, %v1636
      %v2007 = vcombine.low %v1640, %v1644
      %v2009 = vunpack.c.l.s4 1983009808
      %v2010 = vunpack.c.0.s8 %v2009
      %v2011 = vlaneseq
      %v2012 = vshrl.u32 %v2011, 7
      %v2013 = vsub.s32 %v2010, %v2012
      %v2014 = vrot.slane %v2006, %v2013
      %v2016 = vunpack.c.l.s4 1983009808
      %v2017 = vunpack.c.0.s8 %v2016
      %v2018 = vlaneseq
      %v2019 = vshrl.u32 %v2018, 7
      %v2020 = vsub.s32 %v2017, %v2019
      %v2021 = vrot.slane %v2007, %v2020
      %v2022 = vcombine.low %v2014, %v2021
      %v2023 = vcombine.low %v1648, %v1652
      %v2024 = vcombine.low %v1656, %v1660
      %v2026 = vunpack.c.l.s4 1983009808
      %v2027 = vunpack.c.0.s8 %v2026
      %v2028 = vlaneseq
      %v2029 = vshrl.u32 %v2028, 7
      %v2030 = vsub.s32 %v2027, %v2029
      %v2031 = vrot.slane %v2023, %v2030
      %v2033 = vunpack.c.l.s4 1983009808
      %v2034 = vunpack.c.0.s8 %v2033
      %v2035 = vlaneseq
      %v2036 = vshrl.u32 %v2035, 7
      %v2037 = vsub.s32 %v2034, %v2036
      %v2038 = vrot.slane %v2024, %v2037
      %v2039 = vcombine.low %v2031, %v2038
      %v2040 = vcombine.low %v1664, %v1668
      %v2041 = vcombine.low %v1672, %v1676
      %v2043 = vunpack.c.l.s4 1983009808
      %v2044 = vunpack.c.0.s8 %v2043
      %v2045 = vlaneseq
      %v2046 = vshrl.u32 %v2045, 7
      %v2047 = vsub.s32 %v2044, %v2046
      %v2048 = vrot.slane %v2040, %v2047
      %v2050 = vunpack.c.l.s4 1983009808
      %v2051 = vunpack.c.0.s8 %v2050
      %v2052 = vlaneseq
      %v2053 = vshrl.u32 %v2052, 7
      %v2054 = vsub.s32 %v2051, %v2053
      %v2055 = vrot.slane %v2041, %v2054
      %v2056 = vcombine.low %v2048, %v2055
      %v2077 = vadd.f32 %v1679, %v1733
      %v2078 = vadd.f32 %v1680, %v1750
      %v2079 = vadd.f32 %v1681, %v1767
      %v2080 = vadd.f32 %v1682, %v1784
      %v2081 = vadd.f32 %v1683, %v1767
      %v2082 = vadd.f32 %v1684, %v1784
      %v2083 = vadd.f32 %v1685, %v1801
      %v2084 = vadd.f32 %v1686, %v1818
      %v2085 = vadd.f32 %v1687, %v1801
      %v2086 = vadd.f32 %v1688, %v1818
      %v2087 = vadd.f32 %v1689, %v1835
      %v2088 = vadd.f32 %v1690, %v1852
      %v2089 = vadd.f32 %v1691, %v1835
      %v2090 = vadd.f32 %v1692, %v1852
      %v2091 = vadd.f32 %v1693, %v1869
      %v2092 = vadd.f32 %v1694, %v1886
      %v2093 = vadd.f32 %v1695, %v1869
      %v2094 = vadd.f32 %v1696, %v1886
      %v2095 = vadd.f32 %v1697, %v1903
      %v2096 = vadd.f32 %v1698, %v1920
      %v2097 = vadd.f32 %v1699, %v1903
      %v2098 = vadd.f32 %v1700, %v1920
      %v2099 = vadd.f32 %v1701, %v1937
      %v2100 = vadd.f32 %v1702, %v1954
      %v2101 = vadd.f32 %v1703, %v1937
      %v2102 = vadd.f32 %v1704, %v1954
      %v2103 = vadd.f32 %v1705, %v1971
      %v2104 = vadd.f32 %v1706, %v1988
      %v2105 = vadd.f32 %v1707, %v1971
      %v2106 = vadd.f32 %v1708, %v1988
      %v2107 = vadd.f32 %v1709, %v2005
      %v2108 = vadd.f32 %v1710, %v2022
      %v2109 = vadd.f32 %v1711, %v2005
      %v2110 = vadd.f32 %v1712, %v2022
      %v2111 = vadd.f32 %v1715, %v2039
      %v2112 = vadd.f32 %v1716, %v2056
      %v2113 = vlaneseq
      %v2114 = vshrl.u32 %v2113, 7
      %v2115 = vadd.s32 %v2114, 8
      %v2116 = vadd.s32 %v2114, 16
      %v2117 = vadd.s32 %v2114, 24
      %v2118 = vadd.s32 %v2114, 32
      %v2119 = vadd.s32 %v2114, 40
      %v2120 = vadd.s32 %v2114, 48
      %v2121 = vadd.s32 %v2114, 56
      %v2122 = vadd.s32 %v2114, 64
      %v2123 = vadd.s32 %v2114, 72
      %v2124 = vadd.s32 %v2114, 80
      %v2125 = vadd.s32 %v2114, 88
      %v2126 = vadd.s32 %v2114, 96
      %v2127 = vadd.s32 %v2114, 104
      %v2128 = vadd.s32 %v2114, 112
      %v2129 = vadd.s32 %v2114, 120
      %v2130 = vadd.s32 %v2114, 128
      %v2131 = vadd.s32 %v2114, 136
      %v2132 = vadd.s32 %v2114, 144
      %v2133 = vadd.s32 %v2114, 152
      %v2134 = vadd.s32 %v2114, 160
      %v2135 = vadd.s32 %v2114, 168
      %v2136 = vadd.s32 %v2114, 176
      %v2137 = vadd.s32 %v2114, 184
      %v2138 = vadd.s32 %v2114, 192
      %v2139 = vadd.s32 %v2114, 200
      %v2140 = vadd.s32 %v2114, 208
      %v2141 = vadd.s32 %v2114, 216
      %v2142 = vadd.s32 %v2114, 224
      %v2143 = vadd.s32 %v2114, 232
      %v2144 = vadd.s32 %v2114, 240
      %v2145 = vadd.s32 %v2114, 248
      %v2146 = vadd.s32 %v2114, 256
      %v2147 = vadd.s32 %v2114, 264
      %v2148 = vadd.s32 %v2114, 272
      %v2149 = vadd.s32 %v2114, 280
      %vm2150 = vcmp.lt.s32.totalorder %v2114, 0
      %v2151 = vsub.s32 0, %v2114
      %v2152 = vsel %vm2150, %v2151, %v2114
      %v2153 = vshrl.u32 %v2152, 4
      %v2154 = vand.u32 %v2152, 15
      %v2155 = vsub.s32 0, %v2154
      %v2156 = vsel %vm2150, %v2155, %v2154
      %vm2157 = vcmp.lt.s32.totalorder %v2115, 0
      %v2158 = vsub.s32 0, %v2115
      %v2159 = vsel %vm2157, %v2158, %v2115
      %v2160 = vshrl.u32 %v2159, 4
      %v2161 = vand.u32 %v2159, 15
      %v2162 = vsub.s32 0, %v2161
      %v2163 = vsel %vm2157, %v2162, %v2161
      %vm2164 = vcmp.lt.s32.totalorder %v2116, 0
      %v2165 = vsub.s32 0, %v2116
      %v2166 = vsel %vm2164, %v2165, %v2116
      %v2167 = vshrl.u32 %v2166, 4
      %v2168 = vand.u32 %v2166, 15
      %v2169 = vsub.s32 0, %v2168
      %v2170 = vsel %vm2164, %v2169, %v2168
      %vm2171 = vcmp.lt.s32.totalorder %v2117, 0
      %v2172 = vsub.s32 0, %v2117
      %v2173 = vsel %vm2171, %v2172, %v2117
      %v2174 = vshrl.u32 %v2173, 4
      %v2175 = vand.u32 %v2173, 15
      %v2176 = vsub.s32 0, %v2175
      %v2177 = vsel %vm2171, %v2176, %v2175
      %vm2178 = vcmp.lt.s32.totalorder %v2118, 0
      %v2179 = vsub.s32 0, %v2118
      %v2180 = vsel %vm2178, %v2179, %v2118
      %v2181 = vshrl.u32 %v2180, 4
      %v2182 = vand.u32 %v2180, 15
      %v2183 = vsub.s32 0, %v2182
      %v2184 = vsel %vm2178, %v2183, %v2182
      %vm2185 = vcmp.lt.s32.totalorder %v2119, 0
      %v2186 = vsub.s32 0, %v2119
      %v2187 = vsel %vm2185, %v2186, %v2119
      %v2188 = vshrl.u32 %v2187, 4
      %v2189 = vand.u32 %v2187, 15
      %v2190 = vsub.s32 0, %v2189
      %v2191 = vsel %vm2185, %v2190, %v2189
      %vm2192 = vcmp.lt.s32.totalorder %v2120, 0
      %v2193 = vsub.s32 0, %v2120
      %v2194 = vsel %vm2192, %v2193, %v2120
      %v2195 = vshrl.u32 %v2194, 4
      %v2196 = vand.u32 %v2194, 15
      %v2197 = vsub.s32 0, %v2196
      %v2198 = vsel %vm2192, %v2197, %v2196
      %vm2199 = vcmp.lt.s32.totalorder %v2121, 0
      %v2200 = vsub.s32 0, %v2121
      %v2201 = vsel %vm2199, %v2200, %v2121
      %v2202 = vshrl.u32 %v2201, 4
      %v2203 = vand.u32 %v2201, 15
      %v2204 = vsub.s32 0, %v2203
      %v2205 = vsel %vm2199, %v2204, %v2203
      %vm2206 = vcmp.lt.s32.totalorder %v2122, 0
      %v2207 = vsub.s32 0, %v2122
      %v2208 = vsel %vm2206, %v2207, %v2122
      %v2209 = vshrl.u32 %v2208, 4
      %v2210 = vand.u32 %v2208, 15
      %v2211 = vsub.s32 0, %v2210
      %v2212 = vsel %vm2206, %v2211, %v2210
      %vm2213 = vcmp.lt.s32.totalorder %v2123, 0
      %v2214 = vsub.s32 0, %v2123
      %v2215 = vsel %vm2213, %v2214, %v2123
      %v2216 = vshrl.u32 %v2215, 4
      %v2217 = vand.u32 %v2215, 15
      %v2218 = vsub.s32 0, %v2217
      %v2219 = vsel %vm2213, %v2218, %v2217
      %vm2220 = vcmp.lt.s32.totalorder %v2124, 0
      %v2221 = vsub.s32 0, %v2124
      %v2222 = vsel %vm2220, %v2221, %v2124
      %v2223 = vshrl.u32 %v2222, 4
      %v2224 = vand.u32 %v2222, 15
      %v2225 = vsub.s32 0, %v2224
      %v2226 = vsel %vm2220, %v2225, %v2224
      %vm2227 = vcmp.lt.s32.totalorder %v2125, 0
      %v2228 = vsub.s32 0, %v2125
      %v2229 = vsel %vm2227, %v2228, %v2125
      %v2230 = vshrl.u32 %v2229, 4
      %v2231 = vand.u32 %v2229, 15
      %v2232 = vsub.s32 0, %v2231
      %v2233 = vsel %vm2227, %v2232, %v2231
      %vm2234 = vcmp.lt.s32.totalorder %v2126, 0
      %v2235 = vsub.s32 0, %v2126
      %v2236 = vsel %vm2234, %v2235, %v2126
      %v2237 = vshrl.u32 %v2236, 4
      %v2238 = vand.u32 %v2236, 15
      %v2239 = vsub.s32 0, %v2238
      %v2240 = vsel %vm2234, %v2239, %v2238
      %vm2241 = vcmp.lt.s32.totalorder %v2127, 0
      %v2242 = vsub.s32 0, %v2127
      %v2243 = vsel %vm2241, %v2242, %v2127
      %v2244 = vshrl.u32 %v2243, 4
      %v2245 = vand.u32 %v2243, 15
      %v2246 = vsub.s32 0, %v2245
      %v2247 = vsel %vm2241, %v2246, %v2245
      %vm2248 = vcmp.lt.s32.totalorder %v2128, 0
      %v2249 = vsub.s32 0, %v2128
      %v2250 = vsel %vm2248, %v2249, %v2128
      %v2251 = vshrl.u32 %v2250, 4
      %v2252 = vand.u32 %v2250, 15
      %v2253 = vsub.s32 0, %v2252
      %v2254 = vsel %vm2248, %v2253, %v2252
      %vm2255 = vcmp.lt.s32.totalorder %v2129, 0
      %v2256 = vsub.s32 0, %v2129
      %v2257 = vsel %vm2255, %v2256, %v2129
      %v2258 = vshrl.u32 %v2257, 4
      %v2259 = vand.u32 %v2257, 15
      %v2260 = vsub.s32 0, %v2259
      %v2261 = vsel %vm2255, %v2260, %v2259
      %vm2262 = vcmp.lt.s32.totalorder %v2130, 0
      %v2263 = vsub.s32 0, %v2130
      %v2264 = vsel %vm2262, %v2263, %v2130
      %v2265 = vshrl.u32 %v2264, 4
      %v2266 = vand.u32 %v2264, 15
      %v2267 = vsub.s32 0, %v2266
      %v2268 = vsel %vm2262, %v2267, %v2266
      %vm2269 = vcmp.lt.s32.totalorder %v2131, 0
      %v2270 = vsub.s32 0, %v2131
      %v2271 = vsel %vm2269, %v2270, %v2131
      %v2272 = vshrl.u32 %v2271, 4
      %v2273 = vand.u32 %v2271, 15
      %v2274 = vsub.s32 0, %v2273
      %v2275 = vsel %vm2269, %v2274, %v2273
      %vm2276 = vcmp.lt.s32.totalorder %v2132, 0
      %v2277 = vsub.s32 0, %v2132
      %v2278 = vsel %vm2276, %v2277, %v2132
      %v2279 = vshrl.u32 %v2278, 4
      %v2280 = vand.u32 %v2278, 15
      %v2281 = vsub.s32 0, %v2280
      %v2282 = vsel %vm2276, %v2281, %v2280
      %vm2283 = vcmp.lt.s32.totalorder %v2133, 0
      %v2284 = vsub.s32 0, %v2133
      %v2285 = vsel %vm2283, %v2284, %v2133
      %v2286 = vshrl.u32 %v2285, 4
      %v2287 = vand.u32 %v2285, 15
      %v2288 = vsub.s32 0, %v2287
      %v2289 = vsel %vm2283, %v2288, %v2287
      %vm2290 = vcmp.lt.s32.totalorder %v2134, 0
      %v2291 = vsub.s32 0, %v2134
      %v2292 = vsel %vm2290, %v2291, %v2134
      %v2293 = vshrl.u32 %v2292, 4
      %v2294 = vand.u32 %v2292, 15
      %v2295 = vsub.s32 0, %v2294
      %v2296 = vsel %vm2290, %v2295, %v2294
      %vm2297 = vcmp.lt.s32.totalorder %v2135, 0
      %v2298 = vsub.s32 0, %v2135
      %v2299 = vsel %vm2297, %v2298, %v2135
      %v2300 = vshrl.u32 %v2299, 4
      %v2301 = vand.u32 %v2299, 15
      %v2302 = vsub.s32 0, %v2301
      %v2303 = vsel %vm2297, %v2302, %v2301
      %vm2304 = vcmp.lt.s32.totalorder %v2136, 0
      %v2305 = vsub.s32 0, %v2136
      %v2306 = vsel %vm2304, %v2305, %v2136
      %v2307 = vshrl.u32 %v2306, 4
      %v2308 = vand.u32 %v2306, 15
      %v2309 = vsub.s32 0, %v2308
      %v2310 = vsel %vm2304, %v2309, %v2308
      %vm2311 = vcmp.lt.s32.totalorder %v2137, 0
      %v2312 = vsub.s32 0, %v2137
      %v2313 = vsel %vm2311, %v2312, %v2137
      %v2314 = vshrl.u32 %v2313, 4
      %v2315 = vand.u32 %v2313, 15
      %v2316 = vsub.s32 0, %v2315
      %v2317 = vsel %vm2311, %v2316, %v2315
      %vm2318 = vcmp.lt.s32.totalorder %v2138, 0
      %v2319 = vsub.s32 0, %v2138
      %v2320 = vsel %vm2318, %v2319, %v2138
      %v2321 = vshrl.u32 %v2320, 4
      %v2322 = vand.u32 %v2320, 15
      %v2323 = vsub.s32 0, %v2322
      %v2324 = vsel %vm2318, %v2323, %v2322
      %vm2325 = vcmp.lt.s32.totalorder %v2139, 0
      %v2326 = vsub.s32 0, %v2139
      %v2327 = vsel %vm2325, %v2326, %v2139
      %v2328 = vshrl.u32 %v2327, 4
      %v2329 = vand.u32 %v2327, 15
      %v2330 = vsub.s32 0, %v2329
      %v2331 = vsel %vm2325, %v2330, %v2329
      %vm2332 = vcmp.lt.s32.totalorder %v2140, 0
      %v2333 = vsub.s32 0, %v2140
      %v2334 = vsel %vm2332, %v2333, %v2140
      %v2335 = vshrl.u32 %v2334, 4
      %v2336 = vand.u32 %v2334, 15
      %v2337 = vsub.s32 0, %v2336
      %v2338 = vsel %vm2332, %v2337, %v2336
      %vm2339 = vcmp.lt.s32.totalorder %v2141, 0
      %v2340 = vsub.s32 0, %v2141
      %v2341 = vsel %vm2339, %v2340, %v2141
      %v2342 = vshrl.u32 %v2341, 4
      %v2343 = vand.u32 %v2341, 15
      %v2344 = vsub.s32 0, %v2343
      %v2345 = vsel %vm2339, %v2344, %v2343
      %vm2346 = vcmp.lt.s32.totalorder %v2142, 0
      %v2347 = vsub.s32 0, %v2142
      %v2348 = vsel %vm2346, %v2347, %v2142
      %v2349 = vshrl.u32 %v2348, 4
      %v2350 = vand.u32 %v2348, 15
      %v2351 = vsub.s32 0, %v2350
      %v2352 = vsel %vm2346, %v2351, %v2350
      %vm2353 = vcmp.lt.s32.totalorder %v2143, 0
      %v2354 = vsub.s32 0, %v2143
      %v2355 = vsel %vm2353, %v2354, %v2143
      %v2356 = vshrl.u32 %v2355, 4
      %v2357 = vand.u32 %v2355, 15
      %v2358 = vsub.s32 0, %v2357
      %v2359 = vsel %vm2353, %v2358, %v2357
      %vm2360 = vcmp.lt.s32.totalorder %v2144, 0
      %v2361 = vsub.s32 0, %v2144
      %v2362 = vsel %vm2360, %v2361, %v2144
      %v2363 = vshrl.u32 %v2362, 4
      %v2364 = vand.u32 %v2362, 15
      %v2365 = vsub.s32 0, %v2364
      %v2366 = vsel %vm2360, %v2365, %v2364
      %vm2367 = vcmp.lt.s32.totalorder %v2145, 0
      %v2368 = vsub.s32 0, %v2145
      %v2369 = vsel %vm2367, %v2368, %v2145
      %v2370 = vshrl.u32 %v2369, 4
      %v2371 = vand.u32 %v2369, 15
      %v2372 = vsub.s32 0, %v2371
      %v2373 = vsel %vm2367, %v2372, %v2371
      %vm2374 = vcmp.lt.s32.totalorder %v2146, 0
      %v2375 = vsub.s32 0, %v2146
      %v2376 = vsel %vm2374, %v2375, %v2146
      %v2377 = vshrl.u32 %v2376, 4
      %v2378 = vand.u32 %v2376, 15
      %v2379 = vsub.s32 0, %v2378
      %v2380 = vsel %vm2374, %v2379, %v2378
      %vm2381 = vcmp.lt.s32.totalorder %v2147, 0
      %v2382 = vsub.s32 0, %v2147
      %v2383 = vsel %vm2381, %v2382, %v2147
      %v2384 = vshrl.u32 %v2383, 4
      %v2385 = vand.u32 %v2383, 15
      %v2386 = vsub.s32 0, %v2385
      %v2387 = vsel %vm2381, %v2386, %v2385
      %vm2388 = vcmp.lt.s32.totalorder %v2148, 0
      %v2389 = vsub.s32 0, %v2148
      %v2390 = vsel %vm2388, %v2389, %v2148
      %v2391 = vshrl.u32 %v2390, 4
      %v2392 = vand.u32 %v2390, 15
      %v2393 = vsub.s32 0, %v2392
      %v2394 = vsel %vm2388, %v2393, %v2392
      %vm2395 = vcmp.lt.s32.totalorder %v2149, 0
      %v2396 = vsub.s32 0, %v2149
      %v2397 = vsel %vm2395, %v2396, %v2149
      %v2398 = vshrl.u32 %v2397, 4
      %v2399 = vand.u32 %v2397, 15
      %v2400 = vsub.s32 0, %v2399
      %v2401 = vsel %vm2395, %v2400, %v2399
      %vm2402 = vcmp.ne.s32.totalorder %v2156, 0
      %vm2403 = vcmp.ne.s32.totalorder %v2163, 0
      %vm2404 = vcmp.ne.s32.totalorder %v2170, 0
      %vm2405 = vcmp.ne.s32.totalorder %v2177, 0
      %vm2406 = vcmp.ne.s32.totalorder %v2184, 0
      %vm2407 = vcmp.ne.s32.totalorder %v2191, 0
      %vm2408 = vcmp.ne.s32.totalorder %v2198, 0
      %vm2409 = vcmp.ne.s32.totalorder %v2205, 0
      %vm2410 = vcmp.ne.s32.totalorder %v2212, 0
      %vm2411 = vcmp.ne.s32.totalorder %v2219, 0
      %vm2412 = vcmp.ne.s32.totalorder %v2226, 0
      %vm2413 = vcmp.ne.s32.totalorder %v2233, 0
      %vm2414 = vcmp.ne.s32.totalorder %v2240, 0
      %vm2415 = vcmp.ne.s32.totalorder %v2247, 0
      %vm2416 = vcmp.ne.s32.totalorder %v2254, 0
      %vm2417 = vcmp.ne.s32.totalorder %v2261, 0
      %vm2418 = vcmp.ne.s32.totalorder %v2268, 0
      %vm2419 = vcmp.ne.s32.totalorder %v2275, 0
      %vm2420 = vcmp.ne.s32.totalorder %v2282, 0
      %vm2421 = vcmp.ne.s32.totalorder %v2289, 0
      %vm2422 = vcmp.ne.s32.totalorder %v2296, 0
      %vm2423 = vcmp.ne.s32.totalorder %v2303, 0
      %vm2424 = vcmp.ne.s32.totalorder %v2310, 0
      %vm2425 = vcmp.ne.s32.totalorder %v2317, 0
      %vm2426 = vcmp.ne.s32.totalorder %v2324, 0
      %vm2427 = vcmp.ne.s32.totalorder %v2331, 0
      %vm2428 = vcmp.ne.s32.totalorder %v2338, 0
      %vm2429 = vcmp.ne.s32.totalorder %v2345, 0
      %vm2430 = vcmp.ne.s32.totalorder %v2352, 0
      %vm2431 = vcmp.ne.s32.totalorder %v2359, 0
      %vm2432 = vcmp.ne.s32.totalorder %v2366, 0
      %vm2433 = vcmp.ne.s32.totalorder %v2373, 0
      %vm2434 = vcmp.ne.s32.totalorder %v2380, 0
      %vm2435 = vcmp.ne.s32.totalorder %v2387, 0
      %vm2436 = vcmp.ne.s32.totalorder %v2394, 0
      %vm2437 = vcmp.ne.s32.totalorder %v2401, 0
      %vm2438 = vcmp.lt.s32.totalorder %v2156, 0
      %vm2439 = vcmp.lt.s32.totalorder %v2163, 0
      %vm2440 = vcmp.lt.s32.totalorder %v2170, 0
      %vm2441 = vcmp.lt.s32.totalorder %v2177, 0
      %vm2442 = vcmp.lt.s32.totalorder %v2184, 0
      %vm2443 = vcmp.lt.s32.totalorder %v2191, 0
      %vm2444 = vcmp.lt.s32.totalorder %v2198, 0
      %vm2445 = vcmp.lt.s32.totalorder %v2205, 0
      %vm2446 = vcmp.lt.s32.totalorder %v2212, 0
      %vm2447 = vcmp.lt.s32.totalorder %v2219, 0
      %vm2448 = vcmp.lt.s32.totalorder %v2226, 0
      %vm2449 = vcmp.lt.s32.totalorder %v2233, 0
      %vm2450 = vcmp.lt.s32.totalorder %v2240, 0
      %vm2451 = vcmp.lt.s32.totalorder %v2247, 0
      %vm2452 = vcmp.lt.s32.totalorder %v2254, 0
      %vm2453 = vcmp.lt.s32.totalorder %v2261, 0
      %vm2454 = vcmp.lt.s32.totalorder %v2268, 0
      %vm2455 = vcmp.lt.s32.totalorder %v2275, 0
      %vm2456 = vcmp.lt.s32.totalorder %v2282, 0
      %vm2457 = vcmp.lt.s32.totalorder %v2289, 0
      %vm2458 = vcmp.lt.s32.totalorder %v2296, 0
      %vm2459 = vcmp.lt.s32.totalorder %v2303, 0
      %vm2460 = vcmp.lt.s32.totalorder %v2310, 0
      %vm2461 = vcmp.lt.s32.totalorder %v2317, 0
      %vm2462 = vcmp.lt.s32.totalorder %v2324, 0
      %vm2463 = vcmp.lt.s32.totalorder %v2331, 0
      %vm2464 = vcmp.lt.s32.totalorder %v2338, 0
      %vm2465 = vcmp.lt.s32.totalorder %v2345, 0
      %vm2466 = vcmp.lt.s32.totalorder %v2352, 0
      %vm2467 = vcmp.lt.s32.totalorder %v2359, 0
      %vm2468 = vcmp.lt.s32.totalorder %v2366, 0
      %vm2469 = vcmp.lt.s32.totalorder %v2373, 0
      %vm2470 = vcmp.lt.s32.totalorder %v2380, 0
      %vm2471 = vcmp.lt.s32.totalorder %v2387, 0
      %vm2472 = vcmp.lt.s32.totalorder %v2394, 0
      %vm2473 = vcmp.lt.s32.totalorder %v2401, 0
      %vm2474 = vmand %vm2438, %vm2402
      %vm2475 = vmand %vm2439, %vm2403
      %vm2476 = vmand %vm2440, %vm2404
      %vm2477 = vmand %vm2441, %vm2405
      %vm2478 = vmand %vm2442, %vm2406
      %vm2479 = vmand %vm2443, %vm2407
      %vm2480 = vmand %vm2444, %vm2408
      %vm2481 = vmand %vm2445, %vm2409
      %vm2482 = vmand %vm2446, %vm2410
      %vm2483 = vmand %vm2447, %vm2411
      %vm2484 = vmand %vm2448, %vm2412
      %vm2485 = vmand %vm2449, %vm2413
      %vm2486 = vmand %vm2450, %vm2414
      %vm2487 = vmand %vm2451, %vm2415
      %vm2488 = vmand %vm2452, %vm2416
      %vm2489 = vmand %vm2453, %vm2417
      %vm2490 = vmand %vm2454, %vm2418
      %vm2491 = vmand %vm2455, %vm2419
      %vm2492 = vmand %vm2456, %vm2420
      %vm2493 = vmand %vm2457, %vm2421
      %vm2494 = vmand %vm2458, %vm2422
      %vm2495 = vmand %vm2459, %vm2423
      %vm2496 = vmand %vm2460, %vm2424
      %vm2497 = vmand %vm2461, %vm2425
      %vm2498 = vmand %vm2462, %vm2426
      %vm2499 = vmand %vm2463, %vm2427
      %vm2500 = vmand %vm2464, %vm2428
      %vm2501 = vmand %vm2465, %vm2429
      %vm2502 = vmand %vm2466, %vm2430
      %vm2503 = vmand %vm2467, %vm2431
      %vm2504 = vmand %vm2468, %vm2432
      %vm2505 = vmand %vm2469, %vm2433
      %vm2506 = vmand %vm2470, %vm2434
      %vm2507 = vmand %vm2471, %vm2435
      %vm2508 = vmand %vm2472, %vm2436
      %vm2509 = vmand %vm2473, %vm2437
      %v2510 = vadd.s32 %v2156, 16
      %v2511 = vadd.s32 %v2163, 16
      %v2512 = vadd.s32 %v2170, 16
      %v2513 = vadd.s32 %v2177, 16
      %v2514 = vadd.s32 %v2184, 16
      %v2515 = vadd.s32 %v2191, 16
      %v2516 = vadd.s32 %v2198, 16
      %v2517 = vadd.s32 %v2205, 16
      %v2518 = vadd.s32 %v2212, 16
      %v2519 = vadd.s32 %v2219, 16
      %v2520 = vadd.s32 %v2226, 16
      %v2521 = vadd.s32 %v2233, 16
      %v2522 = vadd.s32 %v2240, 16
      %v2523 = vadd.s32 %v2247, 16
      %v2524 = vadd.s32 %v2254, 16
      %v2525 = vadd.s32 %v2261, 16
      %v2526 = vadd.s32 %v2268, 16
      %v2527 = vadd.s32 %v2275, 16
      %v2528 = vadd.s32 %v2282, 16
      %v2529 = vadd.s32 %v2289, 16
      %v2530 = vadd.s32 %v2296, 16
      %v2531 = vadd.s32 %v2303, 16
      %v2532 = vadd.s32 %v2310, 16
      %v2533 = vadd.s32 %v2317, 16
      %v2534 = vadd.s32 %v2324, 16
      %v2535 = vadd.s32 %v2331, 16
      %v2536 = vadd.s32 %v2338, 16
      %v2537 = vadd.s32 %v2345, 16
      %v2538 = vadd.s32 %v2352, 16
      %v2539 = vadd.s32 %v2359, 16
      %v2540 = vadd.s32 %v2366, 16
      %v2541 = vadd.s32 %v2373, 16
      %v2542 = vadd.s32 %v2380, 16
      %v2543 = vadd.s32 %v2387, 16
      %v2544 = vadd.s32 %v2394, 16
      %v2545 = vadd.s32 %v2401, 16
      %v2546 = vsel %vm2474, %v2510, %v2156
      %v2547 = vsel %vm2475, %v2511, %v2163
      %v2548 = vsel %vm2476, %v2512, %v2170
      %v2549 = vsel %vm2477, %v2513, %v2177
      %v2550 = vsel %vm2478, %v2514, %v2184
      %v2551 = vsel %vm2479, %v2515, %v2191
      %v2552 = vsel %vm2480, %v2516, %v2198
      %v2553 = vsel %vm2481, %v2517, %v2205
      %v2554 = vsel %vm2482, %v2518, %v2212
      %v2555 = vsel %vm2483, %v2519, %v2219
      %v2556 = vsel %vm2484, %v2520, %v2226
      %v2557 = vsel %vm2485, %v2521, %v2233
      %v2558 = vsel %vm2486, %v2522, %v2240
      %v2559 = vsel %vm2487, %v2523, %v2247
      %v2560 = vsel %vm2488, %v2524, %v2254
      %v2561 = vsel %vm2489, %v2525, %v2261
      %v2562 = vsel %vm2490, %v2526, %v2268
      %v2563 = vsel %vm2491, %v2527, %v2275
      %v2564 = vsel %vm2492, %v2528, %v2282
      %v2565 = vsel %vm2493, %v2529, %v2289
      %v2566 = vsel %vm2494, %v2530, %v2296
      %v2567 = vsel %vm2495, %v2531, %v2303
      %v2568 = vsel %vm2496, %v2532, %v2310
      %v2569 = vsel %vm2497, %v2533, %v2317
      %v2570 = vsel %vm2498, %v2534, %v2324
      %v2571 = vsel %vm2499, %v2535, %v2331
      %v2572 = vsel %vm2500, %v2536, %v2338
      %v2573 = vsel %vm2501, %v2537, %v2345
      %v2574 = vsel %vm2502, %v2538, %v2352
      %v2575 = vsel %vm2503, %v2539, %v2359
      %v2576 = vsel %vm2504, %v2540, %v2366
      %v2577 = vsel %vm2505, %v2541, %v2373
      %v2578 = vsel %vm2506, %v2542, %v2380
      %v2579 = vsel %vm2507, %v2543, %v2387
      %v2580 = vsel %vm2508, %v2544, %v2394
      %v2581 = vsel %vm2509, %v2545, %v2401
      %v2582 = vpack.c.bf16 %v2078, %v2077
      %v2583 = vpack.c.bf16 %v2080, %v2079
      %v2584 = vpack.c.bf16 %v2082, %v2081
      %v2585 = vpack.c.bf16 %v2084, %v2083
      %v2586 = vpack.c.bf16 %v2086, %v2085
      %v2587 = vpack.c.bf16 %v2088, %v2087
      %v2588 = vpack.c.bf16 %v2090, %v2089
      %v2589 = vpack.c.bf16 %v2092, %v2091
      %v2590 = vpack.c.bf16 %v2094, %v2093
      %v2591 = vpack.c.bf16 %v2096, %v2095
      %v2592 = vpack.c.bf16 %v2098, %v2097
      %v2593 = vpack.c.bf16 %v2100, %v2099
      %v2594 = vpack.c.bf16 %v2102, %v2101
      %v2595 = vpack.c.bf16 %v2104, %v2103
      %v2596 = vpack.c.bf16 %v2106, %v2105
      %v2597 = vpack.c.bf16 %v2108, %v2107
      %v2598 = vpack.c.bf16 %v2110, %v2109
      %v2599 = vpack.c.bf16 %v2112, %v2111
      %vm2600 = vcmp.gt.s32.totalorder %v2546, 0
      %vm2601 = vcmp.gt.s32.totalorder %v2547, 0
      %vm2602 = vcmp.gt.s32.totalorder %v2548, 0
      %vm2603 = vcmp.gt.s32.totalorder %v2549, 0
      %vm2604 = vcmp.gt.s32.totalorder %v2550, 0
      %vm2605 = vcmp.gt.s32.totalorder %v2551, 0
      %vm2606 = vcmp.gt.s32.totalorder %v2552, 0
      %vm2607 = vcmp.gt.s32.totalorder %v2553, 0
      %vm2608 = vcmp.gt.s32.totalorder %v2554, 0
      %vm2609 = vcmp.gt.s32.totalorder %v2555, 0
      %vm2610 = vcmp.gt.s32.totalorder %v2556, 0
      %vm2611 = vcmp.gt.s32.totalorder %v2557, 0
      %vm2612 = vcmp.gt.s32.totalorder %v2558, 0
      %vm2613 = vcmp.gt.s32.totalorder %v2559, 0
      %vm2614 = vcmp.gt.s32.totalorder %v2560, 0
      %vm2615 = vcmp.gt.s32.totalorder %v2561, 0
      %vm2616 = vcmp.gt.s32.totalorder %v2562, 0
      %vm2617 = vcmp.gt.s32.totalorder %v2563, 0
      %vm2618 = vcmp.gt.s32.totalorder %v2564, 0
      %vm2619 = vcmp.gt.s32.totalorder %v2565, 0
      %vm2620 = vcmp.gt.s32.totalorder %v2566, 0
      %vm2621 = vcmp.gt.s32.totalorder %v2567, 0
      %vm2622 = vcmp.gt.s32.totalorder %v2568, 0
      %vm2623 = vcmp.gt.s32.totalorder %v2569, 0
      %vm2624 = vcmp.gt.s32.totalorder %v2570, 0
      %vm2625 = vcmp.gt.s32.totalorder %v2571, 0
      %vm2626 = vcmp.gt.s32.totalorder %v2572, 0
      %vm2627 = vcmp.gt.s32.totalorder %v2573, 0
      %vm2628 = vcmp.gt.s32.totalorder %v2574, 0
      %vm2629 = vcmp.gt.s32.totalorder %v2575, 0
      %vm2630 = vcmp.gt.s32.totalorder %v2576, 0
      %vm2631 = vcmp.gt.s32.totalorder %v2577, 0
      %vm2632 = vcmp.gt.s32.totalorder %v2578, 0
      %vm2633 = vcmp.gt.s32.totalorder %v2579, 0
      %vm2634 = vcmp.gt.s32.totalorder %v2580, 0
      %vm2635 = vcmp.gt.s32.totalorder %v2581, 0
      %v2636 = vrot.slane %v2077, 7
      %v2637 = vrot.slane %v2078, 7
      %v2638 = vrot.slane %v2079, 7
      %v2639 = vrot.slane %v2080, 7
      %v2640 = vrot.slane %v2081, 7
      %v2641 = vrot.slane %v2082, 7
      %v2642 = vrot.slane %v2083, 7
      %v2643 = vrot.slane %v2084, 7
      %v2644 = vrot.slane %v2085, 7
      %v2645 = vrot.slane %v2086, 7
      %v2646 = vrot.slane %v2087, 7
      %v2647 = vrot.slane %v2088, 7
      %v2648 = vrot.slane %v2089, 7
      %v2649 = vrot.slane %v2090, 7
      %v2650 = vrot.slane %v2091, 7
      %v2651 = vrot.slane %v2092, 7
      %v2652 = vrot.slane %v2093, 7
      %v2653 = vrot.slane %v2094, 7
      %v2654 = vrot.slane %v2095, 7
      %v2655 = vrot.slane %v2096, 7
      %v2656 = vrot.slane %v2097, 7
      %v2657 = vrot.slane %v2098, 7
      %v2658 = vrot.slane %v2099, 7
      %v2659 = vrot.slane %v2100, 7
      %v2660 = vrot.slane %v2101, 7
      %v2661 = vrot.slane %v2102, 7
      %v2662 = vrot.slane %v2103, 7
      %v2663 = vrot.slane %v2104, 7
      %v2664 = vrot.slane %v2105, 7
      %v2665 = vrot.slane %v2106, 7
      %v2666 = vrot.slane %v2107, 7
      %v2667 = vrot.slane %v2108, 7
      %v2668 = vrot.slane %v2109, 7
      %v2669 = vrot.slane %v2110, 7
      %v2670 = vrot.slane %v2111, 7
      %v2671 = vrot.slane %v2112, 7
      %vm2672 = vcmp.lt.s32.totalorder %v2114, 1
      %v2673 = vsel %vm2672, %v2670, %v2671
      %v2674 = vsel %vm2672, %v2669, %v2670
      %v2675 = vsel %vm2672, %v2668, %v2669
      %v2676 = vsel %vm2672, %v2667, %v2668
      %v2677 = vsel %vm2672, %v2666, %v2667
      %v2678 = vsel %vm2672, %v2665, %v2666
      %v2679 = vsel %vm2672, %v2664, %v2665
      %v2680 = vsel %vm2672, %v2663, %v2664
      %v2681 = vsel %vm2672, %v2662, %v2663
      %v2682 = vsel %vm2672, %v2661, %v2662
      %v2683 = vsel %vm2672, %v2660, %v2661
      %v2684 = vsel %vm2672, %v2659, %v2660
      %v2685 = vsel %vm2672, %v2658, %v2659
      %v2686 = vsel %vm2672, %v2657, %v2658
      %v2687 = vsel %vm2672, %v2656, %v2657
      %v2688 = vsel %vm2672, %v2655, %v2656
      %v2689 = vsel %vm2672, %v2654, %v2655
      %v2690 = vsel %vm2672, %v2653, %v2654
      %v2691 = vsel %vm2672, %v2652, %v2653
      %v2692 = vsel %vm2672, %v2651, %v2652
      %v2693 = vsel %vm2672, %v2650, %v2651
      %v2694 = vsel %vm2672, %v2649, %v2650
      %v2695 = vsel %vm2672, %v2648, %v2649
      %v2696 = vsel %vm2672, %v2647, %v2648
      %v2697 = vsel %vm2672, %v2646, %v2647
      %v2698 = vsel %vm2672, %v2645, %v2646
      %v2699 = vsel %vm2672, %v2644, %v2645
      %v2700 = vsel %vm2672, %v2643, %v2644
      %v2701 = vsel %vm2672, %v2642, %v2643
      %v2702 = vsel %vm2672, %v2641, %v2642
      %v2703 = vsel %vm2672, %v2640, %v2641
      %v2704 = vsel %vm2672, %v2639, %v2640
      %v2705 = vsel %vm2672, %v2638, %v2639
      %v2706 = vsel %vm2672, %v2637, %v2638
      %v2707 = vsel %vm2672, %v2636, %v2637
      %v2708 = vsel %vm2672, %v2671, %v2636
      %v2709 = vsel %vm2600, 1, 0
      %v2710 = vsel %vm2601, 1, 0
      %v2711 = vsel %vm2602, 1, 0
      %v2712 = vsel %vm2603, 1, 0
      %v2713 = vsel %vm2604, 1, 0
      %v2714 = vsel %vm2605, 1, 0
      %v2715 = vsel %vm2606, 1, 0
      %v2716 = vsel %vm2607, 1, 0
      %v2717 = vsel %vm2608, 1, 0
      %v2718 = vsel %vm2609, 1, 0
      %v2719 = vsel %vm2610, 1, 0
      %v2720 = vsel %vm2611, 1, 0
      %v2721 = vsel %vm2612, 1, 0
      %v2722 = vsel %vm2613, 1, 0
      %v2723 = vsel %vm2614, 1, 0
      %v2724 = vsel %vm2615, 1, 0
      %v2725 = vsel %vm2616, 1, 0
      %v2726 = vsel %vm2617, 1, 0
      %v2727 = vsel %vm2618, 1, 0
      %v2728 = vsel %vm2619, 1, 0
      %v2729 = vsel %vm2620, 1, 0
      %v2730 = vsel %vm2621, 1, 0
      %v2731 = vsel %vm2622, 1, 0
      %v2732 = vsel %vm2623, 1, 0
      %v2733 = vsel %vm2624, 1, 0
      %v2734 = vsel %vm2625, 1, 0
      %v2735 = vsel %vm2626, 1, 0
      %v2736 = vsel %vm2627, 1, 0
      %v2737 = vsel %vm2628, 1, 0
      %v2738 = vsel %vm2629, 1, 0
      %v2739 = vsel %vm2630, 1, 0
      %v2740 = vsel %vm2631, 1, 0
      %v2741 = vsel %vm2632, 1, 0
      %v2742 = vsel %vm2633, 1, 0
      %v2743 = vsel %vm2634, 1, 0
      %v2744 = vsel %vm2635, 1, 0
      %vm2745 = vcmp.eq.s32.totalorder %v2709, 1
      %vm2746 = vcmp.eq.s32.totalorder %v2710, 1
      %vm2747 = vcmp.eq.s32.totalorder %v2711, 1
      %vm2748 = vcmp.eq.s32.totalorder %v2712, 1
      %vm2749 = vcmp.eq.s32.totalorder %v2713, 1
      %vm2750 = vcmp.eq.s32.totalorder %v2714, 1
      %vm2751 = vcmp.eq.s32.totalorder %v2715, 1
      %vm2752 = vcmp.eq.s32.totalorder %v2716, 1
      %vm2753 = vcmp.eq.s32.totalorder %v2717, 1
      %vm2754 = vcmp.eq.s32.totalorder %v2718, 1
      %vm2755 = vcmp.eq.s32.totalorder %v2719, 1
      %vm2756 = vcmp.eq.s32.totalorder %v2720, 1
      %vm2757 = vcmp.eq.s32.totalorder %v2721, 1
      %vm2758 = vcmp.eq.s32.totalorder %v2722, 1
      %vm2759 = vcmp.eq.s32.totalorder %v2723, 1
      %vm2760 = vcmp.eq.s32.totalorder %v2724, 1
      %vm2761 = vcmp.eq.s32.totalorder %v2725, 1
      %vm2762 = vcmp.eq.s32.totalorder %v2726, 1
      %vm2763 = vcmp.eq.s32.totalorder %v2727, 1
      %vm2764 = vcmp.eq.s32.totalorder %v2728, 1
      %vm2765 = vcmp.eq.s32.totalorder %v2729, 1
      %vm2766 = vcmp.eq.s32.totalorder %v2730, 1
      %vm2767 = vcmp.eq.s32.totalorder %v2731, 1
      %vm2768 = vcmp.eq.s32.totalorder %v2732, 1
      %vm2769 = vcmp.eq.s32.totalorder %v2733, 1
      %vm2770 = vcmp.eq.s32.totalorder %v2734, 1
      %vm2771 = vcmp.eq.s32.totalorder %v2735, 1
      %vm2772 = vcmp.eq.s32.totalorder %v2736, 1
      %vm2773 = vcmp.eq.s32.totalorder %v2737, 1
      %vm2774 = vcmp.eq.s32.totalorder %v2738, 1
      %vm2775 = vcmp.eq.s32.totalorder %v2739, 1
      %vm2776 = vcmp.eq.s32.totalorder %v2740, 1
      %vm2777 = vcmp.eq.s32.totalorder %v2741, 1
      %vm2778 = vcmp.eq.s32.totalorder %v2742, 1
      %vm2779 = vcmp.eq.s32.totalorder %v2743, 1
      %vm2780 = vcmp.eq.s32.totalorder %v2744, 1
      %v2781 = vsel %vm2745, %v2708, 0.0
      %v2782 = vsel %vm2746, %v2707, 0.0
      %v2783 = vsel %vm2747, %v2706, 0.0
      %v2784 = vsel %vm2748, %v2705, 0.0
      %v2785 = vsel %vm2749, %v2704, 0.0
      %v2786 = vsel %vm2750, %v2703, 0.0
      %v2787 = vsel %vm2751, %v2702, 0.0
      %v2788 = vsel %vm2752, %v2701, 0.0
      %v2789 = vsel %vm2753, %v2700, 0.0
      %v2790 = vsel %vm2754, %v2699, 0.0
      %v2791 = vsel %vm2755, %v2698, 0.0
      %v2792 = vsel %vm2756, %v2697, 0.0
      %v2793 = vsel %vm2757, %v2696, 0.0
      %v2794 = vsel %vm2758, %v2695, 0.0
      %v2795 = vsel %vm2759, %v2694, 0.0
      %v2796 = vsel %vm2760, %v2693, 0.0
      %v2797 = vsel %vm2761, %v2692, 0.0
      %v2798 = vsel %vm2762, %v2691, 0.0
      %v2799 = vsel %vm2763, %v2690, 0.0
      %v2800 = vsel %vm2764, %v2689, 0.0
      %v2801 = vsel %vm2765, %v2688, 0.0
      %v2802 = vsel %vm2766, %v2687, 0.0
      %v2803 = vsel %vm2767, %v2686, 0.0
      %v2804 = vsel %vm2768, %v2685, 0.0
      %v2805 = vsel %vm2769, %v2684, 0.0
      %v2806 = vsel %vm2770, %v2683, 0.0
      %v2807 = vsel %vm2771, %v2682, 0.0
      %v2808 = vsel %vm2772, %v2681, 0.0
      %v2809 = vsel %vm2773, %v2680, 0.0
      %v2810 = vsel %vm2774, %v2679, 0.0
      %v2811 = vsel %vm2775, %v2678, 0.0
      %v2812 = vsel %vm2776, %v2677, 0.0
      %v2813 = vsel %vm2777, %v2676, 0.0
      %v2814 = vsel %vm2778, %v2675, 0.0
      %v2815 = vsel %vm2779, %v2674, 0.0
      %v2816 = vsel %vm2780, %v2673, 0.0
      %v2817 = vpack.c.bf16 %v2782, %v2781
      %v2818 = vpack.c.bf16 %v2784, %v2783
      %v2819 = vpack.c.bf16 %v2786, %v2785
      %v2820 = vpack.c.bf16 %v2788, %v2787
      %v2821 = vpack.c.bf16 %v2790, %v2789
      %v2822 = vpack.c.bf16 %v2792, %v2791
      %v2823 = vpack.c.bf16 %v2794, %v2793
      %v2824 = vpack.c.bf16 %v2796, %v2795
      %v2825 = vpack.c.bf16 %v2798, %v2797
      %v2826 = vpack.c.bf16 %v2800, %v2799
      %v2827 = vpack.c.bf16 %v2802, %v2801
      %v2828 = vpack.c.bf16 %v2804, %v2803
      %v2829 = vpack.c.bf16 %v2806, %v2805
      %v2830 = vpack.c.bf16 %v2808, %v2807
      %v2831 = vpack.c.bf16 %v2810, %v2809
      %v2832 = vpack.c.bf16 %v2812, %v2811
      %v2833 = vpack.c.bf16 %v2814, %v2813
      %v2834 = vpack.c.bf16 %v2816, %v2815
      %vm2835 = vcmp.lt.s32.totalorder %v2546, 15
      %vm2836 = vcmp.lt.s32.totalorder %v2547, 15
      %vm2837 = vcmp.lt.s32.totalorder %v2548, 15
      %vm2838 = vcmp.lt.s32.totalorder %v2549, 15
      %vm2839 = vcmp.lt.s32.totalorder %v2550, 15
      %vm2840 = vcmp.lt.s32.totalorder %v2551, 15
      %vm2841 = vcmp.lt.s32.totalorder %v2552, 15
      %vm2842 = vcmp.lt.s32.totalorder %v2553, 15
      %vm2843 = vcmp.lt.s32.totalorder %v2554, 15
      %vm2844 = vcmp.lt.s32.totalorder %v2555, 15
      %vm2845 = vcmp.lt.s32.totalorder %v2556, 15
      %vm2846 = vcmp.lt.s32.totalorder %v2557, 15
      %vm2847 = vcmp.lt.s32.totalorder %v2558, 15
      %vm2848 = vcmp.lt.s32.totalorder %v2559, 15
      %vm2849 = vcmp.lt.s32.totalorder %v2560, 15
      %vm2850 = vcmp.lt.s32.totalorder %v2561, 15
      %vm2851 = vcmp.lt.s32.totalorder %v2562, 15
      %vm2852 = vcmp.lt.s32.totalorder %v2563, 15
      %vm2853 = vcmp.lt.s32.totalorder %v2564, 15
      %vm2854 = vcmp.lt.s32.totalorder %v2565, 15
      %vm2855 = vcmp.lt.s32.totalorder %v2566, 15
      %vm2856 = vcmp.lt.s32.totalorder %v2567, 15
      %vm2857 = vcmp.lt.s32.totalorder %v2568, 15
      %vm2858 = vcmp.lt.s32.totalorder %v2569, 15
      %vm2859 = vcmp.lt.s32.totalorder %v2570, 15
      %vm2860 = vcmp.lt.s32.totalorder %v2571, 15
      %vm2861 = vcmp.lt.s32.totalorder %v2572, 15
      %vm2862 = vcmp.lt.s32.totalorder %v2573, 15
      %vm2863 = vcmp.lt.s32.totalorder %v2574, 15
      %vm2864 = vcmp.lt.s32.totalorder %v2575, 15
      %vm2865 = vcmp.lt.s32.totalorder %v2576, 15
      %vm2866 = vcmp.lt.s32.totalorder %v2577, 15
      %vm2867 = vcmp.lt.s32.totalorder %v2578, 15
      %vm2868 = vcmp.lt.s32.totalorder %v2579, 15
      %vm2869 = vcmp.lt.s32.totalorder %v2580, 15
      %vm2870 = vcmp.lt.s32.totalorder %v2581, 15
      %v2871 = vrot.slane %v2077, 1
      %v2872 = vrot.slane %v2078, 1
      %v2873 = vrot.slane %v2079, 1
      %v2874 = vrot.slane %v2080, 1
      %v2875 = vrot.slane %v2081, 1
      %v2876 = vrot.slane %v2082, 1
      %v2877 = vrot.slane %v2083, 1
      %v2878 = vrot.slane %v2084, 1
      %v2879 = vrot.slane %v2085, 1
      %v2880 = vrot.slane %v2086, 1
      %v2881 = vrot.slane %v2087, 1
      %v2882 = vrot.slane %v2088, 1
      %v2883 = vrot.slane %v2089, 1
      %v2884 = vrot.slane %v2090, 1
      %v2885 = vrot.slane %v2091, 1
      %v2886 = vrot.slane %v2092, 1
      %v2887 = vrot.slane %v2093, 1
      %v2888 = vrot.slane %v2094, 1
      %v2889 = vrot.slane %v2095, 1
      %v2890 = vrot.slane %v2096, 1
      %v2891 = vrot.slane %v2097, 1
      %v2892 = vrot.slane %v2098, 1
      %v2893 = vrot.slane %v2099, 1
      %v2894 = vrot.slane %v2100, 1
      %v2895 = vrot.slane %v2101, 1
      %v2896 = vrot.slane %v2102, 1
      %v2897 = vrot.slane %v2103, 1
      %v2898 = vrot.slane %v2104, 1
      %v2899 = vrot.slane %v2105, 1
      %v2900 = vrot.slane %v2106, 1
      %v2901 = vrot.slane %v2107, 1
      %v2902 = vrot.slane %v2108, 1
      %v2903 = vrot.slane %v2109, 1
      %v2904 = vrot.slane %v2110, 1
      %v2905 = vrot.slane %v2111, 1
      %v2906 = vrot.slane %v2112, 1
      %vm2907 = vcmp.lt.s32.totalorder %v2114, 7
      %v2908 = vsel %vm2907, %v2905, %v2906
      %v2909 = vsel %vm2907, %v2904, %v2905
      %v2910 = vsel %vm2907, %v2903, %v2904
      %v2911 = vsel %vm2907, %v2902, %v2903
      %v2912 = vsel %vm2907, %v2901, %v2902
      %v2913 = vsel %vm2907, %v2900, %v2901
      %v2914 = vsel %vm2907, %v2899, %v2900
      %v2915 = vsel %vm2907, %v2898, %v2899
      %v2916 = vsel %vm2907, %v2897, %v2898
      %v2917 = vsel %vm2907, %v2896, %v2897
      %v2918 = vsel %vm2907, %v2895, %v2896
      %v2919 = vsel %vm2907, %v2894, %v2895
      %v2920 = vsel %vm2907, %v2893, %v2894
      %v2921 = vsel %vm2907, %v2892, %v2893
      %v2922 = vsel %vm2907, %v2891, %v2892
      %v2923 = vsel %vm2907, %v2890, %v2891
      %v2924 = vsel %vm2907, %v2889, %v2890
      %v2925 = vsel %vm2907, %v2888, %v2889
      %v2926 = vsel %vm2907, %v2887, %v2888
      %v2927 = vsel %vm2907, %v2886, %v2887
      %v2928 = vsel %vm2907, %v2885, %v2886
      %v2929 = vsel %vm2907, %v2884, %v2885
      %v2930 = vsel %vm2907, %v2883, %v2884
      %v2931 = vsel %vm2907, %v2882, %v2883
      %v2932 = vsel %vm2907, %v2881, %v2882
      %v2933 = vsel %vm2907, %v2880, %v2881
      %v2934 = vsel %vm2907, %v2879, %v2880
      %v2935 = vsel %vm2907, %v2878, %v2879
      %v2936 = vsel %vm2907, %v2877, %v2878
      %v2937 = vsel %vm2907, %v2876, %v2877
      %v2938 = vsel %vm2907, %v2875, %v2876
      %v2939 = vsel %vm2907, %v2874, %v2875
      %v2940 = vsel %vm2907, %v2873, %v2874
      %v2941 = vsel %vm2907, %v2872, %v2873
      %v2942 = vsel %vm2907, %v2871, %v2872
      %v2943 = vsel %vm2907, %v2906, %v2871
      %v2944 = vsel %vm2835, 1, 0
      %v2945 = vsel %vm2836, 1, 0
      %v2946 = vsel %vm2837, 1, 0
      %v2947 = vsel %vm2838, 1, 0
      %v2948 = vsel %vm2839, 1, 0
      %v2949 = vsel %vm2840, 1, 0
      %v2950 = vsel %vm2841, 1, 0
      %v2951 = vsel %vm2842, 1, 0
      %v2952 = vsel %vm2843, 1, 0
      %v2953 = vsel %vm2844, 1, 0
      %v2954 = vsel %vm2845, 1, 0
      %v2955 = vsel %vm2846, 1, 0
      %v2956 = vsel %vm2847, 1, 0
      %v2957 = vsel %vm2848, 1, 0
      %v2958 = vsel %vm2849, 1, 0
      %v2959 = vsel %vm2850, 1, 0
      %v2960 = vsel %vm2851, 1, 0
      %v2961 = vsel %vm2852, 1, 0
      %v2962 = vsel %vm2853, 1, 0
      %v2963 = vsel %vm2854, 1, 0
      %v2964 = vsel %vm2855, 1, 0
      %v2965 = vsel %vm2856, 1, 0
      %v2966 = vsel %vm2857, 1, 0
      %v2967 = vsel %vm2858, 1, 0
      %v2968 = vsel %vm2859, 1, 0
      %v2969 = vsel %vm2860, 1, 0
      %v2970 = vsel %vm2861, 1, 0
      %v2971 = vsel %vm2862, 1, 0
      %v2972 = vsel %vm2863, 1, 0
      %v2973 = vsel %vm2864, 1, 0
      %v2974 = vsel %vm2865, 1, 0
      %v2975 = vsel %vm2866, 1, 0
      %v2976 = vsel %vm2867, 1, 0
      %v2977 = vsel %vm2868, 1, 0
      %v2978 = vsel %vm2869, 1, 0
      %v2979 = vsel %vm2870, 1, 0
      %vm2980 = vcmp.eq.s32.totalorder %v2944, 1
      %vm2981 = vcmp.eq.s32.totalorder %v2945, 1
      %vm2982 = vcmp.eq.s32.totalorder %v2946, 1
      %vm2983 = vcmp.eq.s32.totalorder %v2947, 1
      %vm2984 = vcmp.eq.s32.totalorder %v2948, 1
      %vm2985 = vcmp.eq.s32.totalorder %v2949, 1
      %vm2986 = vcmp.eq.s32.totalorder %v2950, 1
      %vm2987 = vcmp.eq.s32.totalorder %v2951, 1
      %vm2988 = vcmp.eq.s32.totalorder %v2952, 1
      %vm2989 = vcmp.eq.s32.totalorder %v2953, 1
      %vm2990 = vcmp.eq.s32.totalorder %v2954, 1
      %vm2991 = vcmp.eq.s32.totalorder %v2955, 1
      %vm2992 = vcmp.eq.s32.totalorder %v2956, 1
      %vm2993 = vcmp.eq.s32.totalorder %v2957, 1
      %vm2994 = vcmp.eq.s32.totalorder %v2958, 1
      %vm2995 = vcmp.eq.s32.totalorder %v2959, 1
      %vm2996 = vcmp.eq.s32.totalorder %v2960, 1
      %vm2997 = vcmp.eq.s32.totalorder %v2961, 1
      %vm2998 = vcmp.eq.s32.totalorder %v2962, 1
      %vm2999 = vcmp.eq.s32.totalorder %v2963, 1
      %vm3000 = vcmp.eq.s32.totalorder %v2964, 1
      %vm3001 = vcmp.eq.s32.totalorder %v2965, 1
      %vm3002 = vcmp.eq.s32.totalorder %v2966, 1
      %vm3003 = vcmp.eq.s32.totalorder %v2967, 1
      %vm3004 = vcmp.eq.s32.totalorder %v2968, 1
      %vm3005 = vcmp.eq.s32.totalorder %v2969, 1
      %vm3006 = vcmp.eq.s32.totalorder %v2970, 1
      %vm3007 = vcmp.eq.s32.totalorder %v2971, 1
      %vm3008 = vcmp.eq.s32.totalorder %v2972, 1
      %vm3009 = vcmp.eq.s32.totalorder %v2973, 1
      %vm3010 = vcmp.eq.s32.totalorder %v2974, 1
      %vm3011 = vcmp.eq.s32.totalorder %v2975, 1
      %vm3012 = vcmp.eq.s32.totalorder %v2976, 1
      %vm3013 = vcmp.eq.s32.totalorder %v2977, 1
      %vm3014 = vcmp.eq.s32.totalorder %v2978, 1
      %vm3015 = vcmp.eq.s32.totalorder %v2979, 1
      %v3016 = vsel %vm2980, %v2942, 0.0
      %v3017 = vsel %vm2981, %v2941, 0.0
      %v3018 = vsel %vm2982, %v2940, 0.0
      %v3019 = vsel %vm2983, %v2939, 0.0
      %v3020 = vsel %vm2984, %v2938, 0.0
      %v3021 = vsel %vm2985, %v2937, 0.0
      %v3022 = vsel %vm2986, %v2936, 0.0
      %v3023 = vsel %vm2987, %v2935, 0.0
      %v3024 = vsel %vm2988, %v2934, 0.0
      %v3025 = vsel %vm2989, %v2933, 0.0
      %v3026 = vsel %vm2990, %v2932, 0.0
      %v3027 = vsel %vm2991, %v2931, 0.0
      %v3028 = vsel %vm2992, %v2930, 0.0
      %v3029 = vsel %vm2993, %v2929, 0.0
      %v3030 = vsel %vm2994, %v2928, 0.0
      %v3031 = vsel %vm2995, %v2927, 0.0
      %v3032 = vsel %vm2996, %v2926, 0.0
      %v3033 = vsel %vm2997, %v2925, 0.0
      %v3034 = vsel %vm2998, %v2924, 0.0
      %v3035 = vsel %vm2999, %v2923, 0.0
      %v3036 = vsel %vm3000, %v2922, 0.0
      %v3037 = vsel %vm3001, %v2921, 0.0
      %v3038 = vsel %vm3002, %v2920, 0.0
      %v3039 = vsel %vm3003, %v2919, 0.0
      %v3040 = vsel %vm3004, %v2918, 0.0
      %v3041 = vsel %vm3005, %v2917, 0.0
      %v3042 = vsel %vm3006, %v2916, 0.0
      %v3043 = vsel %vm3007, %v2915, 0.0
      %v3044 = vsel %vm3008, %v2914, 0.0
      %v3045 = vsel %vm3009, %v2913, 0.0
      %v3046 = vsel %vm3010, %v2912, 0.0
      %v3047 = vsel %vm3011, %v2911, 0.0
      %v3048 = vsel %vm3012, %v2910, 0.0
      %v3049 = vsel %vm3013, %v2909, 0.0
      %v3050 = vsel %vm3014, %v2908, 0.0
      %v3051 = vsel %vm3015, %v2943, 0.0
      %v3052 = vpack.c.bf16 %v3017, %v3016
      %v3053 = vpack.c.bf16 %v3019, %v3018
      %v3054 = vpack.c.bf16 %v3021, %v3020
      %v3055 = vpack.c.bf16 %v3023, %v3022
      %v3056 = vpack.c.bf16 %v3025, %v3024
      %v3057 = vpack.c.bf16 %v3027, %v3026
      %v3058 = vpack.c.bf16 %v3029, %v3028
      %v3059 = vpack.c.bf16 %v3031, %v3030
      %v3060 = vpack.c.bf16 %v3033, %v3032
      %v3061 = vpack.c.bf16 %v3035, %v3034
      %v3062 = vpack.c.bf16 %v3037, %v3036
      %v3063 = vpack.c.bf16 %v3039, %v3038
      %v3064 = vpack.c.bf16 %v3041, %v3040
      %v3065 = vpack.c.bf16 %v3043, %v3042
      %v3066 = vpack.c.bf16 %v3045, %v3044
      %v3067 = vpack.c.bf16 %v3047, %v3046
      %v3068 = vpack.c.bf16 %v3049, %v3048
      %v3069 = vpack.c.bf16 %v3051, %v3050
      %v3070 = vld [vmem:[%s7] sm:$0xf]
      %v3071 = vld [vmem:[%s7 + $0x4] sm:$0xf]
      %v3072 = vld [vmem:[%s7 + $0x8] sm:$0xf]
      %v3073 = vld [vmem:[%s7 + $0xc] sm:$0xf]
      %v3074 = vld [vmem:[%s7 + $0x10] sm:$0xf]
      %v3075 = vld [vmem:[%s7 + $0x14] sm:$0xf]
      %v3076 = vld [vmem:[%s7 + $0x18] sm:$0xf]
      %v3077 = vld [vmem:[%s7 + $0x1c] sm:$0xf]
      %v3078 = vld [vmem:[%s7 + $0x20] sm:$0xf]
      %v3079 = vld [vmem:[%s7 + $0x24] sm:$0xf]
      %v3080 = vld [vmem:[%s7 + $0x28] sm:$0xf]
      %v3081 = vld [vmem:[%s7 + $0x2c] sm:$0xf]
      %v3082 = vld [vmem:[%s7 + $0x30] sm:$0xf]
      %v3083 = vld [vmem:[%s7 + $0x34] sm:$0xf]
      %v3084 = vld [vmem:[%s7 + $0x38] sm:$0xf]
      %v3085 = vld [vmem:[%s7 + $0x3c] sm:$0xf]
      %s3086 = scalar_lea.vmem %s7, 64
      %v3087 = vld [vmem:[%s3086] sm:$0xf]
      %v3088 = vld [vmem:[%s3086 + $0x4] sm:$0xf]
      %v3089 = vld [vmem:[%s3086 + $0x8] sm:$0xf]
      %v3090 = vld [vmem:[%s3086 + $0xc] sm:$0xf]
      %v3091 = vld [vmem:[%s3086 + $0x10] sm:$0xf]
      %v3092 = vld [vmem:[%s3086 + $0x14] sm:$0xf]
      %v3093 = vld [vmem:[%s3086 + $0x18] sm:$0xf]
      %v3094 = vld [vmem:[%s3086 + $0x1c] sm:$0xf]
      %v3095 = vld [vmem:[%s3086 + $0x20] sm:$0xf]
      %v3096 = vld [vmem:[%s3086 + $0x24] sm:$0xf]
      %v3097 = vld [vmem:[%s3086 + $0x28] sm:$0xf]
      %v3098 = vld [vmem:[%s3086 + $0x2c] sm:$0xf]
      %v3099 = vld [vmem:[%s3086 + $0x30] sm:$0xf]
      %v3100 = vld [vmem:[%s3086 + $0x34] sm:$0xf]
      %v3101 = vld [vmem:[%s3086 + $0x38] sm:$0xf]
      %v3102 = vld [vmem:[%s3086 + $0x3c] sm:$0xf]
      %v3119 = vunpack.c.l.b16 %v3087
      %v3120 = vunpack.c.l.b16 %v3088
      %v3121 = vunpack.c.l.b16 %v3089
      %v3122 = vunpack.c.l.b16 %v3090
      %v3123 = vunpack.c.l.b16 %v3091
      %v3124 = vunpack.c.l.b16 %v3092
      %v3125 = vunpack.c.l.b16 %v3093
      %v3126 = vunpack.c.l.b16 %v3094
      %v3127 = vunpack.c.l.b16 %v3095
      %v3128 = vunpack.c.l.b16 %v3096
      %v3129 = vunpack.c.l.b16 %v3097
      %v3130 = vunpack.c.l.b16 %v3098
      %v3131 = vunpack.c.l.b16 %v3099
      %v3132 = vunpack.c.l.b16 %v3100
      %v3133 = vunpack.c.l.b16 %v3101
      %v3134 = vunpack.c.l.b16 %v3102
      %v3135 = vpack.c.b16 %v3120, %v3119
      %v3136 = vpack.c.b16 %v3122, %v3121
      %v3137 = vpack.c.b16 %v3124, %v3123
      %v3138 = vpack.c.b16 %v3126, %v3125
      %v3139 = vpack.c.b16 %v3128, %v3127
      %v3140 = vpack.c.b16 %v3130, %v3129
      %v3141 = vpack.c.b16 %v3132, %v3131
      %v3142 = vpack.c.b16 %v3134, %v3133
      %3151 = vmatprep.subr.bf16.mxu0 0
      %3152 = vmatpush1.bf16.msra.mxu0 %v3135
      %3153 = vmatprep.subr.bf16.mxu0 0
      %3154 = vmatpush1.bf16.msra.mxu0 %v3136
      %3155 = vmatprep.subr.bf16.mxu0 0
      %3156 = vmatpush1.bf16.msra.mxu0 %v3137
      %3157 = vmatprep.subr.bf16.mxu0 0
      %3158 = vmatpush1.bf16.msra.mxu0 %v3138
      %3159 = vmatprep.subr.bf16.mxu0 0
      %3160 = vmatpush1.bf16.msra.mxu0 %v3139
      %3161 = vmatprep.subr.bf16.mxu0 0
      %3162 = vmatpush1.bf16.msra.mxu0 %v3140
      %3163 = vmatprep.subr.bf16.mxu0 0
      %3164 = vmatpush1.bf16.msra.mxu0 %v3141
      %3165 = vmatprep.subr.bf16.mxu0 0
      %3166 = vmatpush1.bf16.msra.mxu0 %v3142
      %3167 = vmatprep.subr.bf16.mxu0 0
      %3168 = vmatpush1.bf16.msra.mxu0 0
      %3169 = vmatprep.subr.bf16.mxu0 0
      %3170 = vmatpush1.bf16.msra.mxu0 0
      %3171 = vmatprep.subr.bf16.mxu0 0
      %3172 = vmatpush1.bf16.msra.mxu0 0
      %3173 = vmatprep.subr.bf16.mxu0 0
      %3174 = vmatpush1.bf16.msra.mxu0 0
      %3175 = vmatprep.subr.bf16.mxu0 0
      %3176 = vmatpush1.bf16.msra.mxu0 0
      %3177 = vmatprep.subr.bf16.mxu0 0
      %3178 = vmatpush1.bf16.msra.mxu0 0
      %3179 = vmatprep.subr.bf16.mxu0 0
      %3180 = vmatpush1.bf16.msra.mxu0 0
      %3181 = vmatprep.subr.bf16.mxu0 0
      %3182 = vmatpush1.bf16.msra.mxu0 0
      %3183 = vmatprep.mubr.bf16.mxu0 0
      %3184 = vmatmul.mubr.bf16.gmra.mrb[0].mxu0 %v2582
      %v3185 = vpop.f32.mrb[0].mxu0
      %v3186 = vadd.f32 0.0, %v3185
      %v3187 = vpop.f32.mrb[0].mxu0
      %v3188 = vpop.f32.mrb[0].mxu0
      %v3189 = vadd.f32 0.0, %v3188
      %v3190 = vpop.f32.mrb[0].mxu0
      %3191 = vmatprep.mubr.bf16.mxu0 0
      %3192 = vmatmul.mubr.bf16.gmra.mrb[0].mxu0 %v2583
      %v3193 = vpop.f32.mrb[0].mxu0
      %v3194 = vadd.f32 0.0, %v3193
      %v3195 = vpop.f32.mrb[0].mxu0
      %v3196 = vpop.f32.mrb[0].mxu0
      %v3197 = vadd.f32 0.0, %v3196
      %v3198 = vpop.f32.mrb[0].mxu0
      %3199 = vmatprep.mubr.bf16.mxu0 0
      %3200 = vmatmul.mubr.bf16.gmra.mrb[0].mxu0 %v2584
      %v3201 = vpop.f32.mrb[0].mxu0
      %v3202 = vadd.f32 0.0, %v3201
      %v3203 = vpop.f32.mrb[0].mxu0
      %v3204 = vpop.f32.mrb[0].mxu0
      %v3205 = vadd.f32 0.0, %v3204
      %v3206 = vpop.f32.mrb[0].mxu0
      %3207 = vmatprep.mubr.bf16.mxu0 0
      %3208 = vmatmul.mubr.bf16.gmra.mrb[0].mxu0 %v2585
      %v3209 = vpop.f32.mrb[0].mxu0
      %v3210 = vadd.f32 0.0, %v3209
      %v3211 = vpop.f32.mrb[0].mxu0
      %v3212 = vpop.f32.mrb[0].mxu0
      %v3213 = vadd.f32 0.0, %v3212
      %v3214 = vpop.f32.mrb[0].mxu0
      %3215 = vmatprep.mubr.bf16.mxu0 0
      %3216 = vmatmul.mubr.bf16.gmra.mrb[0].mxu0 %v2586
      %v3217 = vpop.f32.mrb[0].mxu0
      %v3218 = vadd.f32 0.0, %v3217
      %v3219 = vpop.f32.mrb[0].mxu0
      %v3220 = vpop.f32.mrb[0].mxu0
      %v3221 = vadd.f32 0.0, %v3220
      %v3222 = vpop.f32.mrb[0].mxu0
      %3223 = vmatprep.mubr.bf16.mxu0 0
      %3224 = vmatmul.mubr.bf16.gmra.mrb[0].mxu0 %v2587
      %v3225 = vpop.f32.mrb[0].mxu0
      %v3226 = vadd.f32 0.0, %v3225
      %v3227 = vpop.f32.mrb[0].mxu0
      %v3228 = vpop.f32.mrb[0].mxu0
      %v3229 = vadd.f32 0.0, %v3228
      %v3230 = vpop.f32.mrb[0].mxu0
      %3231 = vmatprep.mubr.bf16.mxu0 0
      %3232 = vmatmul.mubr.bf16.gmra.mrb[0].mxu0 %v2588
      %v3233 = vpop.f32.mrb[0].mxu0
      %v3234 = vadd.f32 0.0, %v3233
      %v3235 = vpop.f32.mrb[0].mxu0
      %v3236 = vpop.f32.mrb[0].mxu0
      %v3237 = vadd.f32 0.0, %v3236
      %v3238 = vpop.f32.mrb[0].mxu0
      %3239 = vmatprep.mubr.bf16.mxu0 0
      %3240 = vmatmul.mubr.bf16.gmra.mrb[0].mxu0 %v2589
      %v3241 = vpop.f32.mrb[0].mxu0
      %v3242 = vadd.f32 0.0, %v3241
      %v3243 = vpop.f32.mrb[0].mxu0
      %v3244 = vpop.f32.mrb[0].mxu0
      %v3245 = vadd.f32 0.0, %v3244
      %v3246 = vpop.f32.mrb[0].mxu0
      %3247 = vmatprep.mubr.bf16.mxu0 0
      %3248 = vmatmul.mubr.bf16.gmra.mrb[0].mxu0 %v2590
      %v3249 = vpop.f32.mrb[0].mxu0
      %v3250 = vadd.f32 0.0, %v3249
      %v3251 = vpop.f32.mrb[0].mxu0
      %v3252 = vpop.f32.mrb[0].mxu0
      %v3253 = vadd.f32 0.0, %v3252
      %v3254 = vpop.f32.mrb[0].mxu0
      %3255 = vmatprep.mubr.bf16.mxu0 0
      %3256 = vmatmul.mubr.bf16.gmra.mrb[0].mxu0 %v2591
      %v3257 = vpop.f32.mrb[0].mxu0
      %v3258 = vadd.f32 0.0, %v3257
      %v3259 = vpop.f32.mrb[0].mxu0
      %v3260 = vpop.f32.mrb[0].mxu0
      %v3261 = vadd.f32 0.0, %v3260
      %v3262 = vpop.f32.mrb[0].mxu0
      %3263 = vmatprep.mubr.bf16.mxu0 0
      %3264 = vmatmul.mubr.bf16.gmra.mrb[0].mxu0 %v2592
      %v3265 = vpop.f32.mrb[0].mxu0
      %v3266 = vadd.f32 0.0, %v3265
      %v3267 = vpop.f32.mrb[0].mxu0
      %v3268 = vpop.f32.mrb[0].mxu0
      %v3269 = vadd.f32 0.0, %v3268
      %v3270 = vpop.f32.mrb[0].mxu0
      %3271 = vmatprep.mubr.bf16.mxu0 0
      %3272 = vmatmul.mubr.bf16.gmra.mrb[0].mxu0 %v2593
      %v3273 = vpop.f32.mrb[0].mxu0
      %v3274 = vadd.f32 0.0, %v3273
      %v3275 = vpop.f32.mrb[0].mxu0
      %v3276 = vpop.f32.mrb[0].mxu0
      %v3277 = vadd.f32 0.0, %v3276
      %v3278 = vpop.f32.mrb[0].mxu0
      %3279 = vmatprep.mubr.bf16.mxu0 0
      %3280 = vmatmul.mubr.bf16.gmra.mrb[0].mxu0 %v2594
      %v3281 = vpop.f32.mrb[0].mxu0
      %v3282 = vadd.f32 0.0, %v3281
      %v3283 = vpop.f32.mrb[0].mxu0
      %v3284 = vpop.f32.mrb[0].mxu0
      %v3285 = vadd.f32 0.0, %v3284
      %v3286 = vpop.f32.mrb[0].mxu0
      %3287 = vmatprep.mubr.bf16.mxu0 0
      %3288 = vmatmul.mubr.bf16.gmra.mrb[0].mxu0 %v2595
      %v3289 = vpop.f32.mrb[0].mxu0
      %v3290 = vadd.f32 0.0, %v3289
      %v3291 = vpop.f32.mrb[0].mxu0
      %v3292 = vpop.f32.mrb[0].mxu0
      %v3293 = vadd.f32 0.0, %v3292
      %v3294 = vpop.f32.mrb[0].mxu0
      %3295 = vmatprep.mubr.bf16.mxu0 0
      %3296 = vmatmul.mubr.bf16.gmra.mrb[0].mxu0 %v2596
      %v3297 = vpop.f32.mrb[0].mxu0
      %v3298 = vadd.f32 0.0, %v3297
      %v3299 = vpop.f32.mrb[0].mxu0
      %v3300 = vpop.f32.mrb[0].mxu0
      %v3301 = vadd.f32 0.0, %v3300
      %v3302 = vpop.f32.mrb[0].mxu0
      %3303 = vmatprep.mubr.bf16.mxu0 0
      %3304 = vmatmul.mubr.bf16.gmra.mrb[0].mxu0 %v2597
      %v3305 = vpop.f32.mrb[0].mxu0
      %v3306 = vadd.f32 0.0, %v3305
      %v3307 = vpop.f32.mrb[0].mxu0
      %v3308 = vpop.f32.mrb[0].mxu0
      %v3309 = vadd.f32 0.0, %v3308
      %v3310 = vpop.f32.mrb[0].mxu0
      %3311 = vdwg.mxu0
      %v3328 = vunpack.c.l.b16 %v3070
      %v3329 = vunpack.c.l.b16 %v3071
      %v3330 = vunpack.c.l.b16 %v3072
      %v3331 = vunpack.c.l.b16 %v3073
      %v3332 = vunpack.c.l.b16 %v3074
      %v3333 = vunpack.c.l.b16 %v3075
      %v3334 = vunpack.c.l.b16 %v3076
      %v3335 = vunpack.c.l.b16 %v3077
      %v3336 = vunpack.c.l.b16 %v3078
      %v3337 = vunpack.c.l.b16 %v3079
      %v3338 = vunpack.c.l.b16 %v3080
      %v3339 = vunpack.c.l.b16 %v3081
      %v3340 = vunpack.c.l.b16 %v3082
      %v3341 = vunpack.c.l.b16 %v3083
      %v3342 = vunpack.c.l.b16 %v3084
      %v3343 = vunpack.c.l.b16 %v3085
      %v3344 = vpack.c.b16 %v3329, %v3328
      %v3345 = vpack.c.b16 %v3331, %v3330
      %v3346 = vpack.c.b16 %v3333, %v3332
      %v3347 = vpack.c.b16 %v3335, %v3334
      %v3348 = vpack.c.b16 %v3337, %v3336
      %v3349 = vpack.c.b16 %v3339, %v3338
      %v3350 = vpack.c.b16 %v3341, %v3340
      %v3351 = vpack.c.b16 %v3343, %v3342
      %3360 = vmatprep.subr.bf16.mxu0 0
      %3361 = vmatpush1.bf16.msra.mxu0 %v3344
      %3362 = vmatprep.subr.bf16.mxu0 0
      %3363 = vmatpush1.bf16.msra.mxu0 %v3345
      %3364 = vmatprep.subr.bf16.mxu0 0
      %3365 = vmatpush1.bf16.msra.mxu0 %v3346
      %3366 = vmatprep.subr.bf16.mxu0 0
      %3367 = vmatpush1.bf16.msra.mxu0 %v3347
      %3368 = vmatprep.subr.bf16.mxu0 0
      %3369 = vmatpush1.bf16.msra.mxu0 %v3348
      %3370 = vmatprep.subr.bf16.mxu0 0
      %3371 = vmatpush1.bf16.msra.mxu0 %v3349
      %3372 = vmatprep.subr.bf16.mxu0 0
      %3373 = vmatpush1.bf16.msra.mxu0 %v3350
      %3374 = vmatprep.subr.bf16.mxu0 0
      %3375 = vmatpush1.bf16.msra.mxu0 %v3351
      %3376 = vmatprep.subr.bf16.mxu0 0
      %3377 = vmatpush1.bf16.msra.mxu0 0
      %3378 = vmatprep.subr.bf16.mxu0 0
      %3379 = vmatpush1.bf16.msra.mxu0 0
      %3380 = vmatprep.subr.bf16.mxu0 0
      %3381 = vmatpush1.bf16.msra.mxu0 0
      %3382 = vmatprep.subr.bf16.mxu0 0
      %3383 = vmatpush1.bf16.msra.mxu0 0
      %3384 = vmatprep.subr.bf16.mxu0 0
      %3385 = vmatpush1.bf16.msra.mxu0 0
      %3386 = vmatprep.subr.bf16.mxu0 0
      %3387 = vmatpush1.bf16.msra.mxu0 0
      %3388 = vmatprep.subr.bf16.mxu0 0
      %3389 = vmatpush1.bf16.msra.mxu0 0
      %3390 = vmatprep.subr.bf16.mxu0 0
      %3391 = vmatpush1.bf16.msra.mxu0 0
      %3392 = vmatprep.mubr.bf16.mxu0 0
      %3393 = vmatmul.mubr.bf16.gmra.mrb[0].mxu0 %v2817
      %v3394 = vpop.f32.mrb[0].mxu0
      %v3395 = vadd.f32 %v3186, %v3394
      %v3396 = vpop.f32.mrb[0].mxu0
      %v3397 = vpop.f32.mrb[0].mxu0
      %v3398 = vadd.f32 %v3189, %v3397
      %v3399 = vpop.f32.mrb[0].mxu0
      %3400 = vmatprep.mubr.bf16.mxu0 0
      %3401 = vmatmul.mubr.bf16.gmra.mrb[0].mxu0 %v2818
      %v3402 = vpop.f32.mrb[0].mxu0
      %v3403 = vadd.f32 %v3194, %v3402
      %v3404 = vpop.f32.mrb[0].mxu0
      %v3405 = vpop.f32.mrb[0].mxu0
      %v3406 = vadd.f32 %v3197, %v3405
      %v3407 = vpop.f32.mrb[0].mxu0
      %3408 = vmatprep.mubr.bf16.mxu0 0
      %3409 = vmatmul.mubr.bf16.gmra.mrb[0].mxu0 %v2819
      %v3410 = vpop.f32.mrb[0].mxu0
      %v3411 = vadd.f32 %v3202, %v3410
      %v3412 = vpop.f32.mrb[0].mxu0
      %v3413 = vpop.f32.mrb[0].mxu0
      %v3414 = vadd.f32 %v3205, %v3413
      %v3415 = vpop.f32.mrb[0].mxu0
      %3416 = vmatprep.mubr.bf16.mxu0 0
      %3417 = vmatmul.mubr.bf16.gmra.mrb[0].mxu0 %v2820
      %v3418 = vpop.f32.mrb[0].mxu0
      %v3419 = vadd.f32 %v3210, %v3418
      %v3420 = vpop.f32.mrb[0].mxu0
      %v3421 = vpop.f32.mrb[0].mxu0
      %v3422 = vadd.f32 %v3213, %v3421
      %v3423 = vpop.f32.mrb[0].mxu0
      %3424 = vmatprep.mubr.bf16.mxu0 0
      %3425 = vmatmul.mubr.bf16.gmra.mrb[0].mxu0 %v2821
      %v3426 = vpop.f32.mrb[0].mxu0
      %v3427 = vadd.f32 %v3218, %v3426
      %v3428 = vpop.f32.mrb[0].mxu0
      %v3429 = vpop.f32.mrb[0].mxu0
      %v3430 = vadd.f32 %v3221, %v3429
      %v3431 = vpop.f32.mrb[0].mxu0
      %3432 = vmatprep.mubr.bf16.mxu0 0
      %3433 = vmatmul.mubr.bf16.gmra.mrb[0].mxu0 %v2822
      %v3434 = vpop.f32.mrb[0].mxu0
      %v3435 = vadd.f32 %v3226, %v3434
      %v3436 = vpop.f32.mrb[0].mxu0
      %v3437 = vpop.f32.mrb[0].mxu0
      %v3438 = vadd.f32 %v3229, %v3437
      %v3439 = vpop.f32.mrb[0].mxu0
      %3440 = vmatprep.mubr.bf16.mxu0 0
      %3441 = vmatmul.mubr.bf16.gmra.mrb[0].mxu0 %v2823
      %v3442 = vpop.f32.mrb[0].mxu0
      %v3443 = vadd.f32 %v3234, %v3442
      %v3444 = vpop.f32.mrb[0].mxu0
      %v3445 = vpop.f32.mrb[0].mxu0
      %v3446 = vadd.f32 %v3237, %v3445
      %v3447 = vpop.f32.mrb[0].mxu0
      %3448 = vmatprep.mubr.bf16.mxu0 0
      %3449 = vmatmul.mubr.bf16.gmra.mrb[0].mxu0 %v2824
      %v3450 = vpop.f32.mrb[0].mxu0
      %v3451 = vadd.f32 %v3242, %v3450
      %v3452 = vpop.f32.mrb[0].mxu0
      %v3453 = vpop.f32.mrb[0].mxu0
      %v3454 = vadd.f32 %v3245, %v3453
      %v3455 = vpop.f32.mrb[0].mxu0
      %3456 = vmatprep.mubr.bf16.mxu0 0
      %3457 = vmatmul.mubr.bf16.gmra.mrb[0].mxu0 %v2825
      %v3458 = vpop.f32.mrb[0].mxu0
      %v3459 = vadd.f32 %v3250, %v3458
      %v3460 = vpop.f32.mrb[0].mxu0
      %v3461 = vpop.f32.mrb[0].mxu0
      %v3462 = vadd.f32 %v3253, %v3461
      %v3463 = vpop.f32.mrb[0].mxu0
      %3464 = vmatprep.mubr.bf16.mxu0 0
      %3465 = vmatmul.mubr.bf16.gmra.mrb[0].mxu0 %v2826
      %v3466 = vpop.f32.mrb[0].mxu0
      %v3467 = vadd.f32 %v3258, %v3466
      %v3468 = vpop.f32.mrb[0].mxu0
      %v3469 = vpop.f32.mrb[0].mxu0
      %v3470 = vadd.f32 %v3261, %v3469
      %v3471 = vpop.f32.mrb[0].mxu0
      %3472 = vmatprep.mubr.bf16.mxu0 0
      %3473 = vmatmul.mubr.bf16.gmra.mrb[0].mxu0 %v2827
      %v3474 = vpop.f32.mrb[0].mxu0
      %v3475 = vadd.f32 %v3266, %v3474
      %v3476 = vpop.f32.mrb[0].mxu0
      %v3477 = vpop.f32.mrb[0].mxu0
      %v3478 = vadd.f32 %v3269, %v3477
      %v3479 = vpop.f32.mrb[0].mxu0
      %3480 = vmatprep.mubr.bf16.mxu0 0
      %3481 = vmatmul.mubr.bf16.gmra.mrb[0].mxu0 %v2828
      %v3482 = vpop.f32.mrb[0].mxu0
      %v3483 = vadd.f32 %v3274, %v3482
      %v3484 = vpop.f32.mrb[0].mxu0
      %v3485 = vpop.f32.mrb[0].mxu0
      %v3486 = vadd.f32 %v3277, %v3485
      %v3487 = vpop.f32.mrb[0].mxu0
      %3488 = vmatprep.mubr.bf16.mxu0 0
      %3489 = vmatmul.mubr.bf16.gmra.mrb[0].mxu0 %v2829
      %v3490 = vpop.f32.mrb[0].mxu0
      %v3491 = vadd.f32 %v3282, %v3490
      %v3492 = vpop.f32.mrb[0].mxu0
      %v3493 = vpop.f32.mrb[0].mxu0
      %v3494 = vadd.f32 %v3285, %v3493
      %v3495 = vpop.f32.mrb[0].mxu0
      %3496 = vmatprep.mubr.bf16.mxu0 0
      %3497 = vmatmul.mubr.bf16.gmra.mrb[0].mxu0 %v2830
      %v3498 = vpop.f32.mrb[0].mxu0
      %v3499 = vadd.f32 %v3290, %v3498
      %v3500 = vpop.f32.mrb[0].mxu0
      %v3501 = vpop.f32.mrb[0].mxu0
      %v3502 = vadd.f32 %v3293, %v3501
      %v3503 = vpop.f32.mrb[0].mxu0
      %3504 = vmatprep.mubr.bf16.mxu0 0
      %3505 = vmatmul.mubr.bf16.gmra.mrb[0].mxu0 %v2831
      %v3506 = vpop.f32.mrb[0].mxu0
      %v3507 = vadd.f32 %v3298, %v3506
      %v3508 = vpop.f32.mrb[0].mxu0
      %v3509 = vpop.f32.mrb[0].mxu0
      %v3510 = vadd.f32 %v3301, %v3509
      %v3511 = vpop.f32.mrb[0].mxu0
      %3512 = vmatprep.mubr.bf16.mxu0 0
      %3513 = vmatmul.mubr.bf16.gmra.mrb[0].mxu0 %v2832
      %v3514 = vpop.f32.mrb[0].mxu0
      %v3515 = vadd.f32 %v3306, %v3514
      %v3516 = vpop.f32.mrb[0].mxu0
      %v3517 = vpop.f32.mrb[0].mxu0
      %v3518 = vadd.f32 %v3309, %v3517
      %v3519 = vpop.f32.mrb[0].mxu0
      %3520 = vdwg.mxu0
      %s3521 = scalar_lea.vmem %s7, 128
      %v3522 = vld [vmem:[%s3521] sm:$0xf]
      %v3523 = vld [vmem:[%s3521 + $0x4] sm:$0xf]
      %v3524 = vld [vmem:[%s3521 + $0x8] sm:$0xf]
      %v3525 = vld [vmem:[%s3521 + $0xc] sm:$0xf]
      %v3526 = vld [vmem:[%s3521 + $0x10] sm:$0xf]
      %v3527 = vld [vmem:[%s3521 + $0x14] sm:$0xf]
      %v3528 = vld [vmem:[%s3521 + $0x18] sm:$0xf]
      %v3529 = vld [vmem:[%s3521 + $0x1c] sm:$0xf]
      %v3530 = vld [vmem:[%s3521 + $0x20] sm:$0xf]
      %v3531 = vld [vmem:[%s3521 + $0x24] sm:$0xf]
      %v3532 = vld [vmem:[%s3521 + $0x28] sm:$0xf]
      %v3533 = vld [vmem:[%s3521 + $0x2c] sm:$0xf]
      %v3534 = vld [vmem:[%s3521 + $0x30] sm:$0xf]
      %v3535 = vld [vmem:[%s3521 + $0x34] sm:$0xf]
      %v3536 = vld [vmem:[%s3521 + $0x38] sm:$0xf]
      %v3537 = vld [vmem:[%s3521 + $0x3c] sm:$0xf]
      %v3554 = vunpack.c.l.b16 %v3522
      %v3555 = vunpack.c.l.b16 %v3523
      %v3556 = vunpack.c.l.b16 %v3524
      %v3557 = vunpack.c.l.b16 %v3525
      %v3558 = vunpack.c.l.b16 %v3526
      %v3559 = vunpack.c.l.b16 %v3527
      %v3560 = vunpack.c.l.b16 %v3528
      %v3561 = vunpack.c.l.b16 %v3529
      %v3562 = vunpack.c.l.b16 %v3530
      %v3563 = vunpack.c.l.b16 %v3531
      %v3564 = vunpack.c.l.b16 %v3532
      %v3565 = vunpack.c.l.b16 %v3533
      %v3566 = vunpack.c.l.b16 %v3534
      %v3567 = vunpack.c.l.b16 %v3535
      %v3568 = vunpack.c.l.b16 %v3536
      %v3569 = vunpack.c.l.b16 %v3537
      %v3570 = vpack.c.b16 %v3555, %v3554
      %v3571 = vpack.c.b16 %v3557, %v3556
      %v3572 = vpack.c.b16 %v3559, %v3558
      %v3573 = vpack.c.b16 %v3561, %v3560
      %v3574 = vpack.c.b16 %v3563, %v3562
      %v3575 = vpack.c.b16 %v3565, %v3564
      %v3576 = vpack.c.b16 %v3567, %v3566
      %v3577 = vpack.c.b16 %v3569, %v3568
      %3586 = vmatprep.subr.bf16.mxu0 0
      %3587 = vmatpush1.bf16.msra.mxu0 %v3570
      %3588 = vmatprep.subr.bf16.mxu0 0
      %3589 = vmatpush1.bf16.msra.mxu0 %v3571
      %3590 = vmatprep.subr.bf16.mxu0 0
      %3591 = vmatpush1.bf16.msra.mxu0 %v3572
      %3592 = vmatprep.subr.bf16.mxu0 0
      %3593 = vmatpush1.bf16.msra.mxu0 %v3573
      %3594 = vmatprep.subr.bf16.mxu0 0
      %3595 = vmatpush1.bf16.msra.mxu0 %v3574
      %3596 = vmatprep.subr.bf16.mxu0 0
      %3597 = vmatpush1.bf16.msra.mxu0 %v3575
      %3598 = vmatprep.subr.bf16.mxu0 0
      %3599 = vmatpush1.bf16.msra.mxu0 %v3576
      %3600 = vmatprep.subr.bf16.mxu0 0
      %3601 = vmatpush1.bf16.msra.mxu0 %v3577
      %3602 = vmatprep.subr.bf16.mxu0 0
      %3603 = vmatpush1.bf16.msra.mxu0 0
      %3604 = vmatprep.subr.bf16.mxu0 0
      %3605 = vmatpush1.bf16.msra.mxu0 0
      %3606 = vmatprep.subr.bf16.mxu0 0
      %3607 = vmatpush1.bf16.msra.mxu0 0
      %3608 = vmatprep.subr.bf16.mxu0 0
      %3609 = vmatpush1.bf16.msra.mxu0 0
      %3610 = vmatprep.subr.bf16.mxu0 0
      %3611 = vmatpush1.bf16.msra.mxu0 0
      %3612 = vmatprep.subr.bf16.mxu0 0
      %3613 = vmatpush1.bf16.msra.mxu0 0
      %3614 = vmatprep.subr.bf16.mxu0 0
      %3615 = vmatpush1.bf16.msra.mxu0 0
      %3616 = vmatprep.subr.bf16.mxu0 0
      %3617 = vmatpush1.bf16.msra.mxu0 0
      %3618 = vmatprep.mubr.bf16.mxu0 0
      %3619 = vmatmul.mubr.bf16.gmra.mrb[0].mxu0 %v3052
      %v3620 = vpop.f32.mrb[0].mxu0
      %v3621 = vadd.f32 0.0, %v3620
      %v3622 = vpop.f32.mrb[0].mxu0
      %v3623 = vpop.f32.mrb[0].mxu0
      %v3624 = vadd.f32 0.0, %v3623
      %v3625 = vpop.f32.mrb[0].mxu0
      %3626 = vmatprep.mubr.bf16.mxu0 0
      %3627 = vmatmul.mubr.bf16.gmra.mrb[0].mxu0 %v3053
      %v3628 = vpop.f32.mrb[0].mxu0
      %v3629 = vadd.f32 0.0, %v3628
      %v3630 = vpop.f32.mrb[0].mxu0
      %v3631 = vpop.f32.mrb[0].mxu0
      %v3632 = vadd.f32 0.0, %v3631
      %v3633 = vpop.f32.mrb[0].mxu0
      %3634 = vmatprep.mubr.bf16.mxu0 0
      %3635 = vmatmul.mubr.bf16.gmra.mrb[0].mxu0 %v3054
      %v3636 = vpop.f32.mrb[0].mxu0
      %v3637 = vadd.f32 0.0, %v3636
      %v3638 = vpop.f32.mrb[0].mxu0
      %v3639 = vpop.f32.mrb[0].mxu0
      %v3640 = vadd.f32 0.0, %v3639
      %v3641 = vpop.f32.mrb[0].mxu0
      %3642 = vmatprep.mubr.bf16.mxu0 0
      %3643 = vmatmul.mubr.bf16.gmra.mrb[0].mxu0 %v3055
      %v3644 = vpop.f32.mrb[0].mxu0
      %v3645 = vadd.f32 0.0, %v3644
      %v3646 = vpop.f32.mrb[0].mxu0
      %v3647 = vpop.f32.mrb[0].mxu0
      %v3648 = vadd.f32 0.0, %v3647
      %v3649 = vpop.f32.mrb[0].mxu0
      %3650 = vmatprep.mubr.bf16.mxu0 0
      %3651 = vmatmul.mubr.bf16.gmra.mrb[0].mxu0 %v3056
      %v3652 = vpop.f32.mrb[0].mxu0
      %v3653 = vadd.f32 0.0, %v3652
      %v3654 = vpop.f32.mrb[0].mxu0
      %v3655 = vpop.f32.mrb[0].mxu0
      %v3656 = vadd.f32 0.0, %v3655
      %v3657 = vpop.f32.mrb[0].mxu0
      %3658 = vmatprep.mubr.bf16.mxu0 0
      %3659 = vmatmul.mubr.bf16.gmra.mrb[0].mxu0 %v3057
      %v3660 = vpop.f32.mrb[0].mxu0
      %v3661 = vadd.f32 0.0, %v3660
      %v3662 = vpop.f32.mrb[0].mxu0
      %v3663 = vpop.f32.mrb[0].mxu0
      %v3664 = vadd.f32 0.0, %v3663
      %v3665 = vpop.f32.mrb[0].mxu0
      %3666 = vmatprep.mubr.bf16.mxu0 0
      %3667 = vmatmul.mubr.bf16.gmra.mrb[0].mxu0 %v3058
      %v3668 = vpop.f32.mrb[0].mxu0
      %v3669 = vadd.f32 0.0, %v3668
      %v3670 = vpop.f32.mrb[0].mxu0
      %v3671 = vpop.f32.mrb[0].mxu0
      %v3672 = vadd.f32 0.0, %v3671
      %v3673 = vpop.f32.mrb[0].mxu0
      %3674 = vmatprep.mubr.bf16.mxu0 0
      %3675 = vmatmul.mubr.bf16.gmra.mrb[0].mxu0 %v3059
      %v3676 = vpop.f32.mrb[0].mxu0
      %v3677 = vadd.f32 0.0, %v3676
      %v3678 = vpop.f32.mrb[0].mxu0
      %v3679 = vpop.f32.mrb[0].mxu0
      %v3680 = vadd.f32 0.0, %v3679
      %v3681 = vpop.f32.mrb[0].mxu0
      %3682 = vmatprep.mubr.bf16.mxu0 0
      %3683 = vmatmul.mubr.bf16.gmra.mrb[0].mxu0 %v3060
      %v3684 = vpop.f32.mrb[0].mxu0
      %v3685 = vadd.f32 0.0, %v3684
      %v3686 = vpop.f32.mrb[0].mxu0
      %v3687 = vpop.f32.mrb[0].mxu0
      %v3688 = vadd.f32 0.0, %v3687
      %v3689 = vpop.f32.mrb[0].mxu0
      %3690 = vmatprep.mubr.bf16.mxu0 0
      %3691 = vmatmul.mubr.bf16.gmra.mrb[0].mxu0 %v3061
      %v3692 = vpop.f32.mrb[0].mxu0
      %v3693 = vadd.f32 0.0, %v3692
      %v3694 = vpop.f32.mrb[0].mxu0
      %v3695 = vpop.f32.mrb[0].mxu0
      %v3696 = vadd.f32 0.0, %v3695
      %v3697 = vpop.f32.mrb[0].mxu0
      %3698 = vmatprep.mubr.bf16.mxu0 0
      %3699 = vmatmul.mubr.bf16.gmra.mrb[0].mxu0 %v3062
      %v3700 = vpop.f32.mrb[0].mxu0
      %v3701 = vadd.f32 0.0, %v3700
      %v3702 = vpop.f32.mrb[0].mxu0
      %v3703 = vpop.f32.mrb[0].mxu0
      %v3704 = vadd.f32 0.0, %v3703
      %v3705 = vpop.f32.mrb[0].mxu0
      %3706 = vmatprep.mubr.bf16.mxu0 0
      %3707 = vmatmul.mubr.bf16.gmra.mrb[0].mxu0 %v3063
      %v3708 = vpop.f32.mrb[0].mxu0
      %v3709 = vadd.f32 0.0, %v3708
      %v3710 = vpop.f32.mrb[0].mxu0
      %v3711 = vpop.f32.mrb[0].mxu0
      %v3712 = vadd.f32 0.0, %v3711
      %v3713 = vpop.f32.mrb[0].mxu0
      %3714 = vmatprep.mubr.bf16.mxu0 0
      %3715 = vmatmul.mubr.bf16.gmra.mrb[0].mxu0 %v3064
      %v3716 = vpop.f32.mrb[0].mxu0
      %v3717 = vadd.f32 0.0, %v3716
      %v3718 = vpop.f32.mrb[0].mxu0
      %v3719 = vpop.f32.mrb[0].mxu0
      %v3720 = vadd.f32 0.0, %v3719
      %v3721 = vpop.f32.mrb[0].mxu0
      %3722 = vmatprep.mubr.bf16.mxu0 0
      %3723 = vmatmul.mubr.bf16.gmra.mrb[0].mxu0 %v3065
      %v3724 = vpop.f32.mrb[0].mxu0
      %v3725 = vadd.f32 0.0, %v3724
      %v3726 = vpop.f32.mrb[0].mxu0
      %v3727 = vpop.f32.mrb[0].mxu0
      %v3728 = vadd.f32 0.0, %v3727
      %v3729 = vpop.f32.mrb[0].mxu0
      %3730 = vmatprep.mubr.bf16.mxu0 0
      %3731 = vmatmul.mubr.bf16.gmra.mrb[0].mxu0 %v3066
      %v3732 = vpop.f32.mrb[0].mxu0
      %v3733 = vadd.f32 0.0, %v3732
      %v3734 = vpop.f32.mrb[0].mxu0
      %v3735 = vpop.f32.mrb[0].mxu0
      %v3736 = vadd.f32 0.0, %v3735
      %v3737 = vpop.f32.mrb[0].mxu0
      %3738 = vmatprep.mubr.bf16.mxu0 0
      %3739 = vmatmul.mubr.bf16.gmra.mrb[0].mxu0 %v3067
      %v3740 = vpop.f32.mrb[0].mxu0
      %v3741 = vadd.f32 0.0, %v3740
      %v3742 = vpop.f32.mrb[0].mxu0
      %v3743 = vpop.f32.mrb[0].mxu0
      %v3744 = vadd.f32 0.0, %v3743
      %v3745 = vpop.f32.mrb[0].mxu0
      %3746 = vdwg.mxu0
      %v3747 = vadd.f32 %v3395, %v3621
      %v3748 = vadd.f32 %v3398, %v3624
      %v3749 = vadd.f32 %v3403, %v3629
      %v3750 = vadd.f32 %v3406, %v3632
      %v3751 = vadd.f32 %v3411, %v3637
      %v3752 = vadd.f32 %v3414, %v3640
      %v3753 = vadd.f32 %v3419, %v3645
      %v3754 = vadd.f32 %v3422, %v3648
      %v3755 = vadd.f32 %v3427, %v3653
      %v3756 = vadd.f32 %v3430, %v3656
      %v3757 = vadd.f32 %v3435, %v3661
      %v3758 = vadd.f32 %v3438, %v3664
      %v3759 = vadd.f32 %v3443, %v3669
      %v3760 = vadd.f32 %v3446, %v3672
      %v3761 = vadd.f32 %v3451, %v3677
      %v3762 = vadd.f32 %v3454, %v3680
      %v3763 = vadd.f32 %v3459, %v3685
      %v3764 = vadd.f32 %v3462, %v3688
      %v3765 = vadd.f32 %v3467, %v3693
      %v3766 = vadd.f32 %v3470, %v3696
      %v3767 = vadd.f32 %v3475, %v3701
      %v3768 = vadd.f32 %v3478, %v3704
      %v3769 = vadd.f32 %v3483, %v3709
      %v3770 = vadd.f32 %v3486, %v3712
      %v3771 = vadd.f32 %v3491, %v3717
      %v3772 = vadd.f32 %v3494, %v3720
      %v3773 = vadd.f32 %v3499, %v3725
      %v3774 = vadd.f32 %v3502, %v3728
      %v3775 = vadd.f32 %v3507, %v3733
      %v3776 = vadd.f32 %v3510, %v3736
      %v3777 = vadd.f32 %v3515, %v3741
      %v3778 = vadd.f32 %v3518, %v3744
      %s3779 = scalar_lea.vmem %s7, 192
      %v3780 = vld [vmem:[%s3779] sm:$0xf]
      %v3781 = vld [vmem:[%s3779 + $0x4] sm:$0xf]
      %v3782 = vld [vmem:[%s3779 + $0x8] sm:$0xf]
      %v3783 = vld [vmem:[%s3779 + $0xc] sm:$0xf]
      %v3784 = vld [vmem:[%s3779 + $0x10] sm:$0xf]
      %v3785 = vld [vmem:[%s3779 + $0x14] sm:$0xf]
      %v3786 = vld [vmem:[%s3779 + $0x18] sm:$0xf]
      %v3787 = vld [vmem:[%s3779 + $0x1c] sm:$0xf]
      %v3788 = vld [vmem:[%s3779 + $0x20] sm:$0xf]
      %v3789 = vld [vmem:[%s3779 + $0x24] sm:$0xf]
      %v3790 = vld [vmem:[%s3779 + $0x28] sm:$0xf]
      %v3791 = vld [vmem:[%s3779 + $0x2c] sm:$0xf]
      %v3792 = vld [vmem:[%s3779 + $0x30] sm:$0xf]
      %v3793 = vld [vmem:[%s3779 + $0x34] sm:$0xf]
      %v3794 = vld [vmem:[%s3779 + $0x38] sm:$0xf]
      %v3795 = vld [vmem:[%s3779 + $0x3c] sm:$0xf]
      %v3812 = vunpack.c.l.b16 %v3780
      %v3813 = vunpack.c.l.b16 %v3781
      %v3814 = vunpack.c.l.b16 %v3782
      %v3815 = vunpack.c.l.b16 %v3783
      %v3816 = vunpack.c.l.b16 %v3784
      %v3817 = vunpack.c.l.b16 %v3785
      %v3818 = vunpack.c.l.b16 %v3786
      %v3819 = vunpack.c.l.b16 %v3787
      %v3820 = vunpack.c.l.b16 %v3788
      %v3821 = vunpack.c.l.b16 %v3789
      %v3822 = vunpack.c.l.b16 %v3790
      %v3823 = vunpack.c.l.b16 %v3791
      %v3824 = vunpack.c.l.b16 %v3792
      %v3825 = vunpack.c.l.b16 %v3793
      %v3826 = vunpack.c.l.b16 %v3794
      %v3827 = vunpack.c.l.b16 %v3795
      %v3828 = vpack.c.b16 %v3813, %v3812
      %v3829 = vpack.c.b16 %v3815, %v3814
      %v3830 = vpack.c.b16 %v3817, %v3816
      %v3831 = vpack.c.b16 %v3819, %v3818
      %v3832 = vpack.c.b16 %v3821, %v3820
      %v3833 = vpack.c.b16 %v3823, %v3822
      %v3834 = vpack.c.b16 %v3825, %v3824
      %v3835 = vpack.c.b16 %v3827, %v3826
      %3844 = vmatprep.subr.bf16.mxu0 0
      %3845 = vmatpush1.bf16.msra.mxu0 %v3828
      %3846 = vmatprep.subr.bf16.mxu0 0
      %3847 = vmatpush1.bf16.msra.mxu0 %v3829
      %3848 = vmatprep.subr.bf16.mxu0 0
      %3849 = vmatpush1.bf16.msra.mxu0 %v3830
      %3850 = vmatprep.subr.bf16.mxu0 0
      %3851 = vmatpush1.bf16.msra.mxu0 %v3831
      %3852 = vmatprep.subr.bf16.mxu0 0
      %3853 = vmatpush1.bf16.msra.mxu0 %v3832
      %3854 = vmatprep.subr.bf16.mxu0 0
      %3855 = vmatpush1.bf16.msra.mxu0 %v3833
      %3856 = vmatprep.subr.bf16.mxu0 0
      %3857 = vmatpush1.bf16.msra.mxu0 %v3834
      %3858 = vmatprep.subr.bf16.mxu0 0
      %3859 = vmatpush1.bf16.msra.mxu0 %v3835
      %3860 = vmatprep.subr.bf16.mxu0 0
      %3861 = vmatpush1.bf16.msra.mxu0 0
      %3862 = vmatprep.subr.bf16.mxu0 0
      %3863 = vmatpush1.bf16.msra.mxu0 0
      %3864 = vmatprep.subr.bf16.mxu0 0
      %3865 = vmatpush1.bf16.msra.mxu0 0
      %3866 = vmatprep.subr.bf16.mxu0 0
      %3867 = vmatpush1.bf16.msra.mxu0 0
      %3868 = vmatprep.subr.bf16.mxu0 0
      %3869 = vmatpush1.bf16.msra.mxu0 0
      %3870 = vmatprep.subr.bf16.mxu0 0
      %3871 = vmatpush1.bf16.msra.mxu0 0
      %3872 = vmatprep.subr.bf16.mxu0 0
      %3873 = vmatpush1.bf16.msra.mxu0 0
      %3874 = vmatprep.subr.bf16.mxu0 0
      %3875 = vmatpush1.bf16.msra.mxu0 0
      %3876 = vmatprep.mubr.bf16.mxu0 0
      %3877 = vmatmul.mubr.bf16.gmra.mrb[0].mxu0 %v2818
      %v3878 = vpop.f32.mrb[0].mxu0
      %v3879 = vadd.f32 0.0, %v3878
      %v3880 = vpop.f32.mrb[0].mxu0
      %v3881 = vpop.f32.mrb[0].mxu0
      %v3882 = vadd.f32 0.0, %v3881
      %v3883 = vpop.f32.mrb[0].mxu0
      %3884 = vmatprep.mubr.bf16.mxu0 0
      %3885 = vmatmul.mubr.bf16.gmra.mrb[0].mxu0 %v2819
      %v3886 = vpop.f32.mrb[0].mxu0
      %v3887 = vadd.f32 0.0, %v3886
      %v3888 = vpop.f32.mrb[0].mxu0
      %v3889 = vpop.f32.mrb[0].mxu0
      %v3890 = vadd.f32 0.0, %v3889
      %v3891 = vpop.f32.mrb[0].mxu0
      %3892 = vmatprep.mubr.bf16.mxu0 0
      %3893 = vmatmul.mubr.bf16.gmra.mrb[0].mxu0 %v2820
      %v3894 = vpop.f32.mrb[0].mxu0
      %v3895 = vadd.f32 0.0, %v3894
      %v3896 = vpop.f32.mrb[0].mxu0
      %v3897 = vpop.f32.mrb[0].mxu0
      %v3898 = vadd.f32 0.0, %v3897
      %v3899 = vpop.f32.mrb[0].mxu0
      %3900 = vmatprep.mubr.bf16.mxu0 0
      %3901 = vmatmul.mubr.bf16.gmra.mrb[0].mxu0 %v2821
      %v3902 = vpop.f32.mrb[0].mxu0
      %v3903 = vadd.f32 0.0, %v3902
      %v3904 = vpop.f32.mrb[0].mxu0
      %v3905 = vpop.f32.mrb[0].mxu0
      %v3906 = vadd.f32 0.0, %v3905
      %v3907 = vpop.f32.mrb[0].mxu0
      %3908 = vmatprep.mubr.bf16.mxu0 0
      %3909 = vmatmul.mubr.bf16.gmra.mrb[0].mxu0 %v2822
      %v3910 = vpop.f32.mrb[0].mxu0
      %v3911 = vadd.f32 0.0, %v3910
      %v3912 = vpop.f32.mrb[0].mxu0
      %v3913 = vpop.f32.mrb[0].mxu0
      %v3914 = vadd.f32 0.0, %v3913
      %v3915 = vpop.f32.mrb[0].mxu0
      %3916 = vmatprep.mubr.bf16.mxu0 0
      %3917 = vmatmul.mubr.bf16.gmra.mrb[0].mxu0 %v2823
      %v3918 = vpop.f32.mrb[0].mxu0
      %v3919 = vadd.f32 0.0, %v3918
      %v3920 = vpop.f32.mrb[0].mxu0
      %v3921 = vpop.f32.mrb[0].mxu0
      %v3922 = vadd.f32 0.0, %v3921
      %v3923 = vpop.f32.mrb[0].mxu0
      %3924 = vmatprep.mubr.bf16.mxu0 0
      %3925 = vmatmul.mubr.bf16.gmra.mrb[0].mxu0 %v2824
      %v3926 = vpop.f32.mrb[0].mxu0
      %v3927 = vadd.f32 0.0, %v3926
      %v3928 = vpop.f32.mrb[0].mxu0
      %v3929 = vpop.f32.mrb[0].mxu0
      %v3930 = vadd.f32 0.0, %v3929
      %v3931 = vpop.f32.mrb[0].mxu0
      %3932 = vmatprep.mubr.bf16.mxu0 0
      %3933 = vmatmul.mubr.bf16.gmra.mrb[0].mxu0 %v2825
      %v3934 = vpop.f32.mrb[0].mxu0
      %v3935 = vadd.f32 0.0, %v3934
      %v3936 = vpop.f32.mrb[0].mxu0
      %v3937 = vpop.f32.mrb[0].mxu0
      %v3938 = vadd.f32 0.0, %v3937
      %v3939 = vpop.f32.mrb[0].mxu0
      %3940 = vmatprep.mubr.bf16.mxu0 0
      %3941 = vmatmul.mubr.bf16.gmra.mrb[0].mxu0 %v2826
      %v3942 = vpop.f32.mrb[0].mxu0
      %v3943 = vadd.f32 0.0, %v3942
      %v3944 = vpop.f32.mrb[0].mxu0
      %v3945 = vpop.f32.mrb[0].mxu0
      %v3946 = vadd.f32 0.0, %v3945
      %v3947 = vpop.f32.mrb[0].mxu0
      %3948 = vmatprep.mubr.bf16.mxu0 0
      %3949 = vmatmul.mubr.bf16.gmra.mrb[0].mxu0 %v2827
      %v3950 = vpop.f32.mrb[0].mxu0
      %v3951 = vadd.f32 0.0, %v3950
      %v3952 = vpop.f32.mrb[0].mxu0
      %v3953 = vpop.f32.mrb[0].mxu0
      %v3954 = vadd.f32 0.0, %v3953
      %v3955 = vpop.f32.mrb[0].mxu0
      %3956 = vmatprep.mubr.bf16.mxu0 0
      %3957 = vmatmul.mubr.bf16.gmra.mrb[0].mxu0 %v2828
      %v3958 = vpop.f32.mrb[0].mxu0
      %v3959 = vadd.f32 0.0, %v3958
      %v3960 = vpop.f32.mrb[0].mxu0
      %v3961 = vpop.f32.mrb[0].mxu0
      %v3962 = vadd.f32 0.0, %v3961
      %v3963 = vpop.f32.mrb[0].mxu0
      %3964 = vmatprep.mubr.bf16.mxu0 0
      %3965 = vmatmul.mubr.bf16.gmra.mrb[0].mxu0 %v2829
      %v3966 = vpop.f32.mrb[0].mxu0
      %v3967 = vadd.f32 0.0, %v3966
      %v3968 = vpop.f32.mrb[0].mxu0
      %v3969 = vpop.f32.mrb[0].mxu0
      %v3970 = vadd.f32 0.0, %v3969
      %v3971 = vpop.f32.mrb[0].mxu0
      %3972 = vmatprep.mubr.bf16.mxu0 0
      %3973 = vmatmul.mubr.bf16.gmra.mrb[0].mxu0 %v2830
      %v3974 = vpop.f32.mrb[0].mxu0
      %v3975 = vadd.f32 0.0, %v3974
      %v3976 = vpop.f32.mrb[0].mxu0
      %v3977 = vpop.f32.mrb[0].mxu0
      %v3978 = vadd.f32 0.0, %v3977
      %v3979 = vpop.f32.mrb[0].mxu0
      %3980 = vmatprep.mubr.bf16.mxu0 0
      %3981 = vmatmul.mubr.bf16.gmra.mrb[0].mxu0 %v2831
      %v3982 = vpop.f32.mrb[0].mxu0
      %v3983 = vadd.f32 0.0, %v3982
      %v3984 = vpop.f32.mrb[0].mxu0
      %v3985 = vpop.f32.mrb[0].mxu0
      %v3986 = vadd.f32 0.0, %v3985
      %v3987 = vpop.f32.mrb[0].mxu0
      %3988 = vmatprep.mubr.bf16.mxu0 0
      %3989 = vmatmul.mubr.bf16.gmra.mrb[0].mxu0 %v2832
      %v3990 = vpop.f32.mrb[0].mxu0
      %v3991 = vadd.f32 0.0, %v3990
      %v3992 = vpop.f32.mrb[0].mxu0
      %v3993 = vpop.f32.mrb[0].mxu0
      %v3994 = vadd.f32 0.0, %v3993
      %v3995 = vpop.f32.mrb[0].mxu0
      %3996 = vmatprep.mubr.bf16.mxu0 0
      %3997 = vmatmul.mubr.bf16.gmra.mrb[0].mxu0 %v2833
      %v3998 = vpop.f32.mrb[0].mxu0
      %v3999 = vadd.f32 0.0, %v3998
      %v4000 = vpop.f32.mrb[0].mxu0
      %v4001 = vpop.f32.mrb[0].mxu0
      %v4002 = vadd.f32 0.0, %v4001
      %v4003 = vpop.f32.mrb[0].mxu0
      %4004 = vdwg.mxu0
      %v4005 = vadd.f32 %v3747, %v3879
      %v4006 = vadd.f32 %v3748, %v3882
      %v4007 = vadd.f32 %v3749, %v3887
      %v4008 = vadd.f32 %v3750, %v3890
      %v4009 = vadd.f32 %v3751, %v3895
      %v4010 = vadd.f32 %v3752, %v3898
      %v4011 = vadd.f32 %v3753, %v3903
      %v4012 = vadd.f32 %v3754, %v3906
      %v4013 = vadd.f32 %v3755, %v3911
      %v4014 = vadd.f32 %v3756, %v3914
      %v4015 = vadd.f32 %v3757, %v3919
      %v4016 = vadd.f32 %v3758, %v3922
      %v4017 = vadd.f32 %v3759, %v3927
      %v4018 = vadd.f32 %v3760, %v3930
      %v4019 = vadd.f32 %v3761, %v3935
      %v4020 = vadd.f32 %v3762, %v3938
      %v4021 = vadd.f32 %v3763, %v3943
      %v4022 = vadd.f32 %v3764, %v3946
      %v4023 = vadd.f32 %v3765, %v3951
      %v4024 = vadd.f32 %v3766, %v3954
      %v4025 = vadd.f32 %v3767, %v3959
      %v4026 = vadd.f32 %v3768, %v3962
      %v4027 = vadd.f32 %v3769, %v3967
      %v4028 = vadd.f32 %v3770, %v3970
      %v4029 = vadd.f32 %v3771, %v3975
      %v4030 = vadd.f32 %v3772, %v3978
      %v4031 = vadd.f32 %v3773, %v3983
      %v4032 = vadd.f32 %v3774, %v3986
      %v4033 = vadd.f32 %v3775, %v3991
      %v4034 = vadd.f32 %v3776, %v3994
      %v4035 = vadd.f32 %v3777, %v3999
      %v4036 = vadd.f32 %v3778, %v4002
      %s4037 = scalar_lea.vmem %s7, 256
      %v4038 = vld [vmem:[%s4037] sm:$0xf]
      %v4039 = vld [vmem:[%s4037 + $0x4] sm:$0xf]
      %v4040 = vld [vmem:[%s4037 + $0x8] sm:$0xf]
      %v4041 = vld [vmem:[%s4037 + $0xc] sm:$0xf]
      %v4042 = vld [vmem:[%s4037 + $0x10] sm:$0xf]
      %v4043 = vld [vmem:[%s4037 + $0x14] sm:$0xf]
      %v4044 = vld [vmem:[%s4037 + $0x18] sm:$0xf]
      %v4045 = vld [vmem:[%s4037 + $0x1c] sm:$0xf]
      %v4046 = vld [vmem:[%s4037 + $0x20] sm:$0xf]
      %v4047 = vld [vmem:[%s4037 + $0x24] sm:$0xf]
      %v4048 = vld [vmem:[%s4037 + $0x28] sm:$0xf]
      %v4049 = vld [vmem:[%s4037 + $0x2c] sm:$0xf]
      %v4050 = vld [vmem:[%s4037 + $0x30] sm:$0xf]
      %v4051 = vld [vmem:[%s4037 + $0x34] sm:$0xf]
      %v4052 = vld [vmem:[%s4037 + $0x38] sm:$0xf]
      %v4053 = vld [vmem:[%s4037 + $0x3c] sm:$0xf]
      %v4070 = vunpack.c.l.b16 %v4038
      %v4071 = vunpack.c.l.b16 %v4039
      %v4072 = vunpack.c.l.b16 %v4040
      %v4073 = vunpack.c.l.b16 %v4041
      %v4074 = vunpack.c.l.b16 %v4042
      %v4075 = vunpack.c.l.b16 %v4043
      %v4076 = vunpack.c.l.b16 %v4044
      %v4077 = vunpack.c.l.b16 %v4045
      %v4078 = vunpack.c.l.b16 %v4046
      %v4079 = vunpack.c.l.b16 %v4047
      %v4080 = vunpack.c.l.b16 %v4048
      %v4081 = vunpack.c.l.b16 %v4049
      %v4082 = vunpack.c.l.b16 %v4050
      %v4083 = vunpack.c.l.b16 %v4051
      %v4084 = vunpack.c.l.b16 %v4052
      %v4085 = vunpack.c.l.b16 %v4053
      %v4086 = vpack.c.b16 %v4071, %v4070
      %v4087 = vpack.c.b16 %v4073, %v4072
      %v4088 = vpack.c.b16 %v4075, %v4074
      %v4089 = vpack.c.b16 %v4077, %v4076
      %v4090 = vpack.c.b16 %v4079, %v4078
      %v4091 = vpack.c.b16 %v4081, %v4080
      %v4092 = vpack.c.b16 %v4083, %v4082
      %v4093 = vpack.c.b16 %v4085, %v4084
      %4102 = vmatprep.subr.bf16.mxu0 0
      %4103 = vmatpush1.bf16.msra.mxu0 %v4086
      %4104 = vmatprep.subr.bf16.mxu0 0
      %4105 = vmatpush1.bf16.msra.mxu0 %v4087
      %4106 = vmatprep.subr.bf16.mxu0 0
      %4107 = vmatpush1.bf16.msra.mxu0 %v4088
      %4108 = vmatprep.subr.bf16.mxu0 0
      %4109 = vmatpush1.bf16.msra.mxu0 %v4089
      %4110 = vmatprep.subr.bf16.mxu0 0
      %4111 = vmatpush1.bf16.msra.mxu0 %v4090
      %4112 = vmatprep.subr.bf16.mxu0 0
      %4113 = vmatpush1.bf16.msra.mxu0 %v4091
      %4114 = vmatprep.subr.bf16.mxu0 0
      %4115 = vmatpush1.bf16.msra.mxu0 %v4092
      %4116 = vmatprep.subr.bf16.mxu0 0
      %4117 = vmatpush1.bf16.msra.mxu0 %v4093
      %4118 = vmatprep.subr.bf16.mxu0 0
      %4119 = vmatpush1.bf16.msra.mxu0 0
      %4120 = vmatprep.subr.bf16.mxu0 0
      %4121 = vmatpush1.bf16.msra.mxu0 0
      %4122 = vmatprep.subr.bf16.mxu0 0
      %4123 = vmatpush1.bf16.msra.mxu0 0
      %4124 = vmatprep.subr.bf16.mxu0 0
      %4125 = vmatpush1.bf16.msra.mxu0 0
      %4126 = vmatprep.subr.bf16.mxu0 0
      %4127 = vmatpush1.bf16.msra.mxu0 0
      %4128 = vmatprep.subr.bf16.mxu0 0
      %4129 = vmatpush1.bf16.msra.mxu0 0
      %4130 = vmatprep.subr.bf16.mxu0 0
      %4131 = vmatpush1.bf16.msra.mxu0 0
      %4132 = vmatprep.subr.bf16.mxu0 0
      %4133 = vmatpush1.bf16.msra.mxu0 0
      %4134 = vmatprep.mubr.bf16.mxu0 0
      %4135 = vmatmul.mubr.bf16.gmra.mrb[0].mxu0 %v2583
      %v4136 = vpop.f32.mrb[0].mxu0
      %v4137 = vadd.f32 0.0, %v4136
      %v4138 = vpop.f32.mrb[0].mxu0
      %v4139 = vpop.f32.mrb[0].mxu0
      %v4140 = vadd.f32 0.0, %v4139
      %v4141 = vpop.f32.mrb[0].mxu0
      %4142 = vmatprep.mubr.bf16.mxu0 0
      %4143 = vmatmul.mubr.bf16.gmra.mrb[0].mxu0 %v2584
      %v4144 = vpop.f32.mrb[0].mxu0
      %v4145 = vadd.f32 0.0, %v4144
      %v4146 = vpop.f32.mrb[0].mxu0
      %v4147 = vpop.f32.mrb[0].mxu0
      %v4148 = vadd.f32 0.0, %v4147
      %v4149 = vpop.f32.mrb[0].mxu0
      %4150 = vmatprep.mubr.bf16.mxu0 0
      %4151 = vmatmul.mubr.bf16.gmra.mrb[0].mxu0 %v2585
      %v4152 = vpop.f32.mrb[0].mxu0
      %v4153 = vadd.f32 0.0, %v4152
      %v4154 = vpop.f32.mrb[0].mxu0
      %v4155 = vpop.f32.mrb[0].mxu0
      %v4156 = vadd.f32 0.0, %v4155
      %v4157 = vpop.f32.mrb[0].mxu0
      %4158 = vmatprep.mubr.bf16.mxu0 0
      %4159 = vmatmul.mubr.bf16.gmra.mrb[0].mxu0 %v2586
      %v4160 = vpop.f32.mrb[0].mxu0
      %v4161 = vadd.f32 0.0, %v4160
      %v4162 = vpop.f32.mrb[0].mxu0
      %v4163 = vpop.f32.mrb[0].mxu0
      %v4164 = vadd.f32 0.0, %v4163
      %v4165 = vpop.f32.mrb[0].mxu0
      %4166 = vmatprep.mubr.bf16.mxu0 0
      %4167 = vmatmul.mubr.bf16.gmra.mrb[0].mxu0 %v2587
      %v4168 = vpop.f32.mrb[0].mxu0
      %v4169 = vadd.f32 0.0, %v4168
      %v4170 = vpop.f32.mrb[0].mxu0
      %v4171 = vpop.f32.mrb[0].mxu0
      %v4172 = vadd.f32 0.0, %v4171
      %v4173 = vpop.f32.mrb[0].mxu0
      %4174 = vmatprep.mubr.bf16.mxu0 0
      %4175 = vmatmul.mubr.bf16.gmra.mrb[0].mxu0 %v2588
      %v4176 = vpop.f32.mrb[0].mxu0
      %v4177 = vadd.f32 0.0, %v4176
      %v4178 = vpop.f32.mrb[0].mxu0
      %v4179 = vpop.f32.mrb[0].mxu0
      %v4180 = vadd.f32 0.0, %v4179
      %v4181 = vpop.f32.mrb[0].mxu0
      %4182 = vmatprep.mubr.bf16.mxu0 0
      %4183 = vmatmul.mubr.bf16.gmra.mrb[0].mxu0 %v2589
      %v4184 = vpop.f32.mrb[0].mxu0
      %v4185 = vadd.f32 0.0, %v4184
      %v4186 = vpop.f32.mrb[0].mxu0
      %v4187 = vpop.f32.mrb[0].mxu0
      %v4188 = vadd.f32 0.0, %v4187
      %v4189 = vpop.f32.mrb[0].mxu0
      %4190 = vmatprep.mubr.bf16.mxu0 0
      %4191 = vmatmul.mubr.bf16.gmra.mrb[0].mxu0 %v2590
      %v4192 = vpop.f32.mrb[0].mxu0
      %v4193 = vadd.f32 0.0, %v4192
      %v4194 = vpop.f32.mrb[0].mxu0
      %v4195 = vpop.f32.mrb[0].mxu0
      %v4196 = vadd.f32 0.0, %v4195
      %v4197 = vpop.f32.mrb[0].mxu0
      %4198 = vmatprep.mubr.bf16.mxu0 0
      %4199 = vmatmul.mubr.bf16.gmra.mrb[0].mxu0 %v2591
      %v4200 = vpop.f32.mrb[0].mxu0
      %v4201 = vadd.f32 0.0, %v4200
      %v4202 = vpop.f32.mrb[0].mxu0
      %v4203 = vpop.f32.mrb[0].mxu0
      %v4204 = vadd.f32 0.0, %v4203
      %v4205 = vpop.f32.mrb[0].mxu0
      %4206 = vmatprep.mubr.bf16.mxu0 0
      %4207 = vmatmul.mubr.bf16.gmra.mrb[0].mxu0 %v2592
      %v4208 = vpop.f32.mrb[0].mxu0
      %v4209 = vadd.f32 0.0, %v4208
      %v4210 = vpop.f32.mrb[0].mxu0
      %v4211 = vpop.f32.mrb[0].mxu0
      %v4212 = vadd.f32 0.0, %v4211
      %v4213 = vpop.f32.mrb[0].mxu0
      %4214 = vmatprep.mubr.bf16.mxu0 0
      %4215 = vmatmul.mubr.bf16.gmra.mrb[0].mxu0 %v2593
      %v4216 = vpop.f32.mrb[0].mxu0
      %v4217 = vadd.f32 0.0, %v4216
      %v4218 = vpop.f32.mrb[0].mxu0
      %v4219 = vpop.f32.mrb[0].mxu0
      %v4220 = vadd.f32 0.0, %v4219
      %v4221 = vpop.f32.mrb[0].mxu0
      %4222 = vmatprep.mubr.bf16.mxu0 0
      %4223 = vmatmul.mubr.bf16.gmra.mrb[0].mxu0 %v2594
      %v4224 = vpop.f32.mrb[0].mxu0
      %v4225 = vadd.f32 0.0, %v4224
      %v4226 = vpop.f32.mrb[0].mxu0
      %v4227 = vpop.f32.mrb[0].mxu0
      %v4228 = vadd.f32 0.0, %v4227
      %v4229 = vpop.f32.mrb[0].mxu0
      %4230 = vmatprep.mubr.bf16.mxu0 0
      %4231 = vmatmul.mubr.bf16.gmra.mrb[0].mxu0 %v2595
      %v4232 = vpop.f32.mrb[0].mxu0
      %v4233 = vadd.f32 0.0, %v4232
      %v4234 = vpop.f32.mrb[0].mxu0
      %v4235 = vpop.f32.mrb[0].mxu0
      %v4236 = vadd.f32 0.0, %v4235
      %v4237 = vpop.f32.mrb[0].mxu0
      %4238 = vmatprep.mubr.bf16.mxu0 0
      %4239 = vmatmul.mubr.bf16.gmra.mrb[0].mxu0 %v2596
      %v4240 = vpop.f32.mrb[0].mxu0
      %v4241 = vadd.f32 0.0, %v4240
      %v4242 = vpop.f32.mrb[0].mxu0
      %v4243 = vpop.f32.mrb[0].mxu0
      %v4244 = vadd.f32 0.0, %v4243
      %v4245 = vpop.f32.mrb[0].mxu0
      %4246 = vmatprep.mubr.bf16.mxu0 0
      %4247 = vmatmul.mubr.bf16.gmra.mrb[0].mxu0 %v2597
      %v4248 = vpop.f32.mrb[0].mxu0
      %v4249 = vadd.f32 0.0, %v4248
      %v4250 = vpop.f32.mrb[0].mxu0
      %v4251 = vpop.f32.mrb[0].mxu0
      %v4252 = vadd.f32 0.0, %v4251
      %v4253 = vpop.f32.mrb[0].mxu0
      %4254 = vmatprep.mubr.bf16.mxu0 0
      %4255 = vmatmul.mubr.bf16.gmra.mrb[0].mxu0 %v2598
      %v4256 = vpop.f32.mrb[0].mxu0
      %v4257 = vadd.f32 0.0, %v4256
      %v4258 = vpop.f32.mrb[0].mxu0
      %v4259 = vpop.f32.mrb[0].mxu0
      %v4260 = vadd.f32 0.0, %v4259
      %v4261 = vpop.f32.mrb[0].mxu0
      %4262 = vdwg.mxu0
      %v4263 = vadd.f32 %v4005, %v4137
      %v4264 = vadd.f32 %v4006, %v4140
      %v4265 = vadd.f32 %v4007, %v4145
      %v4266 = vadd.f32 %v4008, %v4148
      %v4267 = vadd.f32 %v4009, %v4153
      %v4268 = vadd.f32 %v4010, %v4156
      %v4269 = vadd.f32 %v4011, %v4161
      %v4270 = vadd.f32 %v4012, %v4164
      %v4271 = vadd.f32 %v4013, %v4169
      %v4272 = vadd.f32 %v4014, %v4172
      %v4273 = vadd.f32 %v4015, %v4177
      %v4274 = vadd.f32 %v4016, %v4180
      %v4275 = vadd.f32 %v4017, %v4185
      %v4276 = vadd.f32 %v4018, %v4188
      %v4277 = vadd.f32 %v4019, %v4193
      %v4278 = vadd.f32 %v4020, %v4196
      %v4279 = vadd.f32 %v4021, %v4201
      %v4280 = vadd.f32 %v4022, %v4204
      %v4281 = vadd.f32 %v4023, %v4209
      %v4282 = vadd.f32 %v4024, %v4212
      %v4283 = vadd.f32 %v4025, %v4217
      %v4284 = vadd.f32 %v4026, %v4220
      %v4285 = vadd.f32 %v4027, %v4225
      %v4286 = vadd.f32 %v4028, %v4228
      %v4287 = vadd.f32 %v4029, %v4233
      %v4288 = vadd.f32 %v4030, %v4236
      %v4289 = vadd.f32 %v4031, %v4241
      %v4290 = vadd.f32 %v4032, %v4244
      %v4291 = vadd.f32 %v4033, %v4249
      %v4292 = vadd.f32 %v4034, %v4252
      %v4293 = vadd.f32 %v4035, %v4257
      %v4294 = vadd.f32 %v4036, %v4260
      %s4295 = scalar_lea.vmem %s7, 320
      %v4296 = vld [vmem:[%s4295] sm:$0xf]
      %v4297 = vld [vmem:[%s4295 + $0x4] sm:$0xf]
      %v4298 = vld [vmem:[%s4295 + $0x8] sm:$0xf]
      %v4299 = vld [vmem:[%s4295 + $0xc] sm:$0xf]
      %v4300 = vld [vmem:[%s4295 + $0x10] sm:$0xf]
      %v4301 = vld [vmem:[%s4295 + $0x14] sm:$0xf]
      %v4302 = vld [vmem:[%s4295 + $0x18] sm:$0xf]
      %v4303 = vld [vmem:[%s4295 + $0x1c] sm:$0xf]
      %v4304 = vld [vmem:[%s4295 + $0x20] sm:$0xf]
      %v4305 = vld [vmem:[%s4295 + $0x24] sm:$0xf]
      %v4306 = vld [vmem:[%s4295 + $0x28] sm:$0xf]
      %v4307 = vld [vmem:[%s4295 + $0x2c] sm:$0xf]
      %v4308 = vld [vmem:[%s4295 + $0x30] sm:$0xf]
      %v4309 = vld [vmem:[%s4295 + $0x34] sm:$0xf]
      %v4310 = vld [vmem:[%s4295 + $0x38] sm:$0xf]
      %v4311 = vld [vmem:[%s4295 + $0x3c] sm:$0xf]
      %v4328 = vunpack.c.l.b16 %v4296
      %v4329 = vunpack.c.l.b16 %v4297
      %v4330 = vunpack.c.l.b16 %v4298
      %v4331 = vunpack.c.l.b16 %v4299
      %v4332 = vunpack.c.l.b16 %v4300
      %v4333 = vunpack.c.l.b16 %v4301
      %v4334 = vunpack.c.l.b16 %v4302
      %v4335 = vunpack.c.l.b16 %v4303
      %v4336 = vunpack.c.l.b16 %v4304
      %v4337 = vunpack.c.l.b16 %v4305
      %v4338 = vunpack.c.l.b16 %v4306
      %v4339 = vunpack.c.l.b16 %v4307
      %v4340 = vunpack.c.l.b16 %v4308
      %v4341 = vunpack.c.l.b16 %v4309
      %v4342 = vunpack.c.l.b16 %v4310
      %v4343 = vunpack.c.l.b16 %v4311
      %v4344 = vpack.c.b16 %v4329, %v4328
      %v4345 = vpack.c.b16 %v4331, %v4330
      %v4346 = vpack.c.b16 %v4333, %v4332
      %v4347 = vpack.c.b16 %v4335, %v4334
      %v4348 = vpack.c.b16 %v4337, %v4336
      %v4349 = vpack.c.b16 %v4339, %v4338
      %v4350 = vpack.c.b16 %v4341, %v4340
      %v4351 = vpack.c.b16 %v4343, %v4342
      %4360 = vmatprep.subr.bf16.mxu0 0
      %4361 = vmatpush1.bf16.msra.mxu0 %v4344
      %4362 = vmatprep.subr.bf16.mxu0 0
      %4363 = vmatpush1.bf16.msra.mxu0 %v4345
      %4364 = vmatprep.subr.bf16.mxu0 0
      %4365 = vmatpush1.bf16.msra.mxu0 %v4346
      %4366 = vmatprep.subr.bf16.mxu0 0
      %4367 = vmatpush1.bf16.msra.mxu0 %v4347
      %4368 = vmatprep.subr.bf16.mxu0 0
      %4369 = vmatpush1.bf16.msra.mxu0 %v4348
      %4370 = vmatprep.subr.bf16.mxu0 0
      %4371 = vmatpush1.bf16.msra.mxu0 %v4349
      %4372 = vmatprep.subr.bf16.mxu0 0
      %4373 = vmatpush1.bf16.msra.mxu0 %v4350
      %4374 = vmatprep.subr.bf16.mxu0 0
      %4375 = vmatpush1.bf16.msra.mxu0 %v4351
      %4376 = vmatprep.subr.bf16.mxu0 0
      %4377 = vmatpush1.bf16.msra.mxu0 0
      %4378 = vmatprep.subr.bf16.mxu0 0
      %4379 = vmatpush1.bf16.msra.mxu0 0
      %4380 = vmatprep.subr.bf16.mxu0 0
      %4381 = vmatpush1.bf16.msra.mxu0 0
      %4382 = vmatprep.subr.bf16.mxu0 0
      %4383 = vmatpush1.bf16.msra.mxu0 0
      %4384 = vmatprep.subr.bf16.mxu0 0
      %4385 = vmatpush1.bf16.msra.mxu0 0
      %4386 = vmatprep.subr.bf16.mxu0 0
      %4387 = vmatpush1.bf16.msra.mxu0 0
      %4388 = vmatprep.subr.bf16.mxu0 0
      %4389 = vmatpush1.bf16.msra.mxu0 0
      %4390 = vmatprep.subr.bf16.mxu0 0
      %4391 = vmatpush1.bf16.msra.mxu0 0
      %4392 = vmatprep.mubr.bf16.mxu0 0
      %4393 = vmatmul.mubr.bf16.gmra.mrb[0].mxu0 %v3053
      %v4394 = vpop.f32.mrb[0].mxu0
      %v4395 = vadd.f32 0.0, %v4394
      %v4396 = vpop.f32.mrb[0].mxu0
      %v4397 = vpop.f32.mrb[0].mxu0
      %v4398 = vadd.f32 0.0, %v4397
      %v4399 = vpop.f32.mrb[0].mxu0
      %4400 = vmatprep.mubr.bf16.mxu0 0
      %4401 = vmatmul.mubr.bf16.gmra.mrb[0].mxu0 %v3054
      %v4402 = vpop.f32.mrb[0].mxu0
      %v4403 = vadd.f32 0.0, %v4402
      %v4404 = vpop.f32.mrb[0].mxu0
      %v4405 = vpop.f32.mrb[0].mxu0
      %v4406 = vadd.f32 0.0, %v4405
      %v4407 = vpop.f32.mrb[0].mxu0
      %4408 = vmatprep.mubr.bf16.mxu0 0
      %4409 = vmatmul.mubr.bf16.gmra.mrb[0].mxu0 %v3055
      %v4410 = vpop.f32.mrb[0].mxu0
      %v4411 = vadd.f32 0.0, %v4410
      %v4412 = vpop.f32.mrb[0].mxu0
      %v4413 = vpop.f32.mrb[0].mxu0
      %v4414 = vadd.f32 0.0, %v4413
      %v4415 = vpop.f32.mrb[0].mxu0
      %4416 = vmatprep.mubr.bf16.mxu0 0
      %4417 = vmatmul.mubr.bf16.gmra.mrb[0].mxu0 %v3056
      %v4418 = vpop.f32.mrb[0].mxu0
      %v4419 = vadd.f32 0.0, %v4418
      %v4420 = vpop.f32.mrb[0].mxu0
      %v4421 = vpop.f32.mrb[0].mxu0
      %v4422 = vadd.f32 0.0, %v4421
      %v4423 = vpop.f32.mrb[0].mxu0
      %4424 = vmatprep.mubr.bf16.mxu0 0
      %4425 = vmatmul.mubr.bf16.gmra.mrb[0].mxu0 %v3057
      %v4426 = vpop.f32.mrb[0].mxu0
      %v4427 = vadd.f32 0.0, %v4426
      %v4428 = vpop.f32.mrb[0].mxu0
      %v4429 = vpop.f32.mrb[0].mxu0
      %v4430 = vadd.f32 0.0, %v4429
      %v4431 = vpop.f32.mrb[0].mxu0
      %4432 = vmatprep.mubr.bf16.mxu0 0
      %4433 = vmatmul.mubr.bf16.gmra.mrb[0].mxu0 %v3058
      %v4434 = vpop.f32.mrb[0].mxu0
      %v4435 = vadd.f32 0.0, %v4434
      %v4436 = vpop.f32.mrb[0].mxu0
      %v4437 = vpop.f32.mrb[0].mxu0
      %v4438 = vadd.f32 0.0, %v4437
      %v4439 = vpop.f32.mrb[0].mxu0
      %4440 = vmatprep.mubr.bf16.mxu0 0
      %4441 = vmatmul.mubr.bf16.gmra.mrb[0].mxu0 %v3059
      %v4442 = vpop.f32.mrb[0].mxu0
      %v4443 = vadd.f32 0.0, %v4442
      %v4444 = vpop.f32.mrb[0].mxu0
      %v4445 = vpop.f32.mrb[0].mxu0
      %v4446 = vadd.f32 0.0, %v4445
      %v4447 = vpop.f32.mrb[0].mxu0
      %4448 = vmatprep.mubr.bf16.mxu0 0
      %4449 = vmatmul.mubr.bf16.gmra.mrb[0].mxu0 %v3060
      %v4450 = vpop.f32.mrb[0].mxu0
      %v4451 = vadd.f32 0.0, %v4450
      %v4452 = vpop.f32.mrb[0].mxu0
      %v4453 = vpop.f32.mrb[0].mxu0
      %v4454 = vadd.f32 0.0, %v4453
      %v4455 = vpop.f32.mrb[0].mxu0
      %4456 = vmatprep.mubr.bf16.mxu0 0
      %4457 = vmatmul.mubr.bf16.gmra.mrb[0].mxu0 %v3061
      %v4458 = vpop.f32.mrb[0].mxu0
      %v4459 = vadd.f32 0.0, %v4458
      %v4460 = vpop.f32.mrb[0].mxu0
      %v4461 = vpop.f32.mrb[0].mxu0
      %v4462 = vadd.f32 0.0, %v4461
      %v4463 = vpop.f32.mrb[0].mxu0
      %4464 = vmatprep.mubr.bf16.mxu0 0
      %4465 = vmatmul.mubr.bf16.gmra.mrb[0].mxu0 %v3062
      %v4466 = vpop.f32.mrb[0].mxu0
      %v4467 = vadd.f32 0.0, %v4466
      %v4468 = vpop.f32.mrb[0].mxu0
      %v4469 = vpop.f32.mrb[0].mxu0
      %v4470 = vadd.f32 0.0, %v4469
      %v4471 = vpop.f32.mrb[0].mxu0
      %4472 = vmatprep.mubr.bf16.mxu0 0
      %4473 = vmatmul.mubr.bf16.gmra.mrb[0].mxu0 %v3063
      %v4474 = vpop.f32.mrb[0].mxu0
      %v4475 = vadd.f32 0.0, %v4474
      %v4476 = vpop.f32.mrb[0].mxu0
      %v4477 = vpop.f32.mrb[0].mxu0
      %v4478 = vadd.f32 0.0, %v4477
      %v4479 = vpop.f32.mrb[0].mxu0
      %4480 = vmatprep.mubr.bf16.mxu0 0
      %4481 = vmatmul.mubr.bf16.gmra.mrb[0].mxu0 %v3064
      %v4482 = vpop.f32.mrb[0].mxu0
      %v4483 = vadd.f32 0.0, %v4482
      %v4484 = vpop.f32.mrb[0].mxu0
      %v4485 = vpop.f32.mrb[0].mxu0
      %v4486 = vadd.f32 0.0, %v4485
      %v4487 = vpop.f32.mrb[0].mxu0
      %4488 = vmatprep.mubr.bf16.mxu0 0
      %4489 = vmatmul.mubr.bf16.gmra.mrb[0].mxu0 %v3065
      %v4490 = vpop.f32.mrb[0].mxu0
      %v4491 = vadd.f32 0.0, %v4490
      %v4492 = vpop.f32.mrb[0].mxu0
      %v4493 = vpop.f32.mrb[0].mxu0
      %v4494 = vadd.f32 0.0, %v4493
      %v4495 = vpop.f32.mrb[0].mxu0
      %4496 = vmatprep.mubr.bf16.mxu0 0
      %4497 = vmatmul.mubr.bf16.gmra.mrb[0].mxu0 %v3066
      %v4498 = vpop.f32.mrb[0].mxu0
      %v4499 = vadd.f32 0.0, %v4498
      %v4500 = vpop.f32.mrb[0].mxu0
      %v4501 = vpop.f32.mrb[0].mxu0
      %v4502 = vadd.f32 0.0, %v4501
      %v4503 = vpop.f32.mrb[0].mxu0
      %4504 = vmatprep.mubr.bf16.mxu0 0
      %4505 = vmatmul.mubr.bf16.gmra.mrb[0].mxu0 %v3067
      %v4506 = vpop.f32.mrb[0].mxu0
      %v4507 = vadd.f32 0.0, %v4506
      %v4508 = vpop.f32.mrb[0].mxu0
      %v4509 = vpop.f32.mrb[0].mxu0
      %v4510 = vadd.f32 0.0, %v4509
      %v4511 = vpop.f32.mrb[0].mxu0
      %4512 = vmatprep.mubr.bf16.mxu0 0
      %4513 = vmatmul.mubr.bf16.gmra.mrb[0].mxu0 %v3068
      %v4514 = vpop.f32.mrb[0].mxu0
      %v4515 = vadd.f32 0.0, %v4514
      %v4516 = vpop.f32.mrb[0].mxu0
      %v4517 = vpop.f32.mrb[0].mxu0
      %v4518 = vadd.f32 0.0, %v4517
      %v4519 = vpop.f32.mrb[0].mxu0
      %4520 = vdwg.mxu0
      %v4521 = vadd.f32 %v4263, %v4395
      %v4522 = vadd.f32 %v4264, %v4398
      %v4523 = vadd.f32 %v4265, %v4403
      %v4524 = vadd.f32 %v4266, %v4406
      %v4525 = vadd.f32 %v4267, %v4411
      %v4526 = vadd.f32 %v4268, %v4414
      %v4527 = vadd.f32 %v4269, %v4419
      %v4528 = vadd.f32 %v4270, %v4422
      %v4529 = vadd.f32 %v4271, %v4427
      %v4530 = vadd.f32 %v4272, %v4430
      %v4531 = vadd.f32 %v4273, %v4435
      %v4532 = vadd.f32 %v4274, %v4438
      %v4533 = vadd.f32 %v4275, %v4443
      %v4534 = vadd.f32 %v4276, %v4446
      %v4535 = vadd.f32 %v4277, %v4451
      %v4536 = vadd.f32 %v4278, %v4454
      %v4537 = vadd.f32 %v4279, %v4459
      %v4538 = vadd.f32 %v4280, %v4462
      %v4539 = vadd.f32 %v4281, %v4467
      %v4540 = vadd.f32 %v4282, %v4470
      %v4541 = vadd.f32 %v4283, %v4475
      %v4542 = vadd.f32 %v4284, %v4478
      %v4543 = vadd.f32 %v4285, %v4483
      %v4544 = vadd.f32 %v4286, %v4486
      %v4545 = vadd.f32 %v4287, %v4491
      %v4546 = vadd.f32 %v4288, %v4494
      %v4547 = vadd.f32 %v4289, %v4499
      %v4548 = vadd.f32 %v4290, %v4502
      %v4549 = vadd.f32 %v4291, %v4507
      %v4550 = vadd.f32 %v4292, %v4510
      %v4551 = vadd.f32 %v4293, %v4515
      %v4552 = vadd.f32 %v4294, %v4518
      %s4553 = scalar_lea.vmem %s7, 384
      %v4554 = vld [vmem:[%s4553] sm:$0xf]
      %v4555 = vld [vmem:[%s4553 + $0x4] sm:$0xf]
      %v4556 = vld [vmem:[%s4553 + $0x8] sm:$0xf]
      %v4557 = vld [vmem:[%s4553 + $0xc] sm:$0xf]
      %v4558 = vld [vmem:[%s4553 + $0x10] sm:$0xf]
      %v4559 = vld [vmem:[%s4553 + $0x14] sm:$0xf]
      %v4560 = vld [vmem:[%s4553 + $0x18] sm:$0xf]
      %v4561 = vld [vmem:[%s4553 + $0x1c] sm:$0xf]
      %v4562 = vld [vmem:[%s4553 + $0x20] sm:$0xf]
      %v4563 = vld [vmem:[%s4553 + $0x24] sm:$0xf]
      %v4564 = vld [vmem:[%s4553 + $0x28] sm:$0xf]
      %v4565 = vld [vmem:[%s4553 + $0x2c] sm:$0xf]
      %v4566 = vld [vmem:[%s4553 + $0x30] sm:$0xf]
      %v4567 = vld [vmem:[%s4553 + $0x34] sm:$0xf]
      %v4568 = vld [vmem:[%s4553 + $0x38] sm:$0xf]
      %v4569 = vld [vmem:[%s4553 + $0x3c] sm:$0xf]
      %v4586 = vunpack.c.l.b16 %v4554
      %v4587 = vunpack.c.l.b16 %v4555
      %v4588 = vunpack.c.l.b16 %v4556
      %v4589 = vunpack.c.l.b16 %v4557
      %v4590 = vunpack.c.l.b16 %v4558
      %v4591 = vunpack.c.l.b16 %v4559
      %v4592 = vunpack.c.l.b16 %v4560
      %v4593 = vunpack.c.l.b16 %v4561
      %v4594 = vunpack.c.l.b16 %v4562
      %v4595 = vunpack.c.l.b16 %v4563
      %v4596 = vunpack.c.l.b16 %v4564
      %v4597 = vunpack.c.l.b16 %v4565
      %v4598 = vunpack.c.l.b16 %v4566
      %v4599 = vunpack.c.l.b16 %v4567
      %v4600 = vunpack.c.l.b16 %v4568
      %v4601 = vunpack.c.l.b16 %v4569
      %v4602 = vpack.c.b16 %v4587, %v4586
      %v4603 = vpack.c.b16 %v4589, %v4588
      %v4604 = vpack.c.b16 %v4591, %v4590
      %v4605 = vpack.c.b16 %v4593, %v4592
      %v4606 = vpack.c.b16 %v4595, %v4594
      %v4607 = vpack.c.b16 %v4597, %v4596
      %v4608 = vpack.c.b16 %v4599, %v4598
      %v4609 = vpack.c.b16 %v4601, %v4600
      %4618 = vmatprep.subr.bf16.mxu0 0
      %4619 = vmatpush1.bf16.msra.mxu0 %v4602
      %4620 = vmatprep.subr.bf16.mxu0 0
      %4621 = vmatpush1.bf16.msra.mxu0 %v4603
      %4622 = vmatprep.subr.bf16.mxu0 0
      %4623 = vmatpush1.bf16.msra.mxu0 %v4604
      %4624 = vmatprep.subr.bf16.mxu0 0
      %4625 = vmatpush1.bf16.msra.mxu0 %v4605
      %4626 = vmatprep.subr.bf16.mxu0 0
      %4627 = vmatpush1.bf16.msra.mxu0 %v4606
      %4628 = vmatprep.subr.bf16.mxu0 0
      %4629 = vmatpush1.bf16.msra.mxu0 %v4607
      %4630 = vmatprep.subr.bf16.mxu0 0
      %4631 = vmatpush1.bf16.msra.mxu0 %v4608
      %4632 = vmatprep.subr.bf16.mxu0 0
      %4633 = vmatpush1.bf16.msra.mxu0 %v4609
      %4634 = vmatprep.subr.bf16.mxu0 0
      %4635 = vmatpush1.bf16.msra.mxu0 0
      %4636 = vmatprep.subr.bf16.mxu0 0
      %4637 = vmatpush1.bf16.msra.mxu0 0
      %4638 = vmatprep.subr.bf16.mxu0 0
      %4639 = vmatpush1.bf16.msra.mxu0 0
      %4640 = vmatprep.subr.bf16.mxu0 0
      %4641 = vmatpush1.bf16.msra.mxu0 0
      %4642 = vmatprep.subr.bf16.mxu0 0
      %4643 = vmatpush1.bf16.msra.mxu0 0
      %4644 = vmatprep.subr.bf16.mxu0 0
      %4645 = vmatpush1.bf16.msra.mxu0 0
      %4646 = vmatprep.subr.bf16.mxu0 0
      %4647 = vmatpush1.bf16.msra.mxu0 0
      %4648 = vmatprep.subr.bf16.mxu0 0
      %4649 = vmatpush1.bf16.msra.mxu0 0
      %4650 = vmatprep.mubr.bf16.mxu0 0
      %4651 = vmatmul.mubr.bf16.gmra.mrb[0].mxu0 %v2819
      %v4652 = vpop.f32.mrb[0].mxu0
      %v4653 = vadd.f32 0.0, %v4652
      %v4654 = vpop.f32.mrb[0].mxu0
      %v4655 = vpop.f32.mrb[0].mxu0
      %v4656 = vadd.f32 0.0, %v4655
      %v4657 = vpop.f32.mrb[0].mxu0
      %4658 = vmatprep.mubr.bf16.mxu0 0
      %4659 = vmatmul.mubr.bf16.gmra.mrb[0].mxu0 %v2820
      %v4660 = vpop.f32.mrb[0].mxu0
      %v4661 = vadd.f32 0.0, %v4660
      %v4662 = vpop.f32.mrb[0].mxu0
      %v4663 = vpop.f32.mrb[0].mxu0
      %v4664 = vadd.f32 0.0, %v4663
      %v4665 = vpop.f32.mrb[0].mxu0
      %4666 = vmatprep.mubr.bf16.mxu0 0
      %4667 = vmatmul.mubr.bf16.gmra.mrb[0].mxu0 %v2821
      %v4668 = vpop.f32.mrb[0].mxu0
      %v4669 = vadd.f32 0.0, %v4668
      %v4670 = vpop.f32.mrb[0].mxu0
      %v4671 = vpop.f32.mrb[0].mxu0
      %v4672 = vadd.f32 0.0, %v4671
      %v4673 = vpop.f32.mrb[0].mxu0
      %4674 = vmatprep.mubr.bf16.mxu0 0
      %4675 = vmatmul.mubr.bf16.gmra.mrb[0].mxu0 %v2822
      %v4676 = vpop.f32.mrb[0].mxu0
      %v4677 = vadd.f32 0.0, %v4676
      %v4678 = vpop.f32.mrb[0].mxu0
      %v4679 = vpop.f32.mrb[0].mxu0
      %v4680 = vadd.f32 0.0, %v4679
      %v4681 = vpop.f32.mrb[0].mxu0
      %4682 = vmatprep.mubr.bf16.mxu0 0
      %4683 = vmatmul.mubr.bf16.gmra.mrb[0].mxu0 %v2823
      %v4684 = vpop.f32.mrb[0].mxu0
      %v4685 = vadd.f32 0.0, %v4684
      %v4686 = vpop.f32.mrb[0].mxu0
      %v4687 = vpop.f32.mrb[0].mxu0
      %v4688 = vadd.f32 0.0, %v4687
      %v4689 = vpop.f32.mrb[0].mxu0
      %4690 = vmatprep.mubr.bf16.mxu0 0
      %4691 = vmatmul.mubr.bf16.gmra.mrb[0].mxu0 %v2824
      %v4692 = vpop.f32.mrb[0].mxu0
      %v4693 = vadd.f32 0.0, %v4692
      %v4694 = vpop.f32.mrb[0].mxu0
      %v4695 = vpop.f32.mrb[0].mxu0
      %v4696 = vadd.f32 0.0, %v4695
      %v4697 = vpop.f32.mrb[0].mxu0
      %4698 = vmatprep.mubr.bf16.mxu0 0
      %4699 = vmatmul.mubr.bf16.gmra.mrb[0].mxu0 %v2825
      %v4700 = vpop.f32.mrb[0].mxu0
      %v4701 = vadd.f32 0.0, %v4700
      %v4702 = vpop.f32.mrb[0].mxu0
      %v4703 = vpop.f32.mrb[0].mxu0
      %v4704 = vadd.f32 0.0, %v4703
      %v4705 = vpop.f32.mrb[0].mxu0
      %4706 = vmatprep.mubr.bf16.mxu0 0
      %4707 = vmatmul.mubr.bf16.gmra.mrb[0].mxu0 %v2826
      %v4708 = vpop.f32.mrb[0].mxu0
      %v4709 = vadd.f32 0.0, %v4708
      %v4710 = vpop.f32.mrb[0].mxu0
      %v4711 = vpop.f32.mrb[0].mxu0
      %v4712 = vadd.f32 0.0, %v4711
      %v4713 = vpop.f32.mrb[0].mxu0
      %4714 = vmatprep.mubr.bf16.mxu0 0
      %4715 = vmatmul.mubr.bf16.gmra.mrb[0].mxu0 %v2827
      %v4716 = vpop.f32.mrb[0].mxu0
      %v4717 = vadd.f32 0.0, %v4716
      %v4718 = vpop.f32.mrb[0].mxu0
      %v4719 = vpop.f32.mrb[0].mxu0
      %v4720 = vadd.f32 0.0, %v4719
      %v4721 = vpop.f32.mrb[0].mxu0
      %4722 = vmatprep.mubr.bf16.mxu0 0
      %4723 = vmatmul.mubr.bf16.gmra.mrb[0].mxu0 %v2828
      %v4724 = vpop.f32.mrb[0].mxu0
      %v4725 = vadd.f32 0.0, %v4724
      %v4726 = vpop.f32.mrb[0].mxu0
      %v4727 = vpop.f32.mrb[0].mxu0
      %v4728 = vadd.f32 0.0, %v4727
      %v4729 = vpop.f32.mrb[0].mxu0
      %4730 = vmatprep.mubr.bf16.mxu0 0
      %4731 = vmatmul.mubr.bf16.gmra.mrb[0].mxu0 %v2829
      %v4732 = vpop.f32.mrb[0].mxu0
      %v4733 = vadd.f32 0.0, %v4732
      %v4734 = vpop.f32.mrb[0].mxu0
      %v4735 = vpop.f32.mrb[0].mxu0
      %v4736 = vadd.f32 0.0, %v4735
      %v4737 = vpop.f32.mrb[0].mxu0
      %4738 = vmatprep.mubr.bf16.mxu0 0
      %4739 = vmatmul.mubr.bf16.gmra.mrb[0].mxu0 %v2830
      %v4740 = vpop.f32.mrb[0].mxu0
      %v4741 = vadd.f32 0.0, %v4740
      %v4742 = vpop.f32.mrb[0].mxu0
      %v4743 = vpop.f32.mrb[0].mxu0
      %v4744 = vadd.f32 0.0, %v4743
      %v4745 = vpop.f32.mrb[0].mxu0
      %4746 = vmatprep.mubr.bf16.mxu0 0
      %4747 = vmatmul.mubr.bf16.gmra.mrb[0].mxu0 %v2831
      %v4748 = vpop.f32.mrb[0].mxu0
      %v4749 = vadd.f32 0.0, %v4748
      %v4750 = vpop.f32.mrb[0].mxu0
      %v4751 = vpop.f32.mrb[0].mxu0
      %v4752 = vadd.f32 0.0, %v4751
      %v4753 = vpop.f32.mrb[0].mxu0
      %4754 = vmatprep.mubr.bf16.mxu0 0
      %4755 = vmatmul.mubr.bf16.gmra.mrb[0].mxu0 %v2832
      %v4756 = vpop.f32.mrb[0].mxu0
      %v4757 = vadd.f32 0.0, %v4756
      %v4758 = vpop.f32.mrb[0].mxu0
      %v4759 = vpop.f32.mrb[0].mxu0
      %v4760 = vadd.f32 0.0, %v4759
      %v4761 = vpop.f32.mrb[0].mxu0
      %4762 = vmatprep.mubr.bf16.mxu0 0
      %4763 = vmatmul.mubr.bf16.gmra.mrb[0].mxu0 %v2833
      %v4764 = vpop.f32.mrb[0].mxu0
      %v4765 = vadd.f32 0.0, %v4764
      %v4766 = vpop.f32.mrb[0].mxu0
      %v4767 = vpop.f32.mrb[0].mxu0
      %v4768 = vadd.f32 0.0, %v4767
      %v4769 = vpop.f32.mrb[0].mxu0
      %4770 = vmatprep.mubr.bf16.mxu0 0
      %4771 = vmatmul.mubr.bf16.gmra.mrb[0].mxu0 %v2834
      %v4772 = vpop.f32.mrb[0].mxu0
      %v4773 = vadd.f32 0.0, %v4772
      %v4774 = vpop.f32.mrb[0].mxu0
      %v4775 = vpop.f32.mrb[0].mxu0
      %v4776 = vadd.f32 0.0, %v4775
      %v4777 = vpop.f32.mrb[0].mxu0
      %4778 = vdwg.mxu0
      %v4779 = vadd.f32 %v4521, %v4653
      %v4780 = vadd.f32 %v4522, %v4656
      %v4781 = vadd.f32 %v4523, %v4661
      %v4782 = vadd.f32 %v4524, %v4664
      %v4783 = vadd.f32 %v4525, %v4669
      %v4784 = vadd.f32 %v4526, %v4672
      %v4785 = vadd.f32 %v4527, %v4677
      %v4786 = vadd.f32 %v4528, %v4680
      %v4787 = vadd.f32 %v4529, %v4685
      %v4788 = vadd.f32 %v4530, %v4688
      %v4789 = vadd.f32 %v4531, %v4693
      %v4790 = vadd.f32 %v4532, %v4696
      %v4791 = vadd.f32 %v4533, %v4701
      %v4792 = vadd.f32 %v4534, %v4704
      %v4793 = vadd.f32 %v4535, %v4709
      %v4794 = vadd.f32 %v4536, %v4712
      %v4795 = vadd.f32 %v4537, %v4717
      %v4796 = vadd.f32 %v4538, %v4720
      %v4797 = vadd.f32 %v4539, %v4725
      %v4798 = vadd.f32 %v4540, %v4728
      %v4799 = vadd.f32 %v4541, %v4733
      %v4800 = vadd.f32 %v4542, %v4736
      %v4801 = vadd.f32 %v4543, %v4741
      %v4802 = vadd.f32 %v4544, %v4744
      %v4803 = vadd.f32 %v4545, %v4749
      %v4804 = vadd.f32 %v4546, %v4752
      %v4805 = vadd.f32 %v4547, %v4757
      %v4806 = vadd.f32 %v4548, %v4760
      %v4807 = vadd.f32 %v4549, %v4765
      %v4808 = vadd.f32 %v4550, %v4768
      %v4809 = vadd.f32 %v4551, %v4773
      %v4810 = vadd.f32 %v4552, %v4776
      %s4811 = scalar_lea.vmem %s7, 448
      %v4812 = vld [vmem:[%s4811] sm:$0xf]
      %v4813 = vld [vmem:[%s4811 + $0x4] sm:$0xf]
      %v4814 = vld [vmem:[%s4811 + $0x8] sm:$0xf]
      %v4815 = vld [vmem:[%s4811 + $0xc] sm:$0xf]
      %v4816 = vld [vmem:[%s4811 + $0x10] sm:$0xf]
      %v4817 = vld [vmem:[%s4811 + $0x14] sm:$0xf]
      %v4818 = vld [vmem:[%s4811 + $0x18] sm:$0xf]
      %v4819 = vld [vmem:[%s4811 + $0x1c] sm:$0xf]
      %v4820 = vld [vmem:[%s4811 + $0x20] sm:$0xf]
      %v4821 = vld [vmem:[%s4811 + $0x24] sm:$0xf]
      %v4822 = vld [vmem:[%s4811 + $0x28] sm:$0xf]
      %v4823 = vld [vmem:[%s4811 + $0x2c] sm:$0xf]
      %v4824 = vld [vmem:[%s4811 + $0x30] sm:$0xf]
      %v4825 = vld [vmem:[%s4811 + $0x34] sm:$0xf]
      %v4826 = vld [vmem:[%s4811 + $0x38] sm:$0xf]
      %v4827 = vld [vmem:[%s4811 + $0x3c] sm:$0xf]
      %v4844 = vunpack.c.l.b16 %v4812
      %v4845 = vunpack.c.l.b16 %v4813
      %v4846 = vunpack.c.l.b16 %v4814
      %v4847 = vunpack.c.l.b16 %v4815
      %v4848 = vunpack.c.l.b16 %v4816
      %v4849 = vunpack.c.l.b16 %v4817
      %v4850 = vunpack.c.l.b16 %v4818
      %v4851 = vunpack.c.l.b16 %v4819
      %v4852 = vunpack.c.l.b16 %v4820
      %v4853 = vunpack.c.l.b16 %v4821
      %v4854 = vunpack.c.l.b16 %v4822
      %v4855 = vunpack.c.l.b16 %v4823
      %v4856 = vunpack.c.l.b16 %v4824
      %v4857 = vunpack.c.l.b16 %v4825
      %v4858 = vunpack.c.l.b16 %v4826
      %v4859 = vunpack.c.l.b16 %v4827
      %v4860 = vpack.c.b16 %v4845, %v4844
      %v4861 = vpack.c.b16 %v4847, %v4846
      %v4862 = vpack.c.b16 %v4849, %v4848
      %v4863 = vpack.c.b16 %v4851, %v4850
      %v4864 = vpack.c.b16 %v4853, %v4852
      %v4865 = vpack.c.b16 %v4855, %v4854
      %v4866 = vpack.c.b16 %v4857, %v4856
      %v4867 = vpack.c.b16 %v4859, %v4858
      %4876 = vmatprep.subr.bf16.mxu0 0
      %4877 = vmatpush1.bf16.msra.mxu0 %v4860
      %4878 = vmatprep.subr.bf16.mxu0 0
      %4879 = vmatpush1.bf16.msra.mxu0 %v4861
      %4880 = vmatprep.subr.bf16.mxu0 0
      %4881 = vmatpush1.bf16.msra.mxu0 %v4862
      %4882 = vmatprep.subr.bf16.mxu0 0
      %4883 = vmatpush1.bf16.msra.mxu0 %v4863
      %4884 = vmatprep.subr.bf16.mxu0 0
      %4885 = vmatpush1.bf16.msra.mxu0 %v4864
      %4886 = vmatprep.subr.bf16.mxu0 0
      %4887 = vmatpush1.bf16.msra.mxu0 %v4865
      %4888 = vmatprep.subr.bf16.mxu0 0
      %4889 = vmatpush1.bf16.msra.mxu0 %v4866
      %4890 = vmatprep.subr.bf16.mxu0 0
      %4891 = vmatpush1.bf16.msra.mxu0 %v4867
      %4892 = vmatprep.subr.bf16.mxu0 0
      %4893 = vmatpush1.bf16.msra.mxu0 0
      %4894 = vmatprep.subr.bf16.mxu0 0
      %4895 = vmatpush1.bf16.msra.mxu0 0
      %4896 = vmatprep.subr.bf16.mxu0 0
      %4897 = vmatpush1.bf16.msra.mxu0 0
      %4898 = vmatprep.subr.bf16.mxu0 0
      %4899 = vmatpush1.bf16.msra.mxu0 0
      %4900 = vmatprep.subr.bf16.mxu0 0
      %4901 = vmatpush1.bf16.msra.mxu0 0
      %4902 = vmatprep.subr.bf16.mxu0 0
      %4903 = vmatpush1.bf16.msra.mxu0 0
      %4904 = vmatprep.subr.bf16.mxu0 0
      %4905 = vmatpush1.bf16.msra.mxu0 0
      %4906 = vmatprep.subr.bf16.mxu0 0
      %4907 = vmatpush1.bf16.msra.mxu0 0
      %4908 = vmatprep.mubr.bf16.mxu0 0
      %4909 = vmatmul.mubr.bf16.gmra.mrb[0].mxu0 %v2584
      %v4910 = vpop.f32.mrb[0].mxu0
      %v4911 = vadd.f32 0.0, %v4910
      %v4912 = vpop.f32.mrb[0].mxu0
      %v4913 = vpop.f32.mrb[0].mxu0
      %v4914 = vadd.f32 0.0, %v4913
      %v4915 = vpop.f32.mrb[0].mxu0
      %4916 = vmatprep.mubr.bf16.mxu0 0
      %4917 = vmatmul.mubr.bf16.gmra.mrb[0].mxu0 %v2585
      %v4918 = vpop.f32.mrb[0].mxu0
      %v4919 = vadd.f32 0.0, %v4918
      %v4920 = vpop.f32.mrb[0].mxu0
      %v4921 = vpop.f32.mrb[0].mxu0
      %v4922 = vadd.f32 0.0, %v4921
      %v4923 = vpop.f32.mrb[0].mxu0
      %4924 = vmatprep.mubr.bf16.mxu0 0
      %4925 = vmatmul.mubr.bf16.gmra.mrb[0].mxu0 %v2586
      %v4926 = vpop.f32.mrb[0].mxu0
      %v4927 = vadd.f32 0.0, %v4926
      %v4928 = vpop.f32.mrb[0].mxu0
      %v4929 = vpop.f32.mrb[0].mxu0
      %v4930 = vadd.f32 0.0, %v4929
      %v4931 = vpop.f32.mrb[0].mxu0
      %4932 = vmatprep.mubr.bf16.mxu0 0
      %4933 = vmatmul.mubr.bf16.gmra.mrb[0].mxu0 %v2587
      %v4934 = vpop.f32.mrb[0].mxu0
      %v4935 = vadd.f32 0.0, %v4934
      %v4936 = vpop.f32.mrb[0].mxu0
      %v4937 = vpop.f32.mrb[0].mxu0
      %v4938 = vadd.f32 0.0, %v4937
      %v4939 = vpop.f32.mrb[0].mxu0
      %4940 = vmatprep.mubr.bf16.mxu0 0
      %4941 = vmatmul.mubr.bf16.gmra.mrb[0].mxu0 %v2588
      %v4942 = vpop.f32.mrb[0].mxu0
      %v4943 = vadd.f32 0.0, %v4942
      %v4944 = vpop.f32.mrb[0].mxu0
      %v4945 = vpop.f32.mrb[0].mxu0
      %v4946 = vadd.f32 0.0, %v4945
      %v4947 = vpop.f32.mrb[0].mxu0
      %4948 = vmatprep.mubr.bf16.mxu0 0
      %4949 = vmatmul.mubr.bf16.gmra.mrb[0].mxu0 %v2589
      %v4950 = vpop.f32.mrb[0].mxu0
      %v4951 = vadd.f32 0.0, %v4950
      %v4952 = vpop.f32.mrb[0].mxu0
      %v4953 = vpop.f32.mrb[0].mxu0
      %v4954 = vadd.f32 0.0, %v4953
      %v4955 = vpop.f32.mrb[0].mxu0
      %4956 = vmatprep.mubr.bf16.mxu0 0
      %4957 = vmatmul.mubr.bf16.gmra.mrb[0].mxu0 %v2590
      %v4958 = vpop.f32.mrb[0].mxu0
      %v4959 = vadd.f32 0.0, %v4958
      %v4960 = vpop.f32.mrb[0].mxu0
      %v4961 = vpop.f32.mrb[0].mxu0
      %v4962 = vadd.f32 0.0, %v4961
      %v4963 = vpop.f32.mrb[0].mxu0
      %4964 = vmatprep.mubr.bf16.mxu0 0
      %4965 = vmatmul.mubr.bf16.gmra.mrb[0].mxu0 %v2591
      %v4966 = vpop.f32.mrb[0].mxu0
      %v4967 = vadd.f32 0.0, %v4966
      %v4968 = vpop.f32.mrb[0].mxu0
      %v4969 = vpop.f32.mrb[0].mxu0
      %v4970 = vadd.f32 0.0, %v4969
      %v4971 = vpop.f32.mrb[0].mxu0
      %4972 = vmatprep.mubr.bf16.mxu0 0
      %4973 = vmatmul.mubr.bf16.gmra.mrb[0].mxu0 %v2592
      %v4974 = vpop.f32.mrb[0].mxu0
      %v4975 = vadd.f32 0.0, %v4974
      %v4976 = vpop.f32.mrb[0].mxu0
      %v4977 = vpop.f32.mrb[0].mxu0
      %v4978 = vadd.f32 0.0, %v4977
      %v4979 = vpop.f32.mrb[0].mxu0
      %4980 = vmatprep.mubr.bf16.mxu0 0
      %4981 = vmatmul.mubr.bf16.gmra.mrb[0].mxu0 %v2593
      %v4982 = vpop.f32.mrb[0].mxu0
      %v4983 = vadd.f32 0.0, %v4982
      %v4984 = vpop.f32.mrb[0].mxu0
      %v4985 = vpop.f32.mrb[0].mxu0
      %v4986 = vadd.f32 0.0, %v4985
      %v4987 = vpop.f32.mrb[0].mxu0
      %4988 = vmatprep.mubr.bf16.mxu0 0
      %4989 = vmatmul.mubr.bf16.gmra.mrb[0].mxu0 %v2594
      %v4990 = vpop.f32.mrb[0].mxu0
      %v4991 = vadd.f32 0.0, %v4990
      %v4992 = vpop.f32.mrb[0].mxu0
      %v4993 = vpop.f32.mrb[0].mxu0
      %v4994 = vadd.f32 0.0, %v4993
      %v4995 = vpop.f32.mrb[0].mxu0
      %4996 = vmatprep.mubr.bf16.mxu0 0
      %4997 = vmatmul.mubr.bf16.gmra.mrb[0].mxu0 %v2595
      %v4998 = vpop.f32.mrb[0].mxu0
      %v4999 = vadd.f32 0.0, %v4998
      %v5000 = vpop.f32.mrb[0].mxu0
      %v5001 = vpop.f32.mrb[0].mxu0
      %v5002 = vadd.f32 0.0, %v5001
      %v5003 = vpop.f32.mrb[0].mxu0
      %5004 = vmatprep.mubr.bf16.mxu0 0
      %5005 = vmatmul.mubr.bf16.gmra.mrb[0].mxu0 %v2596
      %v5006 = vpop.f32.mrb[0].mxu0
      %v5007 = vadd.f32 0.0, %v5006
      %v5008 = vpop.f32.mrb[0].mxu0
      %v5009 = vpop.f32.mrb[0].mxu0
      %v5010 = vadd.f32 0.0, %v5009
      %v5011 = vpop.f32.mrb[0].mxu0
      %5012 = vmatprep.mubr.bf16.mxu0 0
      %5013 = vmatmul.mubr.bf16.gmra.mrb[0].mxu0 %v2597
      %v5014 = vpop.f32.mrb[0].mxu0
      %v5015 = vadd.f32 0.0, %v5014
      %v5016 = vpop.f32.mrb[0].mxu0
      %v5017 = vpop.f32.mrb[0].mxu0
      %v5018 = vadd.f32 0.0, %v5017
      %v5019 = vpop.f32.mrb[0].mxu0
      %5020 = vmatprep.mubr.bf16.mxu0 0
      %5021 = vmatmul.mubr.bf16.gmra.mrb[0].mxu0 %v2598
      %v5022 = vpop.f32.mrb[0].mxu0
      %v5023 = vadd.f32 0.0, %v5022
      %v5024 = vpop.f32.mrb[0].mxu0
      %v5025 = vpop.f32.mrb[0].mxu0
      %v5026 = vadd.f32 0.0, %v5025
      %v5027 = vpop.f32.mrb[0].mxu0
      %5028 = vmatprep.mubr.bf16.mxu0 0
      %5029 = vmatmul.mubr.bf16.gmra.mrb[0].mxu0 %v2599
      %v5030 = vpop.f32.mrb[0].mxu0
      %v5031 = vadd.f32 0.0, %v5030
      %v5032 = vpop.f32.mrb[0].mxu0
      %v5033 = vpop.f32.mrb[0].mxu0
      %v5034 = vadd.f32 0.0, %v5033
      %v5035 = vpop.f32.mrb[0].mxu0
      %5036 = vdwg.mxu0
      %v5037 = vadd.f32 %v4779, %v4911
      %v5038 = vadd.f32 %v4780, %v4914
      %v5039 = vadd.f32 %v4781, %v4919
      %v5040 = vadd.f32 %v4782, %v4922
      %v5041 = vadd.f32 %v4783, %v4927
      %v5042 = vadd.f32 %v4784, %v4930
      %v5043 = vadd.f32 %v4785, %v4935
      %v5044 = vadd.f32 %v4786, %v4938
      %v5045 = vadd.f32 %v4787, %v4943
      %v5046 = vadd.f32 %v4788, %v4946
      %v5047 = vadd.f32 %v4789, %v4951
      %v5048 = vadd.f32 %v4790, %v4954
      %v5049 = vadd.f32 %v4791, %v4959
      %v5050 = vadd.f32 %v4792, %v4962
      %v5051 = vadd.f32 %v4793, %v4967
      %v5052 = vadd.f32 %v4794, %v4970
      %v5053 = vadd.f32 %v4795, %v4975
      %v5054 = vadd.f32 %v4796, %v4978
      %v5055 = vadd.f32 %v4797, %v4983
      %v5056 = vadd.f32 %v4798, %v4986
      %v5057 = vadd.f32 %v4799, %v4991
      %v5058 = vadd.f32 %v4800, %v4994
      %v5059 = vadd.f32 %v4801, %v4999
      %v5060 = vadd.f32 %v4802, %v5002
      %v5061 = vadd.f32 %v4803, %v5007
      %v5062 = vadd.f32 %v4804, %v5010
      %v5063 = vadd.f32 %v4805, %v5015
      %v5064 = vadd.f32 %v4806, %v5018
      %v5065 = vadd.f32 %v4807, %v5023
      %v5066 = vadd.f32 %v4808, %v5026
      %v5067 = vadd.f32 %v4809, %v5031
      %v5068 = vadd.f32 %v4810, %v5034
      %s5069 = scalar_lea.vmem %s7, 512
      %v5070 = vld [vmem:[%s5069] sm:$0xf]
      %v5071 = vld [vmem:[%s5069 + $0x4] sm:$0xf]
      %v5072 = vld [vmem:[%s5069 + $0x8] sm:$0xf]
      %v5073 = vld [vmem:[%s5069 + $0xc] sm:$0xf]
      %v5074 = vld [vmem:[%s5069 + $0x10] sm:$0xf]
      %v5075 = vld [vmem:[%s5069 + $0x14] sm:$0xf]
      %v5076 = vld [vmem:[%s5069 + $0x18] sm:$0xf]
      %v5077 = vld [vmem:[%s5069 + $0x1c] sm:$0xf]
      %v5078 = vld [vmem:[%s5069 + $0x20] sm:$0xf]
      %v5079 = vld [vmem:[%s5069 + $0x24] sm:$0xf]
      %v5080 = vld [vmem:[%s5069 + $0x28] sm:$0xf]
      %v5081 = vld [vmem:[%s5069 + $0x2c] sm:$0xf]
      %v5082 = vld [vmem:[%s5069 + $0x30] sm:$0xf]
      %v5083 = vld [vmem:[%s5069 + $0x34] sm:$0xf]
      %v5084 = vld [vmem:[%s5069 + $0x38] sm:$0xf]
      %v5085 = vld [vmem:[%s5069 + $0x3c] sm:$0xf]
      %v5102 = vunpack.c.l.b16 %v5070
      %v5103 = vunpack.c.l.b16 %v5071
      %v5104 = vunpack.c.l.b16 %v5072
      %v5105 = vunpack.c.l.b16 %v5073
      %v5106 = vunpack.c.l.b16 %v5074
      %v5107 = vunpack.c.l.b16 %v5075
      %v5108 = vunpack.c.l.b16 %v5076
      %v5109 = vunpack.c.l.b16 %v5077
      %v5110 = vunpack.c.l.b16 %v5078
      %v5111 = vunpack.c.l.b16 %v5079
      %v5112 = vunpack.c.l.b16 %v5080
      %v5113 = vunpack.c.l.b16 %v5081
      %v5114 = vunpack.c.l.b16 %v5082
      %v5115 = vunpack.c.l.b16 %v5083
      %v5116 = vunpack.c.l.b16 %v5084
      %v5117 = vunpack.c.l.b16 %v5085
      %v5118 = vpack.c.b16 %v5103, %v5102
      %v5119 = vpack.c.b16 %v5105, %v5104
      %v5120 = vpack.c.b16 %v5107, %v5106
      %v5121 = vpack.c.b16 %v5109, %v5108
      %v5122 = vpack.c.b16 %v5111, %v5110
      %v5123 = vpack.c.b16 %v5113, %v5112
      %v5124 = vpack.c.b16 %v5115, %v5114
      %v5125 = vpack.c.b16 %v5117, %v5116
      %5134 = vmatprep.subr.bf16.mxu0 0
      %5135 = vmatpush1.bf16.msra.mxu0 %v5118
      %5136 = vmatprep.subr.bf16.mxu0 0
      %5137 = vmatpush1.bf16.msra.mxu0 %v5119
      %5138 = vmatprep.subr.bf16.mxu0 0
      %5139 = vmatpush1.bf16.msra.mxu0 %v5120
      %5140 = vmatprep.subr.bf16.mxu0 0
      %5141 = vmatpush1.bf16.msra.mxu0 %v5121
      %5142 = vmatprep.subr.bf16.mxu0 0
      %5143 = vmatpush1.bf16.msra.mxu0 %v5122
      %5144 = vmatprep.subr.bf16.mxu0 0
      %5145 = vmatpush1.bf16.msra.mxu0 %v5123
      %5146 = vmatprep.subr.bf16.mxu0 0
      %5147 = vmatpush1.bf16.msra.mxu0 %v5124
      %5148 = vmatprep.subr.bf16.mxu0 0
      %5149 = vmatpush1.bf16.msra.mxu0 %v5125
      %5150 = vmatprep.subr.bf16.mxu0 0
      %5151 = vmatpush1.bf16.msra.mxu0 0
      %5152 = vmatprep.subr.bf16.mxu0 0
      %5153 = vmatpush1.bf16.msra.mxu0 0
      %5154 = vmatprep.subr.bf16.mxu0 0
      %5155 = vmatpush1.bf16.msra.mxu0 0
      %5156 = vmatprep.subr.bf16.mxu0 0
      %5157 = vmatpush1.bf16.msra.mxu0 0
      %5158 = vmatprep.subr.bf16.mxu0 0
      %5159 = vmatpush1.bf16.msra.mxu0 0
      %5160 = vmatprep.subr.bf16.mxu0 0
      %5161 = vmatpush1.bf16.msra.mxu0 0
      %5162 = vmatprep.subr.bf16.mxu0 0
      %5163 = vmatpush1.bf16.msra.mxu0 0
      %5164 = vmatprep.subr.bf16.mxu0 0
      %5165 = vmatpush1.bf16.msra.mxu0 0
      %5166 = vmatprep.mubr.bf16.mxu0 0
      %5167 = vmatmul.mubr.bf16.gmra.mrb[0].mxu0 %v3054
      %v5168 = vpop.f32.mrb[0].mxu0
      %v5169 = vadd.f32 0.0, %v5168
      %v5170 = vpop.f32.mrb[0].mxu0
      %v5171 = vpop.f32.mrb[0].mxu0
      %v5172 = vadd.f32 0.0, %v5171
      %v5173 = vpop.f32.mrb[0].mxu0
      %5174 = vmatprep.mubr.bf16.mxu0 0
      %5175 = vmatmul.mubr.bf16.gmra.mrb[0].mxu0 %v3055
      %v5176 = vpop.f32.mrb[0].mxu0
      %v5177 = vadd.f32 0.0, %v5176
      %v5178 = vpop.f32.mrb[0].mxu0
      %v5179 = vpop.f32.mrb[0].mxu0
      %v5180 = vadd.f32 0.0, %v5179
      %v5181 = vpop.f32.mrb[0].mxu0
      %5182 = vmatprep.mubr.bf16.mxu0 0
      %5183 = vmatmul.mubr.bf16.gmra.mrb[0].mxu0 %v3056
      %v5184 = vpop.f32.mrb[0].mxu0
      %v5185 = vadd.f32 0.0, %v5184
      %v5186 = vpop.f32.mrb[0].mxu0
      %v5187 = vpop.f32.mrb[0].mxu0
      %v5188 = vadd.f32 0.0, %v5187
      %v5189 = vpop.f32.mrb[0].mxu0
      %5190 = vmatprep.mubr.bf16.mxu0 0
      %5191 = vmatmul.mubr.bf16.gmra.mrb[0].mxu0 %v3057
      %v5192 = vpop.f32.mrb[0].mxu0
      %v5193 = vadd.f32 0.0, %v5192
      %v5194 = vpop.f32.mrb[0].mxu0
      %v5195 = vpop.f32.mrb[0].mxu0
      %v5196 = vadd.f32 0.0, %v5195
      %v5197 = vpop.f32.mrb[0].mxu0
      %5198 = vmatprep.mubr.bf16.mxu0 0
      %5199 = vmatmul.mubr.bf16.gmra.mrb[0].mxu0 %v3058
      %v5200 = vpop.f32.mrb[0].mxu0
      %v5201 = vadd.f32 0.0, %v5200
      %v5202 = vpop.f32.mrb[0].mxu0
      %v5203 = vpop.f32.mrb[0].mxu0
      %v5204 = vadd.f32 0.0, %v5203
      %v5205 = vpop.f32.mrb[0].mxu0
      %5206 = vmatprep.mubr.bf16.mxu0 0
      %5207 = vmatmul.mubr.bf16.gmra.mrb[0].mxu0 %v3059
      %v5208 = vpop.f32.mrb[0].mxu0
      %v5209 = vadd.f32 0.0, %v5208
      %v5210 = vpop.f32.mrb[0].mxu0
      %v5211 = vpop.f32.mrb[0].mxu0
      %v5212 = vadd.f32 0.0, %v5211
      %v5213 = vpop.f32.mrb[0].mxu0
      %5214 = vmatprep.mubr.bf16.mxu0 0
      %5215 = vmatmul.mubr.bf16.gmra.mrb[0].mxu0 %v3060
      %v5216 = vpop.f32.mrb[0].mxu0
      %v5217 = vadd.f32 0.0, %v5216
      %v5218 = vpop.f32.mrb[0].mxu0
      %v5219 = vpop.f32.mrb[0].mxu0
      %v5220 = vadd.f32 0.0, %v5219
      %v5221 = vpop.f32.mrb[0].mxu0
      %5222 = vmatprep.mubr.bf16.mxu0 0
      %5223 = vmatmul.mubr.bf16.gmra.mrb[0].mxu0 %v3061
      %v5224 = vpop.f32.mrb[0].mxu0
      %v5225 = vadd.f32 0.0, %v5224
      %v5226 = vpop.f32.mrb[0].mxu0
      %v5227 = vpop.f32.mrb[0].mxu0
      %v5228 = vadd.f32 0.0, %v5227
      %v5229 = vpop.f32.mrb[0].mxu0
      %5230 = vmatprep.mubr.bf16.mxu0 0
      %5231 = vmatmul.mubr.bf16.gmra.mrb[0].mxu0 %v3062
      %v5232 = vpop.f32.mrb[0].mxu0
      %v5233 = vadd.f32 0.0, %v5232
      %v5234 = vpop.f32.mrb[0].mxu0
      %v5235 = vpop.f32.mrb[0].mxu0
      %v5236 = vadd.f32 0.0, %v5235
      %v5237 = vpop.f32.mrb[0].mxu0
      %5238 = vmatprep.mubr.bf16.mxu0 0
      %5239 = vmatmul.mubr.bf16.gmra.mrb[0].mxu0 %v3063
      %v5240 = vpop.f32.mrb[0].mxu0
      %v5241 = vadd.f32 0.0, %v5240
      %v5242 = vpop.f32.mrb[0].mxu0
      %v5243 = vpop.f32.mrb[0].mxu0
      %v5244 = vadd.f32 0.0, %v5243
      %v5245 = vpop.f32.mrb[0].mxu0
      %5246 = vmatprep.mubr.bf16.mxu0 0
      %5247 = vmatmul.mubr.bf16.gmra.mrb[0].mxu0 %v3064
      %v5248 = vpop.f32.mrb[0].mxu0
      %v5249 = vadd.f32 0.0, %v5248
      %v5250 = vpop.f32.mrb[0].mxu0
      %v5251 = vpop.f32.mrb[0].mxu0
      %v5252 = vadd.f32 0.0, %v5251
      %v5253 = vpop.f32.mrb[0].mxu0
      %5254 = vmatprep.mubr.bf16.mxu0 0
      %5255 = vmatmul.mubr.bf16.gmra.mrb[0].mxu0 %v3065
      %v5256 = vpop.f32.mrb[0].mxu0
      %v5257 = vadd.f32 0.0, %v5256
      %v5258 = vpop.f32.mrb[0].mxu0
      %v5259 = vpop.f32.mrb[0].mxu0
      %v5260 = vadd.f32 0.0, %v5259
      %v5261 = vpop.f32.mrb[0].mxu0
      %5262 = vmatprep.mubr.bf16.mxu0 0
      %5263 = vmatmul.mubr.bf16.gmra.mrb[0].mxu0 %v3066
      %v5264 = vpop.f32.mrb[0].mxu0
      %v5265 = vadd.f32 0.0, %v5264
      %v5266 = vpop.f32.mrb[0].mxu0
      %v5267 = vpop.f32.mrb[0].mxu0
      %v5268 = vadd.f32 0.0, %v5267
      %v5269 = vpop.f32.mrb[0].mxu0
      %5270 = vmatprep.mubr.bf16.mxu0 0
      %5271 = vmatmul.mubr.bf16.gmra.mrb[0].mxu0 %v3067
      %v5272 = vpop.f32.mrb[0].mxu0
      %v5273 = vadd.f32 0.0, %v5272
      %v5274 = vpop.f32.mrb[0].mxu0
      %v5275 = vpop.f32.mrb[0].mxu0
      %v5276 = vadd.f32 0.0, %v5275
      %v5277 = vpop.f32.mrb[0].mxu0
      %5278 = vmatprep.mubr.bf16.mxu0 0
      %5279 = vmatmul.mubr.bf16.gmra.mrb[0].mxu0 %v3068
      %v5280 = vpop.f32.mrb[0].mxu0
      %v5281 = vadd.f32 0.0, %v5280
      %v5282 = vpop.f32.mrb[0].mxu0
      %v5283 = vpop.f32.mrb[0].mxu0
      %v5284 = vadd.f32 0.0, %v5283
      %v5285 = vpop.f32.mrb[0].mxu0
      %5286 = vmatprep.mubr.bf16.mxu0 0
      %5287 = vmatmul.mubr.bf16.gmra.mrb[0].mxu0 %v3069
      %v5288 = vpop.f32.mrb[0].mxu0
      %v5289 = vadd.f32 0.0, %v5288
      %v5290 = vpop.f32.mrb[0].mxu0
      %v5291 = vpop.f32.mrb[0].mxu0
      %v5292 = vadd.f32 0.0, %v5291
      %v5293 = vpop.f32.mrb[0].mxu0
      %5294 = vdwg.mxu0
      %v5295 = vadd.f32 %v5037, %v5169
      %v5296 = vadd.f32 %v5038, %v5172
      %v5297 = vadd.f32 %v5039, %v5177
      %v5298 = vadd.f32 %v5040, %v5180
      %v5299 = vadd.f32 %v5041, %v5185
      %v5300 = vadd.f32 %v5042, %v5188
      %v5301 = vadd.f32 %v5043, %v5193
      %v5302 = vadd.f32 %v5044, %v5196
      %v5303 = vadd.f32 %v5045, %v5201
      %v5304 = vadd.f32 %v5046, %v5204
      %v5305 = vadd.f32 %v5047, %v5209
      %v5306 = vadd.f32 %v5048, %v5212
      %v5307 = vadd.f32 %v5049, %v5217
      %v5308 = vadd.f32 %v5050, %v5220
      %v5309 = vadd.f32 %v5051, %v5225
      %v5310 = vadd.f32 %v5052, %v5228
      %v5311 = vadd.f32 %v5053, %v5233
      %v5312 = vadd.f32 %v5054, %v5236
      %v5313 = vadd.f32 %v5055, %v5241
      %v5314 = vadd.f32 %v5056, %v5244
      %v5315 = vadd.f32 %v5057, %v5249
      %v5316 = vadd.f32 %v5058, %v5252
      %v5317 = vadd.f32 %v5059, %v5257
      %v5318 = vadd.f32 %v5060, %v5260
      %v5319 = vadd.f32 %v5061, %v5265
      %v5320 = vadd.f32 %v5062, %v5268
      %v5321 = vadd.f32 %v5063, %v5273
      %v5322 = vadd.f32 %v5064, %v5276
      %v5323 = vadd.f32 %v5065, %v5281
      %v5324 = vadd.f32 %v5066, %v5284
      %v5325 = vadd.f32 %v5067, %v5289
      %v5326 = vadd.f32 %v5068, %v5292
      %5327 = vst [vmem:[%s665] sm:$0xff] %v5295
      %5328 = vst [vmem:[%s665 + $0x8] sm:$0xff] %v5296
      %5329 = vst [vmem:[%s665 + $0x10] sm:$0xff] %v5297
      %5330 = vst [vmem:[%s665 + $0x18] sm:$0xff] %v5298
      %5331 = vst [vmem:[%s665 + $0x20] sm:$0xff] %v5299
      %5332 = vst [vmem:[%s665 + $0x28] sm:$0xff] %v5300
      %5333 = vst [vmem:[%s665 + $0x30] sm:$0xff] %v5301
      %5334 = vst [vmem:[%s665 + $0x38] sm:$0xff] %v5302
      %5335 = vst [vmem:[%s665 + $0x40] sm:$0xff] %v5303
      %5336 = vst [vmem:[%s665 + $0x48] sm:$0xff] %v5304
      %5337 = vst [vmem:[%s665 + $0x50] sm:$0xff] %v5305
      %5338 = vst [vmem:[%s665 + $0x58] sm:$0xff] %v5306
      %5339 = vst [vmem:[%s665 + $0x60] sm:$0xff] %v5307
      %5340 = vst [vmem:[%s665 + $0x68] sm:$0xff] %v5308
      %5341 = vst [vmem:[%s665 + $0x70] sm:$0xff] %v5309
      %5342 = vst [vmem:[%s665 + $0x78] sm:$0xff] %v5310
      %5343 = vst [vmem:[%s665 + $0x80] sm:$0xff] %v5311
      %5344 = vst [vmem:[%s665 + $0x88] sm:$0xff] %v5312
      %5345 = vst [vmem:[%s665 + $0x90] sm:$0xff] %v5313
      %5346 = vst [vmem:[%s665 + $0x98] sm:$0xff] %v5314
      %5347 = vst [vmem:[%s665 + $0xa0] sm:$0xff] %v5315
      %5348 = vst [vmem:[%s665 + $0xa8] sm:$0xff] %v5316
      %5349 = vst [vmem:[%s665 + $0xb0] sm:$0xff] %v5317
      %5350 = vst [vmem:[%s665 + $0xb8] sm:$0xff] %v5318
      %5351 = vst [vmem:[%s665 + $0xc0] sm:$0xff] %v5319
      %5352 = vst [vmem:[%s665 + $0xc8] sm:$0xff] %v5320
      %5353 = vst [vmem:[%s665 + $0xd0] sm:$0xff] %v5321
      %5354 = vst [vmem:[%s665 + $0xd8] sm:$0xff] %v5322
      %5355 = vst [vmem:[%s665 + $0xe0] sm:$0xff] %v5323
      %5356 = vst [vmem:[%s665 + $0xe8] sm:$0xff] %v5324
      %5357 = vst [vmem:[%s665 + $0xf0] sm:$0xff] %v5325
      %5358 = vst [vmem:[%s665 + $0xf8] sm:$0xff] %v5326
      %v5359 = vadd.f32 %v5295, %v5296
      %v5360 = vadd.f32 %v5359, %v5297
      %v5361 = vadd.f32 %v5360, %v5298
      %v5362 = vadd.f32 %v5361, %v5299
      %v5363 = vadd.f32 %v5362, %v5300
      %v5364 = vadd.f32 %v5363, %v5301
      %v5365 = vadd.f32 %v5364, %v5302
      %v5366 = vadd.f32 %v5365, %v5303
      %v5367 = vadd.f32 %v5366, %v5304
      %v5368 = vadd.f32 %v5367, %v5305
      %v5369 = vadd.f32 %v5368, %v5306
      %v5370 = vadd.f32 %v5369, %v5307
      %v5371 = vadd.f32 %v5370, %v5308
      %v5372 = vadd.f32 %v5371, %v5309
      %v5373 = vadd.f32 %v5372, %v5310
      %v5374 = vadd.f32 %v5373, %v5311
      %v5375 = vadd.f32 %v5374, %v5312
      %v5376 = vadd.f32 %v5375, %v5313
      %v5377 = vadd.f32 %v5376, %v5314
      %v5378 = vadd.f32 %v5377, %v5315
      %v5379 = vadd.f32 %v5378, %v5316
      %v5380 = vadd.f32 %v5379, %v5317
      %v5381 = vadd.f32 %v5380, %v5318
      %v5382 = vadd.f32 %v5381, %v5319
      %v5383 = vadd.f32 %v5382, %v5320
      %v5384 = vadd.f32 %v5383, %v5321
      %v5385 = vadd.f32 %v5384, %v5322
      %v5386 = vadd.f32 %v5385, %v5323
      %v5387 = vadd.f32 %v5386, %v5324
      %v5388 = vadd.f32 %v5387, %v5325
      %v5389 = vadd.f32 %v5388, %v5326
      %v5390 = vrot.slane %v5389, 4
      %v5391 = vadd.f32 %v5389, %v5390
      %v5392 = vrot.slane %v5391, 2
      %v5393 = vadd.f32 %v5391, %v5392
      %v5394 = vrot.slane %v5393, 1
      %v5395 = vadd.f32 %v5393, %v5394
      %v5396 = vmul.f32 %v5295, %v5295
      %v5397 = vmul.f32 %v5296, %v5296
      %v5398 = vmul.f32 %v5297, %v5297
      %v5399 = vmul.f32 %v5298, %v5298
      %v5400 = vmul.f32 %v5299, %v5299
      %v5401 = vmul.f32 %v5300, %v5300
      %v5402 = vmul.f32 %v5301, %v5301
      %v5403 = vmul.f32 %v5302, %v5302
      %v5404 = vmul.f32 %v5303, %v5303
      %v5405 = vmul.f32 %v5304, %v5304
      %v5406 = vmul.f32 %v5305, %v5305
      %v5407 = vmul.f32 %v5306, %v5306
      %v5408 = vmul.f32 %v5307, %v5307
      %v5409 = vmul.f32 %v5308, %v5308
      %v5410 = vmul.f32 %v5309, %v5309
      %v5411 = vmul.f32 %v5310, %v5310
      %v5412 = vmul.f32 %v5311, %v5311
      %v5413 = vmul.f32 %v5312, %v5312
      %v5414 = vmul.f32 %v5313, %v5313
      %v5415 = vmul.f32 %v5314, %v5314
      %v5416 = vmul.f32 %v5315, %v5315
      %v5417 = vmul.f32 %v5316, %v5316
      %v5418 = vmul.f32 %v5317, %v5317
      %v5419 = vmul.f32 %v5318, %v5318
      %v5420 = vmul.f32 %v5319, %v5319
      %v5421 = vmul.f32 %v5320, %v5320
      %v5422 = vmul.f32 %v5321, %v5321
      %v5423 = vmul.f32 %v5322, %v5322
      %v5424 = vmul.f32 %v5323, %v5323
      %v5425 = vmul.f32 %v5324, %v5324
      %v5426 = vmul.f32 %v5325, %v5325
      %v5427 = vmul.f32 %v5326, %v5326
      %v5428 = vadd.f32 %v5396, %v5397
      %v5429 = vadd.f32 %v5428, %v5398
      %v5430 = vadd.f32 %v5429, %v5399
      %v5431 = vadd.f32 %v5430, %v5400
      %v5432 = vadd.f32 %v5431, %v5401
      %v5433 = vadd.f32 %v5432, %v5402
      %v5434 = vadd.f32 %v5433, %v5403
      %v5435 = vadd.f32 %v5434, %v5404
      %v5436 = vadd.f32 %v5435, %v5405
      %v5437 = vadd.f32 %v5436, %v5406
      %v5438 = vadd.f32 %v5437, %v5407
      %v5439 = vadd.f32 %v5438, %v5408
      %v5440 = vadd.f32 %v5439, %v5409
      %v5441 = vadd.f32 %v5440, %v5410
      %v5442 = vadd.f32 %v5441, %v5411
      %v5443 = vadd.f32 %v5442, %v5412
      %v5444 = vadd.f32 %v5443, %v5413
      %v5445 = vadd.f32 %v5444, %v5414
      %v5446 = vadd.f32 %v5445, %v5415
      %v5447 = vadd.f32 %v5446, %v5416
      %v5448 = vadd.f32 %v5447, %v5417
      %v5449 = vadd.f32 %v5448, %v5418
      %v5450 = vadd.f32 %v5449, %v5419
      %v5451 = vadd.f32 %v5450, %v5420
      %v5452 = vadd.f32 %v5451, %v5421
      %v5453 = vadd.f32 %v5452, %v5422
      %v5454 = vadd.f32 %v5453, %v5423
      %v5455 = vadd.f32 %v5454, %v5424
      %v5456 = vadd.f32 %v5455, %v5425
      %v5457 = vadd.f32 %v5456, %v5426
      %v5458 = vadd.f32 %v5457, %v5427
      %v5459 = vrot.slane %v5458, 4
      %v5460 = vadd.f32 %v5458, %v5459
      %v5461 = vrot.slane %v5460, 2
      %v5462 = vadd.f32 %v5460, %v5461
      %v5463 = vrot.slane %v5462, 1
      %v5464 = vadd.f32 %v5462, %v5463
      %vm5465 = vcmask 1040384
      %v5466 = vsel %vm5465, %v5395, %v5464
      %5467 = vst [vmem:[%s673] sm:$0x3] %v5466
      %s5468 = smul.u32 16, %s26
      %p5469 = scmp.lt.s32.totalorder %s25, 1
      %s5470 = scalar_select %p5469, %s25, 1
      %p5471 = scmp.lt.s32.totalorder %s5468, 15
      %s5472 = scalar_select %p5471, %s5468, 15
      %s5473 = smul.addr %s5472, 2
      %s5474 = smul.addr %s5470, 32
      %s5475 = sadd.s32 %s5473, %s5474
      %s5476 = smul.addr %s5475, 8
      %s5477 = scalar_lea.vmem %s8, %s5476
      %p5478 = scmp.lt.s32.totalorder %s25, 1
      %s5479 = scalar_select %p5478, %s25, 1
      %p5480 = scmp.lt.s32.totalorder %s26, 0
      %s5481 = scalar_select %p5480, %s26, 0
      %s5482 = sadd.s32 %s5481, %s5479
      %s5483 = smul.addr %s5482, 2
      %s5484 = scalar_lea.vmem %s9, %s5483
      // Predicated region
      $region53: #{crossx_fpn_forward.2} parent=51 // pred_check
        %p5485 = pneg %p295
      $region54: #{crossx_fpn_forward.2} parent=51 // pred_check_branch
        %5487 = sbr.rel (%p5485) target = $region56
      $region55: #{crossx_fpn_forward.2} parent=51 // pred_region
        %s5488 = smul.u32 16, %s26
      $region56: #{crossx_fpn_forward.2} parent=51 // pred_fallthru
        _
      // Predicated region
      $region57: #{crossx_fpn_forward.2} parent=51 // pred_check
        %p5489 = pneg %p323
      $region58: #{crossx_fpn_forward.2} parent=51 // pred_check_branch
        %5491 = sbr.rel (%p5489) target = $region60
      $region59: #{crossx_fpn_forward.2} parent=51 // pred_region
        _
      $region60: #{crossx_fpn_forward.2} parent=51 // pred_fallthru
        _
    $region52: #{crossx_fpn_forward.2} parent=5 // pred_fallthru
      _
    %p5492 = scmp.le.s32.totalorder 2, %s16
    // Predicated region
    $region61: #{crossx_fpn_forward.2} parent=5 // pred_check
      %p5493 = pneg %p5492
    $region62: #{crossx_fpn_forward.2} parent=5 // pred_check_branch
      %5495 = sbr.rel (%p5493) target = $region64
    $region63: #{crossx_fpn_forward.2} parent=5 // pred_region
      %s5496 = ssub.s32 %s16, 2
      // Predicated region
      $region65: #{crossx_fpn_forward.2} parent=63 // pred_check
        %p5497 = pneg %p301
      $region66: #{crossx_fpn_forward.2} parent=63 // pred_check_branch
        %5499 = sbr.rel (%p5497) target = $region68
      $region67: #{crossx_fpn_forward.2} parent=63 // pred_region
        %s5500 = smul.u32 16, %s28
        %p5501 = scmp.lt.s32.totalorder %s27, 1
        %s5502 = scalar_select %p5501, %s27, 1
        %p5503 = scmp.lt.s32.totalorder %s5500, 15
        %s5504 = scalar_select %p5503, %s5500, 15
        %s5505 = smul.addr %s5504, 2
        %s5506 = smul.addr %s5502, 32
        %s5507 = sadd.s32 %s5505, %s5506
        %s5508 = smul.addr %s5507, 8
        %s5509 = scalar_lea.vmem %s8, %s5508
      $region68: #{crossx_fpn_forward.2} parent=63 // pred_fallthru
        _
      // Predicated region
      $region69: #{crossx_fpn_forward.2} parent=63 // pred_check
        %p5510 = pneg %p329
      $region70: #{crossx_fpn_forward.2} parent=63 // pred_check_branch
        %5512 = sbr.rel (%p5510) target = $region72
      $region71: #{crossx_fpn_forward.2} parent=63 // pred_region
        %p5513 = scmp.lt.s32.totalorder %s27, 1
        %s5514 = scalar_select %p5513, %s27, 1
        %p5515 = scmp.lt.s32.totalorder %s28, 0
        %s5516 = scalar_select %p5515, %s28, 0
        %s5517 = sadd.s32 %s5516, %s5514
        %s5518 = smul.addr %s5517, 2
        %s5519 = scalar_lea.vmem %s9, %s5518
      $region72: #{crossx_fpn_forward.2} parent=63 // pred_fallthru
        _
    $region64: #{crossx_fpn_forward.2} parent=5 // pred_fallthru
      _
  $region6: #{crossx_fpn_forward.2} parent=0 // loop_footer
    %s20 = sadd.s32 1, %s16
  $region7: #{crossx_fpn_forward.2} parent=0 // loop_footer_branch
    %15 = sbr.rel target = $region3
  $region8: #{crossx_fpn_forward.2} parent=0 // loop_exit
    _

</llo_original>
